<compile_context>
chip_gen: v5e
topology: v5e:2x2
jax: 0.10.0
libtpu: 0.0.40
codegen_flags: <defaults>
</compile_context>

<pallas_src>
import functools
import math

import jax
import jax.numpy as jnp
from jax.experimental import pallas as pl
from jax.experimental.pallas import tpu as pltpu

LN_EPS = 1e-5
_SQRT_HALF = 0.7071067811865476


def _pick_row_tile(n, cap=512):
    """Largest token tile (multiple of 8) that divides n; else the full extent."""
    for t in (cap, 256, 128, 64, 32, 16, 8):
        if t <= n and n % t == 0:
            return t
    # TODO(synk): pad the token axis (or mask a tail tile) instead of a full-extent block.
    return n


def _pick_col_tile(n, cap=512):
    """Largest lane-aligned output-column tile that divides n; else the full extent."""
    for t in (cap, 256, 128):
        if t <= n and n % t == 0:
            return t
    return n


def _nbytes(shape, dtype):
    return math.prod(shape) * jnp.dtype(dtype).itemsize


def _compiler_params(sem, blocks):
    """blocks: list of (block_shape, dtype, buffer_count). Set an explicit scoped-VMEM
    limit from the actual per-step footprint (with headroom), capped at 128 MiB."""
    footprint = sum(_nbytes(s, dt) * nb for s, dt, nb in blocks)
    limit = int(min(128 * 1024 * 1024, 2 * footprint + 16 * 1024 * 1024))
    return pltpu.CompilerParams(dimension_semantics=sem, vmem_limit_bytes=limit)


def _resident(shape, index_map):
    """Constant-index weight/bias block: VMEM-resident, single-buffered."""
    return pl.BlockSpec(shape, index_map, pipeline_mode=pl.Buffered(1))


# ------------------- fused LayerNorm + matmul (+ optional GELU), N-tiled -------------------

def _ln_linear_kernel(x_ref, g_ref, b_ref, w_ref, bias_ref, o_ref, *, act):
    x = x_ref[...].astype(jnp.float32)
    mu = jnp.mean(x, axis=-1, keepdims=True)
    var = jnp.mean(jnp.square(x - mu), axis=-1, keepdims=True)
    xn = (x - mu) * jax.lax.rsqrt(var + LN_EPS)
    xn = xn * g_ref[...].astype(jnp.float32) + b_ref[...].astype(jnp.float32)
    # bf16 operands into the MXU, f32 accumulation.
    y = jnp.dot(xn.astype(jnp.bfloat16), w_ref[...],
                preferred_element_type=jnp.float32) + bias_ref[...]
    if act == "gelu":
        # exact (erf) GELU, matching nn.GELU() default.
        # TODO(synk): use tanh-approx GELU (EUP slot) if this kernel profiles VALU-bound on v6e/v7x.
        y = 0.5 * y * (1.0 + jax.lax.erf(y * _SQRT_HALF))
    o_ref[...] = y.astype(o_ref.dtype)


def ln_linear(x2d, gamma, beta, w, bias, act=None, out_dtype=None):
    # gamma/beta: (1, D) f32; w: (D, O) bf16 pre-transposed; bias: (1, O) f32.
    n, d = x2d.shape
    out = w.shape[1]
    out_dtype = out_dtype or x2d.dtype
    tm = _pick_row_tile(n)
    tn = _pick_col_tile(out)          # N-tiling keeps big (D, dim_ff) weights off VMEM (v7x)
    if tn == out:                     # grid-constant weight block -> single-buffered resident
        w_spec = _resident((d, tn), lambda i, j: (0, 0))
        b_spec = _resident((1, tn), lambda i, j: (0, 0))
        nb_w = 1
    else:
        w_spec = pl.BlockSpec((d, tn), lambda i, j: (0, j))
        b_spec = pl.BlockSpec((1, tn), lambda i, j: (0, j))
        nb_w = 2
    cp = _compiler_params(("parallel", "parallel"), [
        ((tm, d), x2d.dtype, 2), ((1, d), gamma.dtype, 1), ((1, d), beta.dtype, 1),
        ((d, tn), w.dtype, nb_w), ((1, tn), bias.dtype, nb_w),
        ((tm, tn), out_dtype, 2)])
    return pl.pallas_call(
        functools.partial(_ln_linear_kernel, act=act),
        grid=(n // tm, out // tn),
        in_specs=[
            pl.BlockSpec((tm, d), lambda i, j: (i, 0)),
            _resident((1, d), lambda i, j: (0, 0)),
            _resident((1, d), lambda i, j: (0, 0)),
            w_spec, b_spec,
        ],
        out_specs=pl.BlockSpec((tm, tn), lambda i, j: (i, j)),
        out_shape=jax.ShapeDtypeStruct((n, out), out_dtype),
        compiler_params=cp,
    )(x2d, gamma, beta, w, bias)


# ------------------- fused LayerNorm + packed QKV projection (Q / KV outputs) -------------------

def _ln_qkv_kernel(x_ref, g_ref, b_ref, w_ref, bias_ref, q_ref, kv_ref, *, d):
    x = x_ref[...].astype(jnp.float32)
    mu = jnp.mean(x, axis=-1, keepdims=True)
    var = jnp.mean(jnp.square(x - mu), axis=-1, keepdims=True)
    xn = (x - mu) * jax.lax.rsqrt(var + LN_EPS)
    xn = xn * g_ref[...].astype(jnp.float32) + b_ref[...].astype(jnp.float32)
    y = jnp.dot(xn.astype(jnp.bfloat16), w_ref[...],
                preferred_element_type=jnp.float32) + bias_ref[...]
    q_ref[...] = y[:, :d].astype(q_ref.dtype)       # (tm, D)
    kv_ref[...] = y[:, d:].astype(kv_ref.dtype)     # (tm, 2D)


def ln_qkv(x2d, gamma, beta, w, bias, d_model, out_dtype=jnp.bfloat16):
    n, d = x2d.shape
    out = w.shape[1]                                 # 3 * d_model
    tm = _pick_row_tile(n)
    cp = _compiler_params(("parallel",), [
        ((tm, d), x2d.dtype, 2), ((1, d), gamma.dtype, 1), ((1, d), beta.dtype, 1),
        ((d, out), w.dtype, 1), ((1, out), bias.dtype, 1),
        ((tm, d_model), out_dtype, 2), ((tm, 2 * d_model), out_dtype, 2)])
    return pl.pallas_call(
        functools.partial(_ln_qkv_kernel, d=d_model),
        grid=(n // tm,),
        in_specs=[
            pl.BlockSpec((tm, d), lambda i: (i, 0)),
            _resident((1, d), lambda i: (0, 0)),
            _resident((1, d), lambda i: (0, 0)),
            _resident((d, out), lambda i: (0, 0)),
            _resident((1, out), lambda i: (0, 0)),
        ],
        out_specs=(pl.BlockSpec((tm, d_model), lambda i: (i, 0)),
                   pl.BlockSpec((tm, 2 * d_model), lambda i: (i, 0))),
        out_shape=(jax.ShapeDtypeStruct((n, d_model), out_dtype),
                   jax.ShapeDtypeStruct((n, 2 * d_model), out_dtype)),
        compiler_params=cp,
    )(x2d, gamma, beta, w, bias)


# ---------------------------- plain matmul (+ residual variant) ----------------------------

def _linear_kernel(x_ref, w_ref, bias_ref, o_ref):
    y = jnp.dot(x_ref[...].astype(jnp.bfloat16), w_ref[...],
                preferred_element_type=jnp.float32) + bias_ref[...]
    o_ref[...] = y.astype(o_ref.dtype)


def linear(x2d, w, bias, out_dtype=None):
    n, d = x2d.shape
    out = w.shape[1]
    out_dtype = out_dtype or x2d.dtype
    tm = _pick_row_tile(n)
    cp = _compiler_params(("parallel",), [
        ((tm, d), x2d.dtype, 2), ((d, out), w.dtype, 1), ((1, out), bias.dtype, 1),
        ((tm, out), out_dtype, 2)])
    return pl.pallas_call(
        _linear_kernel,
        grid=(n // tm,),
        in_specs=[
            pl.BlockSpec((tm, d), lambda i: (i, 0)),
            _resident((d, out), lambda i: (0, 0)),
            _resident((1, out), lambda i: (0, 0)),
        ],
        out_specs=pl.BlockSpec((tm, out), lambda i: (i, 0)),
        out_shape=jax.ShapeDtypeStruct((n, out), out_dtype),
        compiler_params=cp,
    )(x2d, w, bias)


def _linear_residual_kernel(res_ref, x_ref, w_ref, bias_ref, o_ref):
    y = jnp.dot(x_ref[...].astype(jnp.bfloat16), w_ref[...],
                preferred_element_type=jnp.float32) + bias_ref[...]
    o_ref[...] = (res_ref[...].astype(jnp.float32) + y).astype(o_ref.dtype)


def linear_residual(res2d, x2d, w, bias):
    n, d = x2d.shape
    out = w.shape[1]
    tm = _pick_row_tile(n)
    # TODO(synk): K-tile dim_ff with an f32 accumulator if the resident lin2 weight gets large on v7x.
    cp = _compiler_params(("parallel",), [
        ((tm, out), res2d.dtype, 2), ((tm, d), x2d.dtype, 2),
        ((d, out), w.dtype, 1), ((1, out), bias.dtype, 1),
        ((tm, out), res2d.dtype, 2)])
    return pl.pallas_call(
        _linear_residual_kernel,
        grid=(n // tm,),
        in_specs=[
            pl.BlockSpec((tm, out), lambda i: (i, 0)),
            pl.BlockSpec((tm, d), lambda i: (i, 0)),
            _resident((d, out), lambda i: (0, 0)),
            _resident((1, out), lambda i: (0, 0)),
        ],
        out_specs=pl.BlockSpec((tm, out), lambda i: (i, 0)),
        out_shape=jax.ShapeDtypeStruct((n, out), res2d.dtype),
        input_output_aliases={0: 0},      # residual buffer is dead afterwards; reuse it
        compiler_params=cp,
    )(res2d, x2d, w, bias)


# ------------ attention: q-tiled, all heads per step, fused out-proj + residual ------------

def _attn_kernel(q_ref, kv_ref, wo_ref, bo_ref, res_ref, o_ref, ctx_ref, *, nhead, d):
    # q: (tq, D) bf16 (1/sqrt(hd) already folded into the Q projection); kv: (Sk, 2D) bf16.
    hd = d // nhead
    q = q_ref[0]
    kv = kv_ref[0]
    k = kv[:, :d]
    v = kv[:, d:]
    for h in range(nhead):                                    # static unroll over heads
        sl = slice(h * hd, (h + 1) * hd)
        s = jax.lax.dot_general(q[:, sl], k[:, sl], (((1,), (1,)), ((), ())),
                                preferred_element_type=jnp.float32)
        s = s - jnp.max(s, axis=-1, keepdims=True)
        p = jnp.exp(s)
        p = p * (1.0 / jnp.sum(p, axis=-1, keepdims=True))    # exact reciprocal (tiny column)
        ctx_ref[:, sl] = jnp.dot(p.astype(jnp.bfloat16), v[:, sl],
                                 preferred_element_type=jnp.float32)
    # fused out-projection + residual on the lane-dense (tq, D) context
    y = jnp.dot(ctx_ref[...].astype(jnp.bfloat16), wo_ref[...],
                preferred_element_type=jnp.float32) + bo_ref[...]
    o_ref[0] = (res_ref[0].astype(jnp.float32) + y).astype(o_ref.dtype)
    # TODO(synk): for long sequences, KV-tile with an "arbitrary" grid axis (online-softmax /
    # flash) and fuse the LN+QKV / cond->KV projections in-kernel to drop their HBM round-trip.


def attention_block(x_res, q, kv, wo, bo, nhead, alias_residual=True):
    B, S, D = x_res.shape
    Sk = kv.shape[1]
    assert D % nhead == 0
    tq = _pick_row_tile(S, cap=256)   # q-tiling: VMEM ~constant in S; B*(S/tq) chunks for megacore
    cp = _compiler_params(("parallel", "parallel"), [
        ((1, tq, D), q.dtype, 2), ((1, Sk, 2 * D), kv.dtype, 2),
        ((D, D), wo.dtype, 1), ((1, D), bo.dtype, 1),
        ((1, tq, D), x_res.dtype, 2), ((1, tq, D), x_res.dtype, 2),
        ((tq, D), jnp.float32, 1)])
    return pl.pallas_call(
        functools.partial(_attn_kernel, nhead=nhead, d=D),
        grid=(B, S // tq),
        in_specs=[
            pl.BlockSpec((1, tq, D), lambda b, i: (b, i, 0)),
            pl.BlockSpec((1, Sk, 2 * D), lambda b, i: (b, 0, 0)),
            _resident((D, D), lambda b, i: (0, 0)),
            _resident((1, D), lambda b, i: (0, 0)),
            pl.BlockSpec((1, tq, D), lambda b, i: (b, i, 0)),
        ],
        out_specs=pl.BlockSpec((1, tq, D), lambda b, i: (b, i, 0)),
        out_shape=jax.ShapeDtypeStruct((B, S, D), x_res.dtype),
        scratch_shapes=[pltpu.VMEM((tq, D), jnp.float32)],
        input_output_aliases={4: 0} if alias_residual else {},
        compiler_params=cp,
    )(q, kv, wo, bo, x_res)


# ------------------------------- block composition -------------------------------

def prepare_params(p, d_model, nhead):
    """One-time conversion from PyTorch layout to kernel layout: weights transposed to
    (in, out) and cast to bf16 (MXU-native), biases / LN params kept f32 and reshaped to
    (1, out), 1/sqrt(hd) folded into the Q projections, cross-attn in_proj split Q / KV."""
    D = d_model
    scale = 1.0 / math.sqrt(D // nhead)
    sa, ca = p["self_attn"], p["cross_attn"]
    bf = lambda a: a.astype(jnp.bfloat16)

    sa_w = sa["in_w"].T                                    # (D, 3D)
    sa_w = sa_w.at[:, :D].multiply(scale)                  # fold attention scale into Q
    sa_b = sa["in_b"].reshape(1, 3 * D).at[:, :D].multiply(scale)

    return {
        "sa_qkv_w": bf(sa_w), "sa_qkv_b": sa_b,
        "sa_out_w": bf(sa["out_w"].T), "sa_out_b": sa["out_b"].reshape(1, D),
        "ca_q_w": bf(ca["in_w"][:D].T * scale),
        "ca_q_b": (ca["in_b"][:D] * scale).reshape(1, D),
        "ca_kv_w": bf(ca["in_w"][D:].T), "ca_kv_b": ca["in_b"][D:].reshape(1, 2 * D),
        "ca_out_w": bf(ca["out_w"].T), "ca_out_b": ca["out_b"].reshape(1, D),
        "lin1_w": bf(p["lin1_w"].T), "lin1_b": p["lin1_b"].reshape(1, -1),
        "lin2_w": bf(p["lin2_w"].T), "lin2_b": p["lin2_b"].reshape(1, -1),
        "norm1_g": p["norm1_g"].reshape(1, D), "norm1_b": p["norm1_b"].reshape(1, D),
        "norm2_g": p["norm2_g"].reshape(1, D), "norm2_b": p["norm2_b"].reshape(1, D),
        "norm3_g": p["norm3_g"].reshape(1, D), "norm3_b": p["norm3_b"].reshape(1, D),
    }


def transformer_diffusion_block(x, cond, kp, nhead):
    B, S, D = x.shape
    Sc = cond.shape[1]
    xf = x.reshape(B * S, D)
    condf = cond.reshape(B * Sc, D)

    # ---- self-attention: LN1 + packed QKV in one matmul; attn fused with out-proj + residual ----
    q, kv = ln_qkv(xf, kp["norm1_g"], kp["norm1_b"], kp["sa_qkv_w"], kp["sa_qkv_b"], D)
    x = attention_block(x, q.reshape(B, S, D), kv.reshape(B, S, 2 * D),
                        kp["sa_out_w"], kp["sa_out_b"], nhead,
                        alias_residual=False)   # x is a jit parameter here; avoid a forced copy

    # ---- cross-attention: LN2 + Q proj; K,V projected from raw cond; fused epilogue ----
    xf = x.reshape(B * S, D)
    q = ln_linear(xf, kp["norm2_g"], kp["norm2_b"], kp["ca_q_w"], kp["ca_q_b"],
                  out_dtype=jnp.bfloat16).reshape(B, S, D)
    kv = linear(condf, kp["ca_kv_w"], kp["ca_kv_b"],
                out_dtype=jnp.bfloat16).reshape(B, Sc, 2 * D)
    x = attention_block(x, q, kv, kp["ca_out_w"], kp["ca_out_b"], nhead)

    # ---- feed-forward: LN3 + lin1 + GELU fused (N-tiled); lin2 fused with the residual ----
    xf = x.reshape(B * S, D)
    h = ln_linear(xf, kp["norm3_g"], kp["norm3_b"], kp["lin1_w"], kp["lin1_b"],
                  act="gelu", out_dtype=jnp.bfloat16)
    xf = linear_residual(xf, h, kp["lin2_w"], kp["lin2_b"])
    return xf.reshape(B, S, D)


# --------------------------------- pure-JAX reference ---------------------------------

def reference_block(x, cond, params, nhead):
    def ln(t, g, b):
        mu = t.mean(-1, keepdims=True)
        var = ((t - mu) ** 2).mean(-1, keepdims=True)
        return (t - mu) / jnp.sqrt(var + LN_EPS) * g + b

    def mha(xq, xkv, p):
        B, Sq, D = xq.shape
        Sk = xkv.shape[1]
        hd = D // nhead
        wq, wk, wv = p["in_w"][:D], p["in_w"][D:2 * D], p["in_w"][2 * D:]
        bq, bk, bv = p["in_b"][:D], p["in_b"][D:2 * D], p["in_b"][2 * D:]
        q = (xq @ wq.T + bq).reshape(B, Sq, nhead, hd).transpose(0, 2, 1, 3)
        k = (xkv @ wk.T + bk).reshape(B, Sk, nhead, hd).transpose(0, 2, 1, 3)
        v = (xkv @ wv.T + bv).reshape(B, Sk, nhead, hd).transpose(0, 2, 1, 3)
        s = jnp.einsum("bhqd,bhkd->bhqk", q, k) / math.sqrt(hd)
        a = jax.nn.softmax(s, axis=-1)
        o = jnp.einsum("bhqk,bhkd->bhqd", a, v).transpose(0, 2, 1, 3).reshape(B, Sq, D)
        return o @ p["out_w"].T + p["out_b"]

    x2 = ln(x, params["norm1_g"], params["norm1_b"])
    x = x + mha(x2, x2, params["self_attn"])
    x2 = ln(x, params["norm2_g"], params["norm2_b"])
    x = x + mha(x2, cond, params["cross_attn"])
    x2 = ln(x, params["norm3_g"], params["norm3_b"])
    h = jax.nn.gelu(x2 @ params["lin1_w"].T + params["lin1_b"], approximate=False)
    x = x + h @ params["lin2_w"].T + params["lin2_b"]
    return x


# --------------------------------------- main ---------------------------------------

def init_params(key, d_model, nhead, dim_ff):
    ks = jax.random.split(key, 12)

    def w(k, shape, scale=0.05):
        return (scale * jax.random.normal(k, shape)).astype(jnp.float32)

    def attn_params(k1, k2):
        return {
            "in_w": w(k1, (3 * d_model, d_model)),
            "in_b": jnp.zeros((3 * d_model,), jnp.float32),
            "out_w": w(k2, (d_model, d_model)),
            "out_b": jnp.zeros((d_model,), jnp.float32),
        }

    return {
        "self_attn": attn_params(ks[0], ks[1]),
        "cross_attn": attn_params(ks[2], ks[3]),
        "lin1_w": w(ks[4], (dim_ff, d_model)),
        "lin1_b": w(ks[5], (dim_ff,), 0.01),
        "lin2_w": w(ks[6], (d_model, dim_ff)),
        "lin2_b": w(ks[7], (d_model,), 0.01),
        "norm1_g": jnp.ones((d_model,), jnp.float32),
        "norm1_b": jnp.zeros((d_model,), jnp.float32),
        "norm2_g": jnp.ones((d_model,), jnp.float32),
        "norm2_b": jnp.zeros((d_model,), jnp.float32),
        "norm3_g": jnp.ones((d_model,), jnp.float32),
        "norm3_b": jnp.zeros((d_model,), jnp.float32),
    }


if __name__ == "__main__":
    B, S, Sc = 2, 8, 8
    d_model, nhead, dim_ff = 32, 4, 64

    key = jax.random.PRNGKey(0)
    kx, kc, kp = jax.random.split(key, 3)
    x = jax.random.normal(kx, (B, S, d_model), jnp.float32)
    cond = jax.random.normal(kc, (B, Sc, d_model), jnp.float32)
    params = init_params(kp, d_model, nhead, dim_ff)
    kparams = prepare_params(params, d_model, nhead)

    fwd = jax.jit(lambda xx, cc, pp: transformer_diffusion_block(xx, cc, pp, nhead))
    out = jax.block_until_ready(fwd(x, cond, kparams))

    ref = reference_block(x, cond, params, nhead)
    max_err = float(jnp.max(jnp.abs(out - ref)))
    assert out.shape == (B, S, d_model)
    # Tolerance reflects bf16 MXU operands (weights + activations); softmax reciprocal is exact.
    assert max_err < 4e-2, f"mismatch vs reference: {max_err}"

    print("KERNEL_OK")
</pallas_src>

<mosaic_0001>
module attributes {stable_mosaic.version = 11 : i64} {
  func.func @_ln_linear_kernel(%arg0: i32, %arg1: i32, %arg2: memref<16x32xf32, #tpu.memory_space<vmem>>, %arg3: memref<1x32xf32, #tpu.memory_space<vmem>>, %arg4: memref<1x32xf32, #tpu.memory_space<vmem>>, %arg5: memref<32x32xbf16, #tpu.memory_space<vmem>>, %arg6: memref<1x32xf32, #tpu.memory_space<vmem>>, %arg7: memref<16x32xbf16, #tpu.memory_space<vmem>>) attributes {dimension_semantics = [#tpu.dimension_semantics<parallel>, #tpu.dimension_semantics<parallel>], iteration_bounds = array<i64: 1, 1>, scalar_prefetch = 0 : i64, scratch_operands = 0 : i64, tpu.core_type = #tpu.core_type<tc>, window_params = [{transform_indices = @transform_0, window_bounds = array<i64: 16, 32>}, {pipeline_mode = #tpu.pipeline_mode<synchronous>, transform_indices = @transform_1, window_bounds = array<i64: 1, 32>}, {pipeline_mode = #tpu.pipeline_mode<synchronous>, transform_indices = @transform_2, window_bounds = array<i64: 1, 32>}, {pipeline_mode = #tpu.pipeline_mode<synchronous>, transform_indices = @transform_3, window_bounds = array<i64: 32, 32>}, {pipeline_mode = #tpu.pipeline_mode<synchronous>, transform_indices = @transform_4, window_bounds = array<i64: 1, 32>}, {transform_indices = @transform_5, window_bounds = array<i64: 16, 32>}]} {
    %c0 = arith.constant 0 : index
    %c0_0 = arith.constant 0 : index
    %0 = vector.load %arg2[%c0, %c0_0] : memref<16x32xf32, #tpu.memory_space<vmem>>, vector<16x32xf32>
    %cst = arith.constant dense<0.000000e+00> : vector<16xf32>
    %1 = vector.multi_reduction <add>, %0, %cst [1] : vector<16x32xf32> to vector<16xf32>
    %2 = vector.shape_cast %1 : vector<16xf32> to vector<16x1xf32>
    %cst_1 = arith.constant 3.200000e+01 : f32
    %3 = vector.broadcast %cst_1 : f32 to vector<16x1xf32>
    %4 = arith.divf %2, %3 : vector<16x1xf32>
    %5 = vector.broadcast %4 : vector<16x1xf32> to vector<16x32xf32>
    %6 = arith.subf %0, %5 : vector<16x32xf32>
    %7 = arith.mulf %6, %6 : vector<16x32xf32>
    %cst_2 = arith.constant dense<0.000000e+00> : vector<16xf32>
    %8 = vector.multi_reduction <add>, %7, %cst_2 [1] : vector<16x32xf32> to vector<16xf32>
    %9 = vector.shape_cast %8 : vector<16xf32> to vector<16x1xf32>
    %cst_3 = arith.constant 3.200000e+01 : f32
    %10 = vector.broadcast %cst_3 : f32 to vector<16x1xf32>
    %11 = arith.divf %9, %10 : vector<16x1xf32>
    %12 = vector.broadcast %4 : vector<16x1xf32> to vector<16x32xf32>
    %13 = arith.subf %0, %12 : vector<16x32xf32>
    %cst_4 = arith.constant 9.99999974E-6 : f32
    %14 = vector.broadcast %cst_4 : f32 to vector<16x1xf32>
    %15 = arith.addf %11, %14 : vector<16x1xf32>
    %16 = math.rsqrt %15 : vector<16x1xf32>
    %17 = vector.broadcast %16 : vector<16x1xf32> to vector<16x32xf32>
    %18 = arith.mulf %13, %17 : vector<16x32xf32>
    %c0_5 = arith.constant 0 : index
    %c0_6 = arith.constant 0 : index
    %19 = vector.load %arg3[%c0_5, %c0_6] : memref<1x32xf32, #tpu.memory_space<vmem>>, vector<1x32xf32>
    %20 = vector.broadcast %19 : vector<1x32xf32> to vector<16x32xf32>
    %21 = arith.mulf %18, %20 : vector<16x32xf32>
    %c0_7 = arith.constant 0 : index
    %c0_8 = arith.constant 0 : index
    %22 = vector.load %arg4[%c0_7, %c0_8] : memref<1x32xf32, #tpu.memory_space<vmem>>, vector<1x32xf32>
    %23 = vector.broadcast %22 : vector<1x32xf32> to vector<16x32xf32>
    %24 = arith.addf %21, %23 : vector<16x32xf32>
    %25 = arith.truncf %24 : vector<16x32xf32> to vector<16x32xbf16>
    %c0_9 = arith.constant 0 : index
    %c0_10 = arith.constant 0 : index
    %26 = vector.load %arg5[%c0_9, %c0_10] : memref<32x32xbf16, #tpu.memory_space<vmem>>, vector<32x32xbf16>
    %cst_11 = arith.constant dense<0.000000e+00> : vector<16x32xf32>
    %27 = tpu.matmul %25, %26, %cst_11 {dimension_numbers = #tpu.dot_dimension_numbers<[1], [0], [0], [1], [0, 0, 1, 1], [], []>} : vector<16x32xbf16>, vector<32x32xbf16>, vector<16x32xf32> -> vector<16x32xf32>
    %c0_12 = arith.constant 0 : index
    %c0_13 = arith.constant 0 : index
    %28 = vector.load %arg6[%c0_12, %c0_13] : memref<1x32xf32, #tpu.memory_space<vmem>>, vector<1x32xf32>
    %29 = vector.broadcast %28 : vector<1x32xf32> to vector<16x32xf32>
    %30 = arith.addf %27, %29 : vector<16x32xf32>
    %31 = arith.truncf %30 : vector<16x32xf32> to vector<16x32xbf16>
    %c0_14 = arith.constant 0 : index
    %c0_15 = arith.constant 0 : index
    %32 = vector.load %arg7[%c0_14, %c0_15] : memref<16x32xbf16, #tpu.memory_space<vmem>>, vector<16x32xbf16>
    tpu.vector_store %arg7[%c0_14, %c0_15], %31 {strides = array<i32>} : memref<16x32xbf16, #tpu.memory_space<vmem>>, vector<16x32xbf16>,
    return
  }
  func.func @transform_0(%arg0: i32, %arg1: i32) -> (i32, i32) {
    %c0_i32 = arith.constant 0 : i32
    %c0_i32_0 = arith.constant 0 : i32
    return %arg0, %c0_i32 : i32, i32
  }
  func.func @transform_1(%arg0: i32, %arg1: i32) -> (i32, i32) {
    %c0_i32 = arith.constant 0 : i32
    %c0_i32_0 = arith.constant 0 : i32
    %c0_i32_1 = arith.constant 0 : i32
    return %c0_i32, %c0_i32_0 : i32, i32
  }
  func.func @transform_2(%arg0: i32, %arg1: i32) -> (i32, i32) {
    %c0_i32 = arith.constant 0 : i32
    %c0_i32_0 = arith.constant 0 : i32
    %c0_i32_1 = arith.constant 0 : i32
    return %c0_i32, %c0_i32_0 : i32, i32
  }
  func.func @transform_3(%arg0: i32, %arg1: i32) -> (i32, i32) {
    %c0_i32 = arith.constant 0 : i32
    %c0_i32_0 = arith.constant 0 : i32
    %c0_i32_1 = arith.constant 0 : i32
    return %c0_i32, %c0_i32_0 : i32, i32
  }
  func.func @transform_4(%arg0: i32, %arg1: i32) -> (i32, i32) {
    %c0_i32 = arith.constant 0 : i32
    %c0_i32_0 = arith.constant 0 : i32
    %c0_i32_1 = arith.constant 0 : i32
    return %c0_i32, %c0_i32_0 : i32, i32
  }
  func.func @transform_5(%arg0: i32, %arg1: i32) -> (i32, i32) {
    %c0_i32 = arith.constant 0 : i32
    return %arg0, %arg1 : i32, i32
  }
}

module attributes {stable_mosaic.version = 11 : i64} {
  func.func @_ln_qkv_kernel(%arg0: i32, %arg1: memref<16x32xf32, #tpu.memory_space<vmem>>, %arg2: memref<1x32xf32, #tpu.memory_space<vmem>>, %arg3: memref<1x32xf32, #tpu.memory_space<vmem>>, %arg4: memref<32x96xbf16, #tpu.memory_space<vmem>>, %arg5: memref<1x96xf32, #tpu.memory_space<vmem>>, %arg6: memref<16x32xbf16, #tpu.memory_space<vmem>>, %arg7: memref<16x64xbf16, #tpu.memory_space<vmem>>) attributes {dimension_semantics = [#tpu.dimension_semantics<parallel>], iteration_bounds = array<i64: 1>, scalar_prefetch = 0 : i64, scratch_operands = 0 : i64, tpu.core_type = #tpu.core_type<tc>, window_params = [{transform_indices = @transform_0, window_bounds = array<i64: 16, 32>}, {pipeline_mode = #tpu.pipeline_mode<synchronous>, transform_indices = @transform_1, window_bounds = array<i64: 1, 32>}, {pipeline_mode = #tpu.pipeline_mode<synchronous>, transform_indices = @transform_2, window_bounds = array<i64: 1, 32>}, {pipeline_mode = #tpu.pipeline_mode<synchronous>, transform_indices = @transform_3, window_bounds = array<i64: 32, 96>}, {pipeline_mode = #tpu.pipeline_mode<synchronous>, transform_indices = @transform_4, window_bounds = array<i64: 1, 96>}, {transform_indices = @transform_5, window_bounds = array<i64: 16, 32>}, {transform_indices = @transform_6, window_bounds = array<i64: 16, 64>}]} {
    %c0 = arith.constant 0 : index
    %c0_0 = arith.constant 0 : index
    %0 = vector.load %arg1[%c0, %c0_0] : memref<16x32xf32, #tpu.memory_space<vmem>>, vector<16x32xf32>
    %cst = arith.constant dense<0.000000e+00> : vector<16xf32>
    %1 = vector.multi_reduction <add>, %0, %cst [1] : vector<16x32xf32> to vector<16xf32>
    %2 = vector.shape_cast %1 : vector<16xf32> to vector<16x1xf32>
    %cst_1 = arith.constant 3.200000e+01 : f32
    %3 = vector.broadcast %cst_1 : f32 to vector<16x1xf32>
    %4 = arith.divf %2, %3 : vector<16x1xf32>
    %5 = vector.broadcast %4 : vector<16x1xf32> to vector<16x32xf32>
    %6 = arith.subf %0, %5 : vector<16x32xf32>
    %7 = arith.mulf %6, %6 : vector<16x32xf32>
    %cst_2 = arith.constant dense<0.000000e+00> : vector<16xf32>
    %8 = vector.multi_reduction <add>, %7, %cst_2 [1] : vector<16x32xf32> to vector<16xf32>
    %9 = vector.shape_cast %8 : vector<16xf32> to vector<16x1xf32>
    %cst_3 = arith.constant 3.200000e+01 : f32
    %10 = vector.broadcast %cst_3 : f32 to vector<16x1xf32>
    %11 = arith.divf %9, %10 : vector<16x1xf32>
    %12 = vector.broadcast %4 : vector<16x1xf32> to vector<16x32xf32>
    %13 = arith.subf %0, %12 : vector<16x32xf32>
    %cst_4 = arith.constant 9.99999974E-6 : f32
    %14 = vector.broadcast %cst_4 : f32 to vector<16x1xf32>
    %15 = arith.addf %11, %14 : vector<16x1xf32>
    %16 = math.rsqrt %15 : vector<16x1xf32>
    %17 = vector.broadcast %16 : vector<16x1xf32> to vector<16x32xf32>
    %18 = arith.mulf %13, %17 : vector<16x32xf32>
    %c0_5 = arith.constant 0 : index
    %c0_6 = arith.constant 0 : index
    %19 = vector.load %arg2[%c0_5, %c0_6] : memref<1x32xf32, #tpu.memory_space<vmem>>, vector<1x32xf32>
    %20 = vector.broadcast %19 : vector<1x32xf32> to vector<16x32xf32>
    %21 = arith.mulf %18, %20 : vector<16x32xf32>
    %c0_7 = arith.constant 0 : index
    %c0_8 = arith.constant 0 : index
    %22 = vector.load %arg3[%c0_7, %c0_8] : memref<1x32xf32, #tpu.memory_space<vmem>>, vector<1x32xf32>
    %23 = vector.broadcast %22 : vector<1x32xf32> to vector<16x32xf32>
    %24 = arith.addf %21, %23 : vector<16x32xf32>
    %25 = arith.truncf %24 : vector<16x32xf32> to vector<16x32xbf16>
    %c0_9 = arith.constant 0 : index
    %c0_10 = arith.constant 0 : index
    %26 = vector.load %arg4[%c0_9, %c0_10] : memref<32x96xbf16, #tpu.memory_space<vmem>>, vector<32x96xbf16>
    %cst_11 = arith.constant dense<0.000000e+00> : vector<16x96xf32>
    %27 = tpu.matmul %25, %26, %cst_11 {dimension_numbers = #tpu.dot_dimension_numbers<[1], [0], [0], [1], [0, 0, 1, 1], [], []>} : vector<16x32xbf16>, vector<32x96xbf16>, vector<16x96xf32> -> vector<16x96xf32>
    %c0_12 = arith.constant 0 : index
    %c0_13 = arith.constant 0 : index
    %28 = vector.load %arg5[%c0_12, %c0_13] : memref<1x96xf32, #tpu.memory_space<vmem>>, vector<1x96xf32>
    %29 = vector.broadcast %28 : vector<1x96xf32> to vector<16x96xf32>
    %30 = arith.addf %27, %29 : vector<16x96xf32>
    %31 = vector.extract_strided_slice %30 {offsets = [0, 0], sizes = [16, 32], strides = [1, 1]} : vector<16x96xf32> to vector<16x32xf32>
    %32 = arith.truncf %31 : vector<16x32xf32> to vector<16x32xbf16>
    %c0_14 = arith.constant 0 : index
    %c0_15 = arith.constant 0 : index
    %33 = vector.load %arg6[%c0_14, %c0_15] : memref<16x32xbf16, #tpu.memory_space<vmem>>, vector<16x32xbf16>
    tpu.vector_store %arg6[%c0_14, %c0_15], %32 {strides = array<i32>} : memref<16x32xbf16, #tpu.memory_space<vmem>>, vector<16x32xbf16>,
    %34 = vector.extract_strided_slice %30 {offsets = [0, 32], sizes = [16, 64], strides = [1, 1]} : vector<16x96xf32> to vector<16x64xf32>
    %35 = arith.truncf %34 : vector<16x64xf32> to vector<16x64xbf16>
    %c0_16 = arith.constant 0 : index
    %c0_17 = arith.constant 0 : index
    %36 = vector.load %arg7[%c0_16, %c0_17] : memref<16x64xbf16, #tpu.memory_space<vmem>>, vector<16x64xbf16>
    tpu.vector_store %arg7[%c0_16, %c0_17], %35 {strides = array<i32>} : memref<16x64xbf16, #tpu.memory_space<vmem>>, vector<16x64xbf16>,
    return
  }
  func.func @transform_0(%arg0: i32) -> (i32, i32) {
    %c0_i32 = arith.constant 0 : i32
    %c0_i32_0 = arith.constant 0 : i32
    return %arg0, %c0_i32 : i32, i32
  }
  func.func @transform_1(%arg0: i32) -> (i32, i32) {
    %c0_i32 = arith.constant 0 : i32
    %c0_i32_0 = arith.constant 0 : i32
    %c0_i32_1 = arith.constant 0 : i32
    return %c0_i32, %c0_i32_0 : i32, i32
  }
  func.func @transform_2(%arg0: i32) -> (i32, i32) {
    %c0_i32 = arith.constant 0 : i32
    %c0_i32_0 = arith.constant 0 : i32
    %c0_i32_1 = arith.constant 0 : i32
    return %c0_i32, %c0_i32_0 : i32, i32
  }
  func.func @transform_3(%arg0: i32) -> (i32, i32) {
    %c0_i32 = arith.constant 0 : i32
    %c0_i32_0 = arith.constant 0 : i32
    %c0_i32_1 = arith.constant 0 : i32
    return %c0_i32, %c0_i32_0 : i32, i32
  }
  func.func @transform_4(%arg0: i32) -> (i32, i32) {
    %c0_i32 = arith.constant 0 : i32
    %c0_i32_0 = arith.constant 0 : i32
    %c0_i32_1 = arith.constant 0 : i32
    return %c0_i32, %c0_i32_0 : i32, i32
  }
  func.func @transform_5(%arg0: i32) -> (i32, i32) {
    %c0_i32 = arith.constant 0 : i32
    %c0_i32_0 = arith.constant 0 : i32
    return %arg0, %c0_i32 : i32, i32
  }
  func.func @transform_6(%arg0: i32) -> (i32, i32) {
    %c0_i32 = arith.constant 0 : i32
    %c0_i32_0 = arith.constant 0 : i32
    return %arg0, %c0_i32 : i32, i32
  }
}

module attributes {stable_mosaic.version = 11 : i64} {
  func.func @_linear_kernel(%arg0: i32, %arg1: memref<16x32xf32, #tpu.memory_space<vmem>>, %arg2: memref<32x64xbf16, #tpu.memory_space<vmem>>, %arg3: memref<1x64xf32, #tpu.memory_space<vmem>>, %arg4: memref<16x64xbf16, #tpu.memory_space<vmem>>) attributes {dimension_semantics = [#tpu.dimension_semantics<parallel>], iteration_bounds = array<i64: 1>, scalar_prefetch = 0 : i64, scratch_operands = 0 : i64, tpu.core_type = #tpu.core_type<tc>, window_params = [{transform_indices = @transform_0, window_bounds = array<i64: 16, 32>}, {pipeline_mode = #tpu.pipeline_mode<synchronous>, transform_indices = @transform_1, window_bounds = array<i64: 32, 64>}, {pipeline_mode = #tpu.pipeline_mode<synchronous>, transform_indices = @transform_2, window_bounds = array<i64: 1, 64>}, {transform_indices = @transform_3, window_bounds = array<i64: 16, 64>}]} {
    %c0 = arith.constant 0 : index
    %c0_0 = arith.constant 0 : index
    %0 = vector.load %arg1[%c0, %c0_0] : memref<16x32xf32, #tpu.memory_space<vmem>>, vector<16x32xf32>
    %1 = arith.truncf %0 : vector<16x32xf32> to vector<16x32xbf16>
    %c0_1 = arith.constant 0 : index
    %c0_2 = arith.constant 0 : index
    %2 = vector.load %arg2[%c0_1, %c0_2] : memref<32x64xbf16, #tpu.memory_space<vmem>>, vector<32x64xbf16>
    %cst = arith.constant dense<0.000000e+00> : vector<16x64xf32>
    %3 = tpu.matmul %1, %2, %cst {dimension_numbers = #tpu.dot_dimension_numbers<[1], [0], [0], [1], [0, 0, 1, 1], [], []>} : vector<16x32xbf16>, vector<32x64xbf16>, vector<16x64xf32> -> vector<16x64xf32>
    %c0_3 = arith.constant 0 : index
    %c0_4 = arith.constant 0 : index
    %4 = vector.load %arg3[%c0_3, %c0_4] : memref<1x64xf32, #tpu.memory_space<vmem>>, vector<1x64xf32>
    %5 = vector.broadcast %4 : vector<1x64xf32> to vector<16x64xf32>
    %6 = arith.addf %3, %5 : vector<16x64xf32>
    %7 = arith.truncf %6 : vector<16x64xf32> to vector<16x64xbf16>
    %c0_5 = arith.constant 0 : index
    %c0_6 = arith.constant 0 : index
    %8 = vector.load %arg4[%c0_5, %c0_6] : memref<16x64xbf16, #tpu.memory_space<vmem>>, vector<16x64xbf16>
    tpu.vector_store %arg4[%c0_5, %c0_6], %7 {strides = array<i32>} : memref<16x64xbf16, #tpu.memory_space<vmem>>, vector<16x64xbf16>,
    return
  }
  func.func @transform_0(%arg0: i32) -> (i32, i32) {
    %c0_i32 = arith.constant 0 : i32
    %c0_i32_0 = arith.constant 0 : i32
    return %arg0, %c0_i32 : i32, i32
  }
  func.func @transform_1(%arg0: i32) -> (i32, i32) {
    %c0_i32 = arith.constant 0 : i32
    %c0_i32_0 = arith.constant 0 : i32
    %c0_i32_1 = arith.constant 0 : i32
    return %c0_i32, %c0_i32_0 : i32, i32
  }
  func.func @transform_2(%arg0: i32) -> (i32, i32) {
    %c0_i32 = arith.constant 0 : i32
    %c0_i32_0 = arith.constant 0 : i32
    %c0_i32_1 = arith.constant 0 : i32
    return %c0_i32, %c0_i32_0 : i32, i32
  }
  func.func @transform_3(%arg0: i32) -> (i32, i32) {
    %c0_i32 = arith.constant 0 : i32
    %c0_i32_0 = arith.constant 0 : i32
    return %arg0, %c0_i32 : i32, i32
  }
}

module attributes {stable_mosaic.version = 11 : i64} {
  func.func @_attn_kernel(%arg0: i32, %arg1: i32, %arg2: memref<1x8x32xbf16, #tpu.memory_space<vmem>>, %arg3: memref<1x8x64xbf16, #tpu.memory_space<vmem>>, %arg4: memref<32x32xbf16, #tpu.memory_space<vmem>>, %arg5: memref<1x32xf32, #tpu.memory_space<vmem>>, %arg6: memref<1x8x32xf32, #tpu.memory_space<vmem>>, %arg7: memref<1x8x32xf32, #tpu.memory_space<vmem>>, %arg8: memref<8x32xf32, #tpu.memory_space<vmem>>) attributes {dimension_semantics = [#tpu.dimension_semantics<parallel>, #tpu.dimension_semantics<parallel>], iteration_bounds = array<i64: 2, 1>, scalar_prefetch = 0 : i64, scratch_operands = 1 : i64, tpu.core_type = #tpu.core_type<tc>, window_params = [{transform_indices = @transform_0, window_bounds = array<i64: 1, 8, 32>}, {transform_indices = @transform_1, window_bounds = array<i64: 1, 8, 64>}, {pipeline_mode = #tpu.pipeline_mode<synchronous>, transform_indices = @transform_2, window_bounds = array<i64: 32, 32>}, {pipeline_mode = #tpu.pipeline_mode<synchronous>, transform_indices = @transform_3, window_bounds = array<i64: 1, 32>}, {transform_indices = @transform_4, window_bounds = array<i64: 1, 8, 32>}, {transform_indices = @transform_5, window_bounds = array<i64: 1, 8, 32>}]} {
    %c0 = arith.constant 0 : index
    %c0_0 = arith.constant 0 : index
    %c0_1 = arith.constant 0 : index
    %0 = vector.load %arg2[%c0, %c0_0, %c0_1] : memref<1x8x32xbf16, #tpu.memory_space<vmem>>, vector<1x8x32xbf16>
    %1 = vector.shape_cast %0 : vector<1x8x32xbf16> to vector<8x32xbf16>
    %c0_2 = arith.constant 0 : index
    %c0_3 = arith.constant 0 : index
    %c0_4 = arith.constant 0 : index
    %2 = vector.load %arg3[%c0_2, %c0_3, %c0_4] : memref<1x8x64xbf16, #tpu.memory_space<vmem>>, vector<1x8x64xbf16>
    %3 = vector.shape_cast %2 : vector<1x8x64xbf16> to vector<8x64xbf16>
    %4 = vector.extract_strided_slice %3 {offsets = [0, 0], sizes = [8, 32], strides = [1, 1]} : vector<8x64xbf16> to vector<8x32xbf16>
    %5 = vector.extract_strided_slice %3 {offsets = [0, 32], sizes = [8, 32], strides = [1, 1]} : vector<8x64xbf16> to vector<8x32xbf16>
    %6 = vector.extract_strided_slice %1 {offsets = [0, 0], sizes = [8, 8], strides = [1, 1]} : vector<8x32xbf16> to vector<8x8xbf16>
    %7 = vector.extract_strided_slice %4 {offsets = [0, 0], sizes = [8, 8], strides = [1, 1]} : vector<8x32xbf16> to vector<8x8xbf16>
    %cst = arith.constant dense<0.000000e+00> : vector<8x8xf32>
    %8 = tpu.matmul %6, %7, %cst {dimension_numbers = #tpu.dot_dimension_numbers<[1], [1], [0], [0], [0, 0, 1, 0], [], []>} : vector<8x8xbf16>, vector<8x8xbf16>, vector<8x8xf32> -> vector<8x8xf32>
    %cst_5 = arith.constant dense<0xFF800000> : vector<8xf32>
    %9 = vector.multi_reduction <maximumf>, %8, %cst_5 [1] : vector<8x8xf32> to vector<8xf32>
    %10 = vector.shape_cast %9 : vector<8xf32> to vector<8x1xf32>
    %11 = vector.broadcast %10 : vector<8x1xf32> to vector<8x8xf32>
    %12 = arith.subf %8, %11 : vector<8x8xf32>
    %13 = math.exp %12 : vector<8x8xf32>
    %cst_6 = arith.constant dense<0.000000e+00> : vector<8xf32>
    %14 = vector.multi_reduction <add>, %13, %cst_6 [1] : vector<8x8xf32> to vector<8xf32>
    %15 = vector.shape_cast %14 : vector<8xf32> to vector<8x1xf32>
    %cst_7 = arith.constant 1.000000e+00 : f32
    %16 = vector.broadcast %cst_7 : f32 to vector<8x1xf32>
    %17 = arith.divf %16, %15 : vector<8x1xf32>
    %18 = vector.broadcast %17 : vector<8x1xf32> to vector<8x8xf32>
    %19 = arith.mulf %13, %18 : vector<8x8xf32>
    %20 = arith.truncf %19 : vector<8x8xf32> to vector<8x8xbf16>
    %21 = vector.extract_strided_slice %5 {offsets = [0, 0], sizes = [8, 8], strides = [1, 1]} : vector<8x32xbf16> to vector<8x8xbf16>
    %cst_8 = arith.constant dense<0.000000e+00> : vector<8x8xf32>
    %22 = tpu.matmul %20, %21, %cst_8 {dimension_numbers = #tpu.dot_dimension_numbers<[1], [0], [0], [1], [0, 0, 1, 1], [], []>} : vector<8x8xbf16>, vector<8x8xbf16>, vector<8x8xf32> -> vector<8x8xf32>
    %c0_9 = arith.constant 0 : index
    %c0_10 = arith.constant 0 : index
    %23 = vector.load %arg8[%c0_9, %c0_10] : memref<8x32xf32, #tpu.memory_space<vmem>>, vector<8x8xf32>
    tpu.vector_store %arg8[%c0_9, %c0_10], %22 {strides = array<i32>} : memref<8x32xf32, #tpu.memory_space<vmem>>, vector<8x8xf32>,
    %24 = vector.extract_strided_slice %1 {offsets = [0, 8], sizes = [8, 8], strides = [1, 1]} : vector<8x32xbf16> to vector<8x8xbf16>
    %25 = vector.extract_strided_slice %4 {offsets = [0, 8], sizes = [8, 8], strides = [1, 1]} : vector<8x32xbf16> to vector<8x8xbf16>
    %cst_11 = arith.constant dense<0.000000e+00> : vector<8x8xf32>
    %26 = tpu.matmul %24, %25, %cst_11 {dimension_numbers = #tpu.dot_dimension_numbers<[1], [1], [0], [0], [0, 0, 1, 0], [], []>} : vector<8x8xbf16>, vector<8x8xbf16>, vector<8x8xf32> -> vector<8x8xf32>
    %cst_12 = arith.constant dense<0xFF800000> : vector<8xf32>
    %27 = vector.multi_reduction <maximumf>, %26, %cst_12 [1] : vector<8x8xf32> to vector<8xf32>
    %28 = vector.shape_cast %27 : vector<8xf32> to vector<8x1xf32>
    %29 = vector.broadcast %28 : vector<8x1xf32> to vector<8x8xf32>
    %30 = arith.subf %26, %29 : vector<8x8xf32>
    %31 = math.exp %30 : vector<8x8xf32>
    %cst_13 = arith.constant dense<0.000000e+00> : vector<8xf32>
    %32 = vector.multi_reduction <add>, %31, %cst_13 [1] : vector<8x8xf32> to vector<8xf32>
    %33 = vector.shape_cast %32 : vector<8xf32> to vector<8x1xf32>
    %cst_14 = arith.constant 1.000000e+00 : f32
    %34 = vector.broadcast %cst_14 : f32 to vector<8x1xf32>
    %35 = arith.divf %34, %33 : vector<8x1xf32>
    %36 = vector.broadcast %35 : vector<8x1xf32> to vector<8x8xf32>
    %37 = arith.mulf %31, %36 : vector<8x8xf32>
    %38 = arith.truncf %37 : vector<8x8xf32> to vector<8x8xbf16>
    %39 = vector.extract_strided_slice %5 {offsets = [0, 8], sizes = [8, 8], strides = [1, 1]} : vector<8x32xbf16> to vector<8x8xbf16>
    %cst_15 = arith.constant dense<0.000000e+00> : vector<8x8xf32>
    %40 = tpu.matmul %38, %39, %cst_15 {dimension_numbers = #tpu.dot_dimension_numbers<[1], [0], [0], [1], [0, 0, 1, 1], [], []>} : vector<8x8xbf16>, vector<8x8xbf16>, vector<8x8xf32> -> vector<8x8xf32>
    %c0_16 = arith.constant 0 : index
    %c8 = arith.constant 8 : index
    %41 = vector.load %arg8[%c0_16, %c8] : memref<8x32xf32, #tpu.memory_space<vmem>>, vector<8x8xf32>
    tpu.vector_store %arg8[%c0_16, %c8], %40 {strides = array<i32>} : memref<8x32xf32, #tpu.memory_space<vmem>>, vector<8x8xf32>,
    %42 = vector.extract_strided_slice %1 {offsets = [0, 16], sizes = [8, 8], strides = [1, 1]} : vector<8x32xbf16> to vector<8x8xbf16>
    %43 = vector.extract_strided_slice %4 {offsets = [0, 16], sizes = [8, 8], strides = [1, 1]} : vector<8x32xbf16> to vector<8x8xbf16>
    %cst_17 = arith.constant dense<0.000000e+00> : vector<8x8xf32>
    %44 = tpu.matmul %42, %43, %cst_17 {dimension_numbers = #tpu.dot_dimension_numbers<[1], [1], [0], [0], [0, 0, 1, 0], [], []>} : vector<8x8xbf16>, vector<8x8xbf16>, vector<8x8xf32> -> vector<8x8xf32>
    %cst_18 = arith.constant dense<0xFF800000> : vector<8xf32>
    %45 = vector.multi_reduction <maximumf>, %44, %cst_18 [1] : vector<8x8xf32> to vector<8xf32>
    %46 = vector.shape_cast %45 : vector<8xf32> to vector<8x1xf32>
    %47 = vector.broadcast %46 : vector<8x1xf32> to vector<8x8xf32>
    %48 = arith.subf %44, %47 : vector<8x8xf32>
    %49 = math.exp %48 : vector<8x8xf32>
    %cst_19 = arith.constant dense<0.000000e+00> : vector<8xf32>
    %50 = vector.multi_reduction <add>, %49, %cst_19 [1] : vector<8x8xf32> to vector<8xf32>
    %51 = vector.shape_cast %50 : vector<8xf32> to vector<8x1xf32>
    %cst_20 = arith.constant 1.000000e+00 : f32
    %52 = vector.broadcast %cst_20 : f32 to vector<8x1xf32>
    %53 = arith.divf %52, %51 : vector<8x1xf32>
    %54 = vector.broadcast %53 : vector<8x1xf32> to vector<8x8xf32>
    %55 = arith.mulf %49, %54 : vector<8x8xf32>
    %56 = arith.truncf %55 : vector<8x8xf32> to vector<8x8xbf16>
    %57 = vector.extract_strided_slice %5 {offsets = [0, 16], sizes = [8, 8], strides = [1, 1]} : vector<8x32xbf16> to vector<8x8xbf16>
    %cst_21 = arith.constant dense<0.000000e+00> : vector<8x8xf32>
    %58 = tpu.matmul %56, %57, %cst_21 {dimension_numbers = #tpu.dot_dimension_numbers<[1], [0], [0], [1], [0, 0, 1, 1], [], []>} : vector<8x8xbf16>, vector<8x8xbf16>, vector<8x8xf32> -> vector<8x8xf32>
    %c0_22 = arith.constant 0 : index
    %c16 = arith.constant 16 : index
    %59 = vector.load %arg8[%c0_22, %c16] : memref<8x32xf32, #tpu.memory_space<vmem>>, vector<8x8xf32>
    tpu.vector_store %arg8[%c0_22, %c16], %58 {strides = array<i32>} : memref<8x32xf32, #tpu.memory_space<vmem>>, vector<8x8xf32>,
    %60 = vector.extract_strided_slice %1 {offsets = [0, 24], sizes = [8, 8], strides = [1, 1]} : vector<8x32xbf16> to vector<8x8xbf16>
    %61 = vector.extract_strided_slice %4 {offsets = [0, 24], sizes = [8, 8], strides = [1, 1]} : vector<8x32xbf16> to vector<8x8xbf16>
    %cst_23 = arith.constant dense<0.000000e+00> : vector<8x8xf32>
    %62 = tpu.matmul %60, %61, %cst_23 {dimension_numbers = #tpu.dot_dimension_numbers<[1], [1], [0], [0], [0, 0, 1, 0], [], []>} : vector<8x8xbf16>, vector<8x8xbf16>, vector<8x8xf32> -> vector<8x8xf32>
    %cst_24 = arith.constant dense<0xFF800000> : vector<8xf32>
    %63 = vector.multi_reduction <maximumf>, %62, %cst_24 [1] : vector<8x8xf32> to vector<8xf32>
    %64 = vector.shape_cast %63 : vector<8xf32> to vector<8x1xf32>
    %65 = vector.broadcast %64 : vector<8x1xf32> to vector<8x8xf32>
    %66 = arith.subf %62, %65 : vector<8x8xf32>
    %67 = math.exp %66 : vector<8x8xf32>
    %cst_25 = arith.constant dense<0.000000e+00> : vector<8xf32>
    %68 = vector.multi_reduction <add>, %67, %cst_25 [1] : vector<8x8xf32> to vector<8xf32>
    %69 = vector.shape_cast %68 : vector<8xf32> to vector<8x1xf32>
    %cst_26 = arith.constant 1.000000e+00 : f32
    %70 = vector.broadcast %cst_26 : f32 to vector<8x1xf32>
    %71 = arith.divf %70, %69 : vector<8x1xf32>
    %72 = vector.broadcast %71 : vector<8x1xf32> to vector<8x8xf32>
    %73 = arith.mulf %67, %72 : vector<8x8xf32>
    %74 = arith.truncf %73 : vector<8x8xf32> to vector<8x8xbf16>
    %75 = vector.extract_strided_slice %5 {offsets = [0, 24], sizes = [8, 8], strides = [1, 1]} : vector<8x32xbf16> to vector<8x8xbf16>
    %cst_27 = arith.constant dense<0.000000e+00> : vector<8x8xf32>
    %76 = tpu.matmul %74, %75, %cst_27 {dimension_numbers = #tpu.dot_dimension_numbers<[1], [0], [0], [1], [0, 0, 1, 1], [], []>} : vector<8x8xbf16>, vector<8x8xbf16>, vector<8x8xf32> -> vector<8x8xf32>
    %c0_28 = arith.constant 0 : index
    %c24 = arith.constant 24 : index
    %77 = vector.load %arg8[%c0_28, %c24] : memref<8x32xf32, #tpu.memory_space<vmem>>, vector<8x8xf32>
    tpu.vector_store %arg8[%c0_28, %c24], %76 {strides = array<i32>} : memref<8x32xf32, #tpu.memory_space<vmem>>, vector<8x8xf32>,
    %c0_29 = arith.constant 0 : index
    %c0_30 = arith.constant 0 : index
    %78 = vector.load %arg8[%c0_29, %c0_30] : memref<8x32xf32, #tpu.memory_space<vmem>>, vector<8x32xf32>
    %79 = arith.truncf %78 : vector<8x32xf32> to vector<8x32xbf16>
    %c0_31 = arith.constant 0 : index
    %c0_32 = arith.constant 0 : index
    %80 = vector.load %arg4[%c0_31, %c0_32] : memref<32x32xbf16, #tpu.memory_space<vmem>>, vector<32x32xbf16>
    %cst_33 = arith.constant dense<0.000000e+00> : vector<8x32xf32>
    %81 = tpu.matmul %79, %80, %cst_33 {dimension_numbers = #tpu.dot_dimension_numbers<[1], [0], [0], [1], [0, 0, 1, 1], [], []>} : vector<8x32xbf16>, vector<32x32xbf16>, vector<8x32xf32> -> vector<8x32xf32>
    %c0_34 = arith.constant 0 : index
    %c0_35 = arith.constant 0 : index
    %82 = vector.load %arg5[%c0_34, %c0_35] : memref<1x32xf32, #tpu.memory_space<vmem>>, vector<1x32xf32>
    %83 = vector.broadcast %82 : vector<1x32xf32> to vector<8x32xf32>
    %84 = arith.addf %81, %83 : vector<8x32xf32>
    %c0_36 = arith.constant 0 : index
    %c0_37 = arith.constant 0 : index
    %c0_38 = arith.constant 0 : index
    %85 = vector.load %arg6[%c0_36, %c0_37, %c0_38] : memref<1x8x32xf32, #tpu.memory_space<vmem>>, vector<1x8x32xf32>
    %86 = vector.shape_cast %85 : vector<1x8x32xf32> to vector<8x32xf32>
    %87 = arith.addf %86, %84 : vector<8x32xf32>
    %c0_39 = arith.constant 0 : index
    %c0_40 = arith.constant 0 : index
    %c0_41 = arith.constant 0 : index
    %88 = vector.load %arg7[%c0_39, %c0_40, %c0_41] : memref<1x8x32xf32, #tpu.memory_space<vmem>>, vector<1x8x32xf32>
    %89 = vector.shape_cast %88 : vector<1x8x32xf32> to vector<8x32xf32>
    %90 = vector.shape_cast %87 : vector<8x32xf32> to vector<1x8x32xf32>
    tpu.vector_store %arg7[%c0_39, %c0_40, %c0_41], %90 {strides = array<i32>} : memref<1x8x32xf32, #tpu.memory_space<vmem>>, vector<1x8x32xf32>,
    return
  }
  func.func @transform_0(%arg0: i32, %arg1: i32) -> (i32, i32, i32) {
    %c0_i32 = arith.constant 0 : i32
    %c0_i32_0 = arith.constant 0 : i32
    return %arg0, %arg1, %c0_i32 : i32, i32, i32
  }
  func.func @transform_1(%arg0: i32, %arg1: i32) -> (i32, i32, i32) {
    %c0_i32 = arith.constant 0 : i32
    %c0_i32_0 = arith.constant 0 : i32
    %c0_i32_1 = arith.constant 0 : i32
    return %arg0, %c0_i32, %c0_i32_0 : i32, i32, i32
  }
  func.func @transform_2(%arg0: i32, %arg1: i32) -> (i32, i32) {
    %c0_i32 = arith.constant 0 : i32
    %c0_i32_0 = arith.constant 0 : i32
    %c0_i32_1 = arith.constant 0 : i32
    return %c0_i32, %c0_i32_0 : i32, i32
  }
  func.func @transform_3(%arg0: i32, %arg1: i32) -> (i32, i32) {
    %c0_i32 = arith.constant 0 : i32
    %c0_i32_0 = arith.constant 0 : i32
    %c0_i32_1 = arith.constant 0 : i32
    return %c0_i32, %c0_i32_0 : i32, i32
  }
  func.func @transform_4(%arg0: i32, %arg1: i32) -> (i32, i32, i32) {
    %c0_i32 = arith.constant 0 : i32
    %c0_i32_0 = arith.constant 0 : i32
    return %arg0, %arg1, %c0_i32 : i32, i32, i32
  }
  func.func @transform_5(%arg0: i32, %arg1: i32) -> (i32, i32, i32) {
    %c0_i32 = arith.constant 0 : i32
    %c0_i32_0 = arith.constant 0 : i32
    return %arg0, %arg1, %c0_i32 : i32, i32, i32
  }
}

module attributes {stable_mosaic.version = 11 : i64} {
  func.func @_linear_residual_kernel(%arg0: i32, %arg1: memref<16x32xf32, #tpu.memory_space<vmem>>, %arg2: memref<16x64xbf16, #tpu.memory_space<vmem>>, %arg3: memref<64x32xbf16, #tpu.memory_space<vmem>>, %arg4: memref<1x32xf32, #tpu.memory_space<vmem>>, %arg5: memref<16x32xf32, #tpu.memory_space<vmem>>) attributes {dimension_semantics = [#tpu.dimension_semantics<parallel>], iteration_bounds = array<i64: 1>, scalar_prefetch = 0 : i64, scratch_operands = 0 : i64, tpu.core_type = #tpu.core_type<tc>, window_params = [{transform_indices = @transform_0, window_bounds = array<i64: 16, 32>}, {transform_indices = @transform_1, window_bounds = array<i64: 16, 64>}, {pipeline_mode = #tpu.pipeline_mode<synchronous>, transform_indices = @transform_2, window_bounds = array<i64: 64, 32>}, {pipeline_mode = #tpu.pipeline_mode<synchronous>, transform_indices = @transform_3, window_bounds = array<i64: 1, 32>}, {transform_indices = @transform_4, window_bounds = array<i64: 16, 32>}]} {
    %c0 = arith.constant 0 : index
    %c0_0 = arith.constant 0 : index
    %0 = vector.load %arg2[%c0, %c0_0] : memref<16x64xbf16, #tpu.memory_space<vmem>>, vector<16x64xbf16>
    %c0_1 = arith.constant 0 : index
    %c0_2 = arith.constant 0 : index
    %1 = vector.load %arg3[%c0_1, %c0_2] : memref<64x32xbf16, #tpu.memory_space<vmem>>, vector<64x32xbf16>
    %cst = arith.constant dense<0.000000e+00> : vector<16x32xf32>
    %2 = tpu.matmul %0, %1, %cst {dimension_numbers = #tpu.dot_dimension_numbers<[1], [0], [0], [1], [0, 0, 1, 1], [], []>} : vector<16x64xbf16>, vector<64x32xbf16>, vector<16x32xf32> -> vector<16x32xf32>
    %c0_3 = arith.constant 0 : index
    %c0_4 = arith.constant 0 : index
    %3 = vector.load %arg4[%c0_3, %c0_4] : memref<1x32xf32, #tpu.memory_space<vmem>>, vector<1x32xf32>
    %4 = vector.broadcast %3 : vector<1x32xf32> to vector<16x32xf32>
    %5 = arith.addf %2, %4 : vector<16x32xf32>
    %c0_5 = arith.constant 0 : index
    %c0_6 = arith.constant 0 : index
    %6 = vector.load %arg1[%c0_5, %c0_6] : memref<16x32xf32, #tpu.memory_space<vmem>>, vector<16x32xf32>
    %7 = arith.addf %6, %5 : vector<16x32xf32>
    %c0_7 = arith.constant 0 : index
    %c0_8 = arith.constant 0 : index
    %8 = vector.load %arg5[%c0_7, %c0_8] : memref<16x32xf32, #tpu.memory_space<vmem>>, vector<16x32xf32>
    tpu.vector_store %arg5[%c0_7, %c0_8], %7 {strides = array<i32>} : memref<16x32xf32, #tpu.memory_space<vmem>>, vector<16x32xf32>,
    return
  }
  func.func @transform_0(%arg0: i32) -> (i32, i32) {
    %c0_i32 = arith.constant 0 : i32
    %c0_i32_0 = arith.constant 0 : i32
    return %arg0, %c0_i32 : i32, i32
  }
  func.func @transform_1(%arg0: i32) -> (i32, i32) {
    %c0_i32 = arith.constant 0 : i32
    %c0_i32_0 = arith.constant 0 : i32
    return %arg0, %c0_i32 : i32, i32
  }
  func.func @transform_2(%arg0: i32) -> (i32, i32) {
    %c0_i32 = arith.constant 0 : i32
    %c0_i32_0 = arith.constant 0 : i32
    %c0_i32_1 = arith.constant 0 : i32
    return %c0_i32, %c0_i32_0 : i32, i32
  }
  func.func @transform_3(%arg0: i32) -> (i32, i32) {
    %c0_i32 = arith.constant 0 : i32
    %c0_i32_0 = arith.constant 0 : i32
    %c0_i32_1 = arith.constant 0 : i32
    return %c0_i32, %c0_i32_0 : i32, i32
  }
  func.func @transform_4(%arg0: i32) -> (i32, i32) {
    %c0_i32 = arith.constant 0 : i32
    %c0_i32_0 = arith.constant 0 : i32
    return %arg0, %c0_i32 : i32, i32
  }
}

module attributes {stable_mosaic.version = 11 : i64} {
  func.func @_ln_linear_kernel(%arg0: i32, %arg1: i32, %arg2: memref<16x32xf32, #tpu.memory_space<vmem>>, %arg3: memref<1x32xf32, #tpu.memory_space<vmem>>, %arg4: memref<1x32xf32, #tpu.memory_space<vmem>>, %arg5: memref<32x64xbf16, #tpu.memory_space<vmem>>, %arg6: memref<1x64xf32, #tpu.memory_space<vmem>>, %arg7: memref<16x64xbf16, #tpu.memory_space<vmem>>) attributes {dimension_semantics = [#tpu.dimension_semantics<parallel>, #tpu.dimension_semantics<parallel>], iteration_bounds = array<i64: 1, 1>, scalar_prefetch = 0 : i64, scratch_operands = 0 : i64, tpu.core_type = #tpu.core_type<tc>, window_params = [{transform_indices = @transform_0, window_bounds = array<i64: 16, 32>}, {pipeline_mode = #tpu.pipeline_mode<synchronous>, transform_indices = @transform_1, window_bounds = array<i64: 1, 32>}, {pipeline_mode = #tpu.pipeline_mode<synchronous>, transform_indices = @transform_2, window_bounds = array<i64: 1, 32>}, {pipeline_mode = #tpu.pipeline_mode<synchronous>, transform_indices = @transform_3, window_bounds = array<i64: 32, 64>}, {pipeline_mode = #tpu.pipeline_mode<synchronous>, transform_indices = @transform_4, window_bounds = array<i64: 1, 64>}, {transform_indices = @transform_5, window_bounds = array<i64: 16, 64>}]} {
    %c0 = arith.constant 0 : index
    %c0_0 = arith.constant 0 : index
    %0 = vector.load %arg2[%c0, %c0_0] : memref<16x32xf32, #tpu.memory_space<vmem>>, vector<16x32xf32>
    %cst = arith.constant dense<0.000000e+00> : vector<16xf32>
    %1 = vector.multi_reduction <add>, %0, %cst [1] : vector<16x32xf32> to vector<16xf32>
    %2 = vector.shape_cast %1 : vector<16xf32> to vector<16x1xf32>
    %cst_1 = arith.constant 3.200000e+01 : f32
    %3 = vector.broadcast %cst_1 : f32 to vector<16x1xf32>
    %4 = arith.divf %2, %3 : vector<16x1xf32>
    %5 = vector.broadcast %4 : vector<16x1xf32> to vector<16x32xf32>
    %6 = arith.subf %0, %5 : vector<16x32xf32>
    %7 = arith.mulf %6, %6 : vector<16x32xf32>
    %cst_2 = arith.constant dense<0.000000e+00> : vector<16xf32>
    %8 = vector.multi_reduction <add>, %7, %cst_2 [1] : vector<16x32xf32> to vector<16xf32>
    %9 = vector.shape_cast %8 : vector<16xf32> to vector<16x1xf32>
    %cst_3 = arith.constant 3.200000e+01 : f32
    %10 = vector.broadcast %cst_3 : f32 to vector<16x1xf32>
    %11 = arith.divf %9, %10 : vector<16x1xf32>
    %12 = vector.broadcast %4 : vector<16x1xf32> to vector<16x32xf32>
    %13 = arith.subf %0, %12 : vector<16x32xf32>
    %cst_4 = arith.constant 9.99999974E-6 : f32
    %14 = vector.broadcast %cst_4 : f32 to vector<16x1xf32>
    %15 = arith.addf %11, %14 : vector<16x1xf32>
    %16 = math.rsqrt %15 : vector<16x1xf32>
    %17 = vector.broadcast %16 : vector<16x1xf32> to vector<16x32xf32>
    %18 = arith.mulf %13, %17 : vector<16x32xf32>
    %c0_5 = arith.constant 0 : index
    %c0_6 = arith.constant 0 : index
    %19 = vector.load %arg3[%c0_5, %c0_6] : memref<1x32xf32, #tpu.memory_space<vmem>>, vector<1x32xf32>
    %20 = vector.broadcast %19 : vector<1x32xf32> to vector<16x32xf32>
    %21 = arith.mulf %18, %20 : vector<16x32xf32>
    %c0_7 = arith.constant 0 : index
    %c0_8 = arith.constant 0 : index
    %22 = vector.load %arg4[%c0_7, %c0_8] : memref<1x32xf32, #tpu.memory_space<vmem>>, vector<1x32xf32>
    %23 = vector.broadcast %22 : vector<1x32xf32> to vector<16x32xf32>
    %24 = arith.addf %21, %23 : vector<16x32xf32>
    %25 = arith.truncf %24 : vector<16x32xf32> to vector<16x32xbf16>
    %c0_9 = arith.constant 0 : index
    %c0_10 = arith.constant 0 : index
    %26 = vector.load %arg5[%c0_9, %c0_10] : memref<32x64xbf16, #tpu.memory_space<vmem>>, vector<32x64xbf16>
    %cst_11 = arith.constant dense<0.000000e+00> : vector<16x64xf32>
    %27 = tpu.matmul %25, %26, %cst_11 {dimension_numbers = #tpu.dot_dimension_numbers<[1], [0], [0], [1], [0, 0, 1, 1], [], []>} : vector<16x32xbf16>, vector<32x64xbf16>, vector<16x64xf32> -> vector<16x64xf32>
    %c0_12 = arith.constant 0 : index
    %c0_13 = arith.constant 0 : index
    %28 = vector.load %arg6[%c0_12, %c0_13] : memref<1x64xf32, #tpu.memory_space<vmem>>, vector<1x64xf32>
    %29 = vector.broadcast %28 : vector<1x64xf32> to vector<16x64xf32>
    %30 = arith.addf %27, %29 : vector<16x64xf32>
    %cst_14 = arith.constant 5.000000e-01 : f32
    %31 = vector.broadcast %cst_14 : f32 to vector<16x64xf32>
    %32 = arith.mulf %31, %30 : vector<16x64xf32>
    %cst_15 = arith.constant 0.707106769 : f32
    %33 = vector.broadcast %cst_15 : f32 to vector<16x64xf32>
    %34 = arith.mulf %30, %33 : vector<16x64xf32>
    %35 = math.erf %34 : vector<16x64xf32>
    %cst_16 = arith.constant 1.000000e+00 : f32
    %36 = vector.broadcast %cst_16 : f32 to vector<16x64xf32>
    %37 = arith.addf %36, %35 : vector<16x64xf32>
    %38 = arith.mulf %32, %37 : vector<16x64xf32>
    %39 = arith.truncf %38 : vector<16x64xf32> to vector<16x64xbf16>
    %c0_17 = arith.constant 0 : index
    %c0_18 = arith.constant 0 : index
    %40 = vector.load %arg7[%c0_17, %c0_18] : memref<16x64xbf16, #tpu.memory_space<vmem>>, vector<16x64xbf16>
    tpu.vector_store %arg7[%c0_17, %c0_18], %39 {strides = array<i32>} : memref<16x64xbf16, #tpu.memory_space<vmem>>, vector<16x64xbf16>,
    return
  }
  func.func @transform_0(%arg0: i32, %arg1: i32) -> (i32, i32) {
    %c0_i32 = arith.constant 0 : i32
    %c0_i32_0 = arith.constant 0 : i32
    return %arg0, %c0_i32 : i32, i32
  }
  func.func @transform_1(%arg0: i32, %arg1: i32) -> (i32, i32) {
    %c0_i32 = arith.constant 0 : i32
    %c0_i32_0 = arith.constant 0 : i32
    %c0_i32_1 = arith.constant 0 : i32
    return %c0_i32, %c0_i32_0 : i32, i32
  }
  func.func @transform_2(%arg0: i32, %arg1: i32) -> (i32, i32) {
    %c0_i32 = arith.constant 0 : i32
    %c0_i32_0 = arith.constant 0 : i32
    %c0_i32_1 = arith.constant 0 : i32
    return %c0_i32, %c0_i32_0 : i32, i32
  }
  func.func @transform_3(%arg0: i32, %arg1: i32) -> (i32, i32) {
    %c0_i32 = arith.constant 0 : i32
    %c0_i32_0 = arith.constant 0 : i32
    %c0_i32_1 = arith.constant 0 : i32
    return %c0_i32, %c0_i32_0 : i32, i32
  }
  func.func @transform_4(%arg0: i32, %arg1: i32) -> (i32, i32) {
    %c0_i32 = arith.constant 0 : i32
    %c0_i32_0 = arith.constant 0 : i32
    %c0_i32_1 = arith.constant 0 : i32
    return %c0_i32, %c0_i32_0 : i32, i32
  }
  func.func @transform_5(%arg0: i32, %arg1: i32) -> (i32, i32) {
    %c0_i32 = arith.constant 0 : i32
    return %arg0, %arg1 : i32, i32
  }
}

module attributes {stable_mosaic.version = 11 : i64} {
  func.func @_attn_kernel(%arg0: i32, %arg1: i32, %arg2: memref<1x8x32xbf16, #tpu.memory_space<vmem>>, %arg3: memref<1x8x64xbf16, #tpu.memory_space<vmem>>, %arg4: memref<32x32xbf16, #tpu.memory_space<vmem>>, %arg5: memref<1x32xf32, #tpu.memory_space<vmem>>, %arg6: memref<1x8x32xf32, #tpu.memory_space<vmem>>, %arg7: memref<1x8x32xf32, #tpu.memory_space<vmem>>, %arg8: memref<8x32xf32, #tpu.memory_space<vmem>>) attributes {dimension_semantics = [#tpu.dimension_semantics<parallel>, #tpu.dimension_semantics<parallel>], iteration_bounds = array<i64: 2, 1>, scalar_prefetch = 0 : i64, scratch_operands = 1 : i64, tpu.core_type = #tpu.core_type<tc>, window_params = [{transform_indices = @transform_0, window_bounds = array<i64: 1, 8, 32>}, {transform_indices = @transform_1, window_bounds = array<i64: 1, 8, 64>}, {pipeline_mode = #tpu.pipeline_mode<synchronous>, transform_indices = @transform_2, window_bounds = array<i64: 32, 32>}, {pipeline_mode = #tpu.pipeline_mode<synchronous>, transform_indices = @transform_3, window_bounds = array<i64: 1, 32>}, {transform_indices = @transform_4, window_bounds = array<i64: 1, 8, 32>}, {transform_indices = @transform_5, window_bounds = array<i64: 1, 8, 32>}]} {
    %c0 = arith.constant 0 : index
    %c0_0 = arith.constant 0 : index
    %c0_1 = arith.constant 0 : index
    %0 = vector.load %arg2[%c0, %c0_0, %c0_1] : memref<1x8x32xbf16, #tpu.memory_space<vmem>>, vector<1x8x32xbf16>
    %1 = vector.shape_cast %0 : vector<1x8x32xbf16> to vector<8x32xbf16>
    %c0_2 = arith.constant 0 : index
    %c0_3 = arith.constant 0 : index
    %c0_4 = arith.constant 0 : index
    %2 = vector.load %arg3[%c0_2, %c0_3, %c0_4] : memref<1x8x64xbf16, #tpu.memory_space<vmem>>, vector<1x8x64xbf16>
    %3 = vector.shape_cast %2 : vector<1x8x64xbf16> to vector<8x64xbf16>
    %4 = vector.extract_strided_slice %3 {offsets = [0, 0], sizes = [8, 32], strides = [1, 1]} : vector<8x64xbf16> to vector<8x32xbf16>
    %5 = vector.extract_strided_slice %3 {offsets = [0, 32], sizes = [8, 32], strides = [1, 1]} : vector<8x64xbf16> to vector<8x32xbf16>
    %6 = vector.extract_strided_slice %1 {offsets = [0, 0], sizes = [8, 8], strides = [1, 1]} : vector<8x32xbf16> to vector<8x8xbf16>
    %7 = vector.extract_strided_slice %4 {offsets = [0, 0], sizes = [8, 8], strides = [1, 1]} : vector<8x32xbf16> to vector<8x8xbf16>
    %cst = arith.constant dense<0.000000e+00> : vector<8x8xf32>
    %8 = tpu.matmul %6, %7, %cst {dimension_numbers = #tpu.dot_dimension_numbers<[1], [1], [0], [0], [0, 0, 1, 0], [], []>} : vector<8x8xbf16>, vector<8x8xbf16>, vector<8x8xf32> -> vector<8x8xf32>
    %cst_5 = arith.constant dense<0xFF800000> : vector<8xf32>
    %9 = vector.multi_reduction <maximumf>, %8, %cst_5 [1] : vector<8x8xf32> to vector<8xf32>
    %10 = vector.shape_cast %9 : vector<8xf32> to vector<8x1xf32>
    %11 = vector.broadcast %10 : vector<8x1xf32> to vector<8x8xf32>
    %12 = arith.subf %8, %11 : vector<8x8xf32>
    %13 = math.exp %12 : vector<8x8xf32>
    %cst_6 = arith.constant dense<0.000000e+00> : vector<8xf32>
    %14 = vector.multi_reduction <add>, %13, %cst_6 [1] : vector<8x8xf32> to vector<8xf32>
    %15 = vector.shape_cast %14 : vector<8xf32> to vector<8x1xf32>
    %cst_7 = arith.constant 1.000000e+00 : f32
    %16 = vector.broadcast %cst_7 : f32 to vector<8x1xf32>
    %17 = arith.divf %16, %15 : vector<8x1xf32>
    %18 = vector.broadcast %17 : vector<8x1xf32> to vector<8x8xf32>
    %19 = arith.mulf %13, %18 : vector<8x8xf32>
    %20 = arith.truncf %19 : vector<8x8xf32> to vector<8x8xbf16>
    %21 = vector.extract_strided_slice %5 {offsets = [0, 0], sizes = [8, 8], strides = [1, 1]} : vector<8x32xbf16> to vector<8x8xbf16>
    %cst_8 = arith.constant dense<0.000000e+00> : vector<8x8xf32>
    %22 = tpu.matmul %20, %21, %cst_8 {dimension_numbers = #tpu.dot_dimension_numbers<[1], [0], [0], [1], [0, 0, 1, 1], [], []>} : vector<8x8xbf16>, vector<8x8xbf16>, vector<8x8xf32> -> vector<8x8xf32>
    %c0_9 = arith.constant 0 : index
    %c0_10 = arith.constant 0 : index
    %23 = vector.load %arg8[%c0_9, %c0_10] : memref<8x32xf32, #tpu.memory_space<vmem>>, vector<8x8xf32>
    tpu.vector_store %arg8[%c0_9, %c0_10], %22 {strides = array<i32>} : memref<8x32xf32, #tpu.memory_space<vmem>>, vector<8x8xf32>,
    %24 = vector.extract_strided_slice %1 {offsets = [0, 8], sizes = [8, 8], strides = [1, 1]} : vector<8x32xbf16> to vector<8x8xbf16>
    %25 = vector.extract_strided_slice %4 {offsets = [0, 8], sizes = [8, 8], strides = [1, 1]} : vector<8x32xbf16> to vector<8x8xbf16>
    %cst_11 = arith.constant dense<0.000000e+00> : vector<8x8xf32>
    %26 = tpu.matmul %24, %25, %cst_11 {dimension_numbers = #tpu.dot_dimension_numbers<[1], [1], [0], [0], [0, 0, 1, 0], [], []>} : vector<8x8xbf16>, vector<8x8xbf16>, vector<8x8xf32> -> vector<8x8xf32>
    %cst_12 = arith.constant dense<0xFF800000> : vector<8xf32>
    %27 = vector.multi_reduction <maximumf>, %26, %cst_12 [1] : vector<8x8xf32> to vector<8xf32>
    %28 = vector.shape_cast %27 : vector<8xf32> to vector<8x1xf32>
    %29 = vector.broadcast %28 : vector<8x1xf32> to vector<8x8xf32>
    %30 = arith.subf %26, %29 : vector<8x8xf32>
    %31 = math.exp %30 : vector<8x8xf32>
    %cst_13 = arith.constant dense<0.000000e+00> : vector<8xf32>
    %32 = vector.multi_reduction <add>, %31, %cst_13 [1] : vector<8x8xf32> to vector<8xf32>
    %33 = vector.shape_cast %32 : vector<8xf32> to vector<8x1xf32>
    %cst_14 = arith.constant 1.000000e+00 : f32
    %34 = vector.broadcast %cst_14 : f32 to vector<8x1xf32>
    %35 = arith.divf %34, %33 : vector<8x1xf32>
    %36 = vector.broadcast %35 : vector<8x1xf32> to vector<8x8xf32>
    %37 = arith.mulf %31, %36 : vector<8x8xf32>
    %38 = arith.truncf %37 : vector<8x8xf32> to vector<8x8xbf16>
    %39 = vector.extract_strided_slice %5 {offsets = [0, 8], sizes = [8, 8], strides = [1, 1]} : vector<8x32xbf16> to vector<8x8xbf16>
    %cst_15 = arith.constant dense<0.000000e+00> : vector<8x8xf32>
    %40 = tpu.matmul %38, %39, %cst_15 {dimension_numbers = #tpu.dot_dimension_numbers<[1], [0], [0], [1], [0, 0, 1, 1], [], []>} : vector<8x8xbf16>, vector<8x8xbf16>, vector<8x8xf32> -> vector<8x8xf32>
    %c0_16 = arith.constant 0 : index
    %c8 = arith.constant 8 : index
    %41 = vector.load %arg8[%c0_16, %c8] : memref<8x32xf32, #tpu.memory_space<vmem>>, vector<8x8xf32>
    tpu.vector_store %arg8[%c0_16, %c8], %40 {strides = array<i32>} : memref<8x32xf32, #tpu.memory_space<vmem>>, vector<8x8xf32>,
    %42 = vector.extract_strided_slice %1 {offsets = [0, 16], sizes = [8, 8], strides = [1, 1]} : vector<8x32xbf16> to vector<8x8xbf16>
    %43 = vector.extract_strided_slice %4 {offsets = [0, 16], sizes = [8, 8], strides = [1, 1]} : vector<8x32xbf16> to vector<8x8xbf16>
    %cst_17 = arith.constant dense<0.000000e+00> : vector<8x8xf32>
    %44 = tpu.matmul %42, %43, %cst_17 {dimension_numbers = #tpu.dot_dimension_numbers<[1], [1], [0], [0], [0, 0, 1, 0], [], []>} : vector<8x8xbf16>, vector<8x8xbf16>, vector<8x8xf32> -> vector<8x8xf32>
    %cst_18 = arith.constant dense<0xFF800000> : vector<8xf32>
    %45 = vector.multi_reduction <maximumf>, %44, %cst_18 [1] : vector<8x8xf32> to vector<8xf32>
    %46 = vector.shape_cast %45 : vector<8xf32> to vector<8x1xf32>
    %47 = vector.broadcast %46 : vector<8x1xf32> to vector<8x8xf32>
    %48 = arith.subf %44, %47 : vector<8x8xf32>
    %49 = math.exp %48 : vector<8x8xf32>
    %cst_19 = arith.constant dense<0.000000e+00> : vector<8xf32>
    %50 = vector.multi_reduction <add>, %49, %cst_19 [1] : vector<8x8xf32> to vector<8xf32>
    %51 = vector.shape_cast %50 : vector<8xf32> to vector<8x1xf32>
    %cst_20 = arith.constant 1.000000e+00 : f32
    %52 = vector.broadcast %cst_20 : f32 to vector<8x1xf32>
    %53 = arith.divf %52, %51 : vector<8x1xf32>
    %54 = vector.broadcast %53 : vector<8x1xf32> to vector<8x8xf32>
    %55 = arith.mulf %49, %54 : vector<8x8xf32>
    %56 = arith.truncf %55 : vector<8x8xf32> to vector<8x8xbf16>
    %57 = vector.extract_strided_slice %5 {offsets = [0, 16], sizes = [8, 8], strides = [1, 1]} : vector<8x32xbf16> to vector<8x8xbf16>
    %cst_21 = arith.constant dense<0.000000e+00> : vector<8x8xf32>
    %58 = tpu.matmul %56, %57, %cst_21 {dimension_numbers = #tpu.dot_dimension_numbers<[1], [0], [0], [1], [0, 0, 1, 1], [], []>} : vector<8x8xbf16>, vector<8x8xbf16>, vector<8x8xf32> -> vector<8x8xf32>
    %c0_22 = arith.constant 0 : index
    %c16 = arith.constant 16 : index
    %59 = vector.load %arg8[%c0_22, %c16] : memref<8x32xf32, #tpu.memory_space<vmem>>, vector<8x8xf32>
    tpu.vector_store %arg8[%c0_22, %c16], %58 {strides = array<i32>} : memref<8x32xf32, #tpu.memory_space<vmem>>, vector<8x8xf32>,
    %60 = vector.extract_strided_slice %1 {offsets = [0, 24], sizes = [8, 8], strides = [1, 1]} : vector<8x32xbf16> to vector<8x8xbf16>
    %61 = vector.extract_strided_slice %4 {offsets = [0, 24], sizes = [8, 8], strides = [1, 1]} : vector<8x32xbf16> to vector<8x8xbf16>
    %cst_23 = arith.constant dense<0.000000e+00> : vector<8x8xf32>
    %62 = tpu.matmul %60, %61, %cst_23 {dimension_numbers = #tpu.dot_dimension_numbers<[1], [1], [0], [0], [0, 0, 1, 0], [], []>} : vector<8x8xbf16>, vector<8x8xbf16>, vector<8x8xf32> -> vector<8x8xf32>
    %cst_24 = arith.constant dense<0xFF800000> : vector<8xf32>
    %63 = vector.multi_reduction <maximumf>, %62, %cst_24 [1] : vector<8x8xf32> to vector<8xf32>
    %64 = vector.shape_cast %63 : vector<8xf32> to vector<8x1xf32>
    %65 = vector.broadcast %64 : vector<8x1xf32> to vector<8x8xf32>
    %66 = arith.subf %62, %65 : vector<8x8xf32>
    %67 = math.exp %66 : vector<8x8xf32>
    %cst_25 = arith.constant dense<0.000000e+00> : vector<8xf32>
    %68 = vector.multi_reduction <add>, %67, %cst_25 [1] : vector<8x8xf32> to vector<8xf32>
    %69 = vector.shape_cast %68 : vector<8xf32> to vector<8x1xf32>
    %cst_26 = arith.constant 1.000000e+00 : f32
    %70 = vector.broadcast %cst_26 : f32 to vector<8x1xf32>
    %71 = arith.divf %70, %69 : vector<8x1xf32>
    %72 = vector.broadcast %71 : vector<8x1xf32> to vector<8x8xf32>
    %73 = arith.mulf %67, %72 : vector<8x8xf32>
    %74 = arith.truncf %73 : vector<8x8xf32> to vector<8x8xbf16>
    %75 = vector.extract_strided_slice %5 {offsets = [0, 24], sizes = [8, 8], strides = [1, 1]} : vector<8x32xbf16> to vector<8x8xbf16>
    %cst_27 = arith.constant dense<0.000000e+00> : vector<8x8xf32>
    %76 = tpu.matmul %74, %75, %cst_27 {dimension_numbers = #tpu.dot_dimension_numbers<[1], [0], [0], [1], [0, 0, 1, 1], [], []>} : vector<8x8xbf16>, vector<8x8xbf16>, vector<8x8xf32> -> vector<8x8xf32>
    %c0_28 = arith.constant 0 : index
    %c24 = arith.constant 24 : index
    %77 = vector.load %arg8[%c0_28, %c24] : memref<8x32xf32, #tpu.memory_space<vmem>>, vector<8x8xf32>
    tpu.vector_store %arg8[%c0_28, %c24], %76 {strides = array<i32>} : memref<8x32xf32, #tpu.memory_space<vmem>>, vector<8x8xf32>,
    %c0_29 = arith.constant 0 : index
    %c0_30 = arith.constant 0 : index
    %78 = vector.load %arg8[%c0_29, %c0_30] : memref<8x32xf32, #tpu.memory_space<vmem>>, vector<8x32xf32>
    %79 = arith.truncf %78 : vector<8x32xf32> to vector<8x32xbf16>
    %c0_31 = arith.constant 0 : index
    %c0_32 = arith.constant 0 : index
    %80 = vector.load %arg4[%c0_31, %c0_32] : memref<32x32xbf16, #tpu.memory_space<vmem>>, vector<32x32xbf16>
    %cst_33 = arith.constant dense<0.000000e+00> : vector<8x32xf32>
    %81 = tpu.matmul %79, %80, %cst_33 {dimension_numbers = #tpu.dot_dimension_numbers<[1], [0], [0], [1], [0, 0, 1, 1], [], []>} : vector<8x32xbf16>, vector<32x32xbf16>, vector<8x32xf32> -> vector<8x32xf32>
    %c0_34 = arith.constant 0 : index
    %c0_35 = arith.constant 0 : index
    %82 = vector.load %arg5[%c0_34, %c0_35] : memref<1x32xf32, #tpu.memory_space<vmem>>, vector<1x32xf32>
    %83 = vector.broadcast %82 : vector<1x32xf32> to vector<8x32xf32>
    %84 = arith.addf %81, %83 : vector<8x32xf32>
    %c0_36 = arith.constant 0 : index
    %c0_37 = arith.constant 0 : index
    %c0_38 = arith.constant 0 : index
    %85 = vector.load %arg6[%c0_36, %c0_37, %c0_38] : memref<1x8x32xf32, #tpu.memory_space<vmem>>, vector<1x8x32xf32>
    %86 = vector.shape_cast %85 : vector<1x8x32xf32> to vector<8x32xf32>
    %87 = arith.addf %86, %84 : vector<8x32xf32>
    %c0_39 = arith.constant 0 : index
    %c0_40 = arith.constant 0 : index
    %c0_41 = arith.constant 0 : index
    %88 = vector.load %arg7[%c0_39, %c0_40, %c0_41] : memref<1x8x32xf32, #tpu.memory_space<vmem>>, vector<1x8x32xf32>
    %89 = vector.shape_cast %88 : vector<1x8x32xf32> to vector<8x32xf32>
    %90 = vector.shape_cast %87 : vector<8x32xf32> to vector<1x8x32xf32>
    tpu.vector_store %arg7[%c0_39, %c0_40, %c0_41], %90 {strides = array<i32>} : memref<1x8x32xf32, #tpu.memory_space<vmem>>, vector<1x8x32xf32>,
    return
  }
  func.func @transform_0(%arg0: i32, %arg1: i32) -> (i32, i32, i32) {
    %c0_i32 = arith.constant 0 : i32
    %c0_i32_0 = arith.constant 0 : i32
    return %arg0, %arg1, %c0_i32 : i32, i32, i32
  }
  func.func @transform_1(%arg0: i32, %arg1: i32) -> (i32, i32, i32) {
    %c0_i32 = arith.constant 0 : i32
    %c0_i32_0 = arith.constant 0 : i32
    %c0_i32_1 = arith.constant 0 : i32
    return %arg0, %c0_i32, %c0_i32_0 : i32, i32, i32
  }
  func.func @transform_2(%arg0: i32, %arg1: i32) -> (i32, i32) {
    %c0_i32 = arith.constant 0 : i32
    %c0_i32_0 = arith.constant 0 : i32
    %c0_i32_1 = arith.constant 0 : i32
    return %c0_i32, %c0_i32_0 : i32, i32
  }
  func.func @transform_3(%arg0: i32, %arg1: i32) -> (i32, i32) {
    %c0_i32 = arith.constant 0 : i32
    %c0_i32_0 = arith.constant 0 : i32
    %c0_i32_1 = arith.constant 0 : i32
    return %c0_i32, %c0_i32_0 : i32, i32
  }
  func.func @transform_4(%arg0: i32, %arg1: i32) -> (i32, i32, i32) {
    %c0_i32 = arith.constant 0 : i32
    %c0_i32_0 = arith.constant 0 : i32
    return %arg0, %arg1, %c0_i32 : i32, i32, i32
  }
  func.func @transform_5(%arg0: i32, %arg1: i32) -> (i32, i32, i32) {
    %c0_i32 = arith.constant 0 : i32
    %c0_i32_0 = arith.constant 0 : i32
    return %arg0, %arg1, %c0_i32 : i32, i32, i32
  }
}

</mosaic_0001>

<llo_original>
// kernel: _lambda_.10
$region0: #{_lambda_.10}
  #allocation0 [shape = 'u32[]', space=smem, size = 0x4, offset = 0x4, fixed_abs, tag = 'smem constant byte address 0x4 - core index']
  #allocation1 [shape = 'u32[72,128]{1,0:T(1,128)}', space=vmem, size = 0x9000, scoped, tag = 'internal scratch']
  %s0 = inlined_call_operand.hbm [shape: f32[16,32], index: 0, kind: input, shape index: {}]
  %s1 = inlined_call_operand.hbm [shape: bf16[32,64], index: 1, kind: input, shape index: {}]
  %s2 = inlined_call_operand.hbm [shape: f32[1,64], index: 2, kind: input, shape index: {}]
  %s3 = inlined_call_operand.vmem [shape: bf16[16,64], index: 3, kind: output, shape index: {}]
  %s4 = sld [smem:[#allocation0]]
  $region34: #{_lambda_.10} parent=0
    _
  %s6 = ssub.s32 1, %s4
  %s7 = scalar_select 0, %s6, %s4
  $region1: #{_lambda_.10} parent=0
    #allocation2 [shape = 'u8[8192]{0}', space=vmem, size = 0x2000, scoped, tag = 'input window, operand 0, single buffered']
    #allocation3 [shape = 's32[1]{0}', space=sflag, size = 0x4, scoped, tag = 'scoped memory for _lambda_.10']
    #allocation4 [shape = 'u8[8192]{0}', space=vmem, size = 0x2000, scoped, tag = 'input window, operand 1, single buffered']
    #allocation5 [shape = 's32[1]{0}', space=sflag, size = 0x4, scoped, tag = 'scoped memory for _lambda_.10']
    #allocation6 [shape = 'u8[512]{0}', space=vmem, size = 0x400, scoped, tag = 'input window, operand 2, single buffered']
    %8 = vsyncpa [#allocation3], 0
    %9 = vsyncpa [#allocation5], 0
    // Predicated region
    $region2: #{_lambda_.10} parent=1 // pred_check
      _
    $region3: #{_lambda_.10} parent=1 // pred_check_branch
      %11 = sbr.rel (0) target = $region5
    $region4: #{_lambda_.10} parent=1 // pred_region
      %13 = vsyncadd [#allocation3], 0
      %s14 = sshll.u32 %s0, 4
      %s15 = int_to_ptr.hbm [resolvable:$true] %s14
      %s16 = sshll.u32 [#allocation2], 4
      %s17 = int_to_ptr.vmem [resolvable:$true] %s16
      %22 = dma.hbm_to_vmem [thread:$0]  %s15, 256, %s17, [#allocation3], 128, 128, 8
    $region5: #{_lambda_.10} parent=1 // pred_fallthru
      _
    // Predicated region
    $region6: #{_lambda_.10} parent=1 // pred_check
      _
    $region7: #{_lambda_.10} parent=1 // pred_check_branch
      %24 = sbr.rel (0) target = $region9
    $region8: #{_lambda_.10} parent=1 // pred_region
      %26 = vsyncadd [#allocation5], 0
      %s27 = sshll.u32 %s1, 4
      %s28 = int_to_ptr.hbm [resolvable:$true] %s27
      %s29 = sshll.u32 [#allocation4], 4
      %s30 = int_to_ptr.vmem [resolvable:$true] %s29
      %35 = dma.hbm_to_vmem [thread:$0]  %s28, 256, %s30, [#allocation5], 64, 64, 4
    $region9: #{_lambda_.10} parent=1 // pred_fallthru
      _
    // Predicated region
    $region10: #{_lambda_.10} parent=1 // pred_check
      _
    $region11: #{_lambda_.10} parent=1 // pred_check_branch
      %37 = sbr.rel (0) target = $region13
    $region12: #{_lambda_.10} parent=1 // pred_region
      %39 = vsyncadd [#allocation5], 0
      %s41 = sshll.u32 %s2, 4
      %s42 = int_to_ptr.hbm [resolvable:$true] %s41
      %s43 = sshll.u32 [#allocation6], 4
      %s44 = int_to_ptr.vmem [resolvable:$true] %s43
      %46 = dma.hbm_to_vmem [thread:$0]  %s42, 16, %s44, [#allocation5]
    $region13: #{_lambda_.10} parent=1 // pred_fallthru
      _
    // Predicated region
    $region14: #{_lambda_.10} parent=1 // pred_check
      _
    $region15: #{_lambda_.10} parent=1 // pred_check_branch
      %48 = sbr.rel (0) target = $region17
    $region16: #{_lambda_.10} parent=1 // pred_region
      %50 = dma.done [#allocation3], 256
    $region17: #{_lambda_.10} parent=1 // pred_fallthru
      _
    // Predicated region
    $region18: #{_lambda_.10} parent=1 // pred_check
      _
    $region19: #{_lambda_.10} parent=1 // pred_check_branch
      %52 = sbr.rel (0) target = $region21
    $region20: #{_lambda_.10} parent=1 // pred_region
      %54 = dma.done [#allocation5], 256
    $region21: #{_lambda_.10} parent=1 // pred_fallthru
      _
    // Predicated region
    $region22: #{_lambda_.10} parent=1 // pred_check
      _
    $region23: #{_lambda_.10} parent=1 // pred_check_branch
      %56 = sbr.rel (0) target = $region25
    $region24: #{_lambda_.10} parent=1 // pred_region
      %58 = dma.done [#allocation5], 16
    $region25: #{_lambda_.10} parent=1 // pred_fallthru
      _
    %v60 = vld [vmem:[#allocation2] sm:$0xff]
    %v61 = vld [vmem:[#allocation2 + $0x8] sm:$0xff]
    %v62 = vpack.c.bf16 %v61, %v60
    %v63 = vld [vmem:[#allocation4] sm:$0xf]
    %v64 = vld [vmem:[#allocation4 + $0x4] sm:$0xf]
    %v65 = vld [vmem:[#allocation4 + $0x8] sm:$0xf]
    %v66 = vld [vmem:[#allocation4 + $0xc] sm:$0xf]
    %v67 = vld [vmem:[#allocation6] sm:$0x1]
    %v69 = vperm.slane %v67, 0
    %v75 = vunpack.c.l.b16 %v63
    %v76 = vunpack.c.l.b16 %v64
    %v77 = vunpack.c.l.b16 %v65
    %v78 = vunpack.c.l.b16 %v66
    %v79 = vpack.c.b16 %v76, %v75
    %v80 = vpack.c.b16 %v78, %v77
    %vm83 = vcmask 261120
    %v85 = vsel %vm83, %v62, 0
    %87 = vmatpush.bf16.msra.mxu0 0
    %88 = vmatpush.bf16.msra.mxu0 0
    %89 = vmatpush.bf16.msra.mxu0 0
    %90 = vmatpush.bf16.msra.mxu0 0
    %91 = vmatpush.bf16.msra.mxu0 0
    %92 = vmatpush.bf16.msra.mxu0 0
    %93 = vmatpush.bf16.msra.mxu0 %v80
    %94 = vmatpush.bf16.msra.mxu0 %v79
    %95 = vmatmul.bf16.gmra.mxu0 %v85
    %v96 = vpop.f32.mrf.mxu0
    %v97 = vadd.f32 %v69, %v96
    %v98 = vpop.f32.mrf.mxu0
    %v99 = vadd.f32 %v69, %v98
    %100 = vdwg.mxu0
    %v101 = vpack.c.bf16 %v97, %v97
    %v102 = vpack.c.bf16 %v99, %v99
    %vm103 = vcmask 519168
    %104 = vst.msk [vmem:[%s3] sm:$0xf] %vm103, %v101
    %105 = vst.msk [vmem:[%s3 + $0x4] sm:$0xf] %vm103, %v102
    // Predicated region
    $region26: #{_lambda_.10} parent=1 // pred_check
      _
    $region27: #{_lambda_.10} parent=1 // pred_check_branch
      %107 = sbr.rel (0) target = $region29
    $region28: #{_lambda_.10} parent=1 // pred_region
      _
    $region29: #{_lambda_.10} parent=1 // pred_fallthru
      _
    // Predicated region
    $region30: #{_lambda_.10} parent=1 // pred_check
      _
    $region31: #{_lambda_.10} parent=1 // pred_check_branch
      %109 = sbr.rel (0) target = $region33
    $region32: #{_lambda_.10} parent=1 // pred_region
      _
    $region33: #{_lambda_.10} parent=1 // pred_fallthru
      _
    %110 = vsyncpa [#allocation3], 1
    %111 = vsyncpa [#allocation5], 1

// kernel: _lambda_.9
$region0: #{_lambda_.9}
  #allocation0 [shape = 'u32[]', space=smem, size = 0x4, offset = 0x4, fixed_abs, tag = 'smem constant byte address 0x4 - core index']
  #allocation1 [shape = 'u32[72,128]{1,0:T(1,128)}', space=vmem, size = 0x9000, scoped, tag = 'internal scratch']
  %s0 = inlined_call_operand.vmem [shape: f32[16,32], index: 0, kind: input, shape index: {}]
  %s1 = inlined_call_operand.hbm [shape: f32[1,32], index: 1, kind: input, shape index: {}]
  %s2 = inlined_call_operand.hbm [shape: f32[1,32], index: 2, kind: input, shape index: {}]
  %s3 = inlined_call_operand.hbm [shape: bf16[32,32], index: 3, kind: input, shape index: {}]
  %s4 = inlined_call_operand.hbm [shape: f32[1,32], index: 4, kind: input, shape index: {}]
  %s5 = inlined_call_operand.vmem [shape: bf16[16,32], index: 5, kind: output, shape index: {}]
  %s6 = sld [smem:[#allocation0]]
  $region46: #{_lambda_.9} parent=0
    _
  %s8 = ssub.s32 1, %s6
  %s9 = scalar_select 0, %s8, %s6
  $region1: #{_lambda_.9} parent=0
    #allocation2 [shape = 'u8[512]{0}', space=vmem, size = 0x400, scoped, tag = 'input window, operand 1, single buffered']
    #allocation3 [shape = 's32[1]{0}', space=sflag, size = 0x4, scoped, tag = 'scoped memory for _lambda_.9']
    #allocation4 [shape = 'u8[512]{0}', space=vmem, size = 0x400, scoped, tag = 'input window, operand 2, single buffered']
    #allocation5 [shape = 's32[1]{0}', space=sflag, size = 0x4, scoped, tag = 'scoped memory for _lambda_.9']
    #allocation6 [shape = 'u8[8192]{0}', space=vmem, size = 0x2000, scoped, tag = 'input window, operand 3, single buffered']
    #allocation7 [shape = 'u8[512]{0}', space=vmem, size = 0x400, scoped, tag = 'input window, operand 4, single buffered']
    #allocation8 [shape = 's32[1]{0}', space=sflag, size = 0x4, scoped, tag = 'scoped memory for _lambda_.9']
    %10 = vsyncpa [#allocation3], 0
    %11 = vsyncpa [#allocation5], 0
    %12 = vsyncpa [#allocation8], 0
    // Predicated region
    $region2: #{_lambda_.9} parent=1 // pred_check
      _
    $region3: #{_lambda_.9} parent=1 // pred_check_branch
      %14 = sbr.rel (0) target = $region5
    $region4: #{_lambda_.9} parent=1 // pred_region
      _
    $region5: #{_lambda_.9} parent=1 // pred_fallthru
      _
    // Predicated region
    $region6: #{_lambda_.9} parent=1 // pred_check
      _
    $region7: #{_lambda_.9} parent=1 // pred_check_branch
      %16 = sbr.rel (0) target = $region9
    $region8: #{_lambda_.9} parent=1 // pred_region
      %18 = vsyncadd [#allocation3], 0
      %s20 = sshll.u32 %s1, 4
      %s21 = int_to_ptr.hbm [resolvable:$true] %s20
      %s22 = sshll.u32 [#allocation2], 4
      %s23 = int_to_ptr.vmem [resolvable:$true] %s22
      %25 = dma.hbm_to_vmem [thread:$0]  %s21, 16, %s23, [#allocation3]
    $region9: #{_lambda_.9} parent=1 // pred_fallthru
      _
    // Predicated region
    $region10: #{_lambda_.9} parent=1 // pred_check
      _
    $region11: #{_lambda_.9} parent=1 // pred_check_branch
      %27 = sbr.rel (0) target = $region13
    $region12: #{_lambda_.9} parent=1 // pred_region
      %29 = vsyncadd [#allocation5], 0
      %s31 = sshll.u32 %s2, 4
      %s32 = int_to_ptr.hbm [resolvable:$true] %s31
      %s33 = sshll.u32 [#allocation4], 4
      %s34 = int_to_ptr.vmem [resolvable:$true] %s33
      %36 = dma.hbm_to_vmem [thread:$0]  %s32, 16, %s34, [#allocation5]
    $region13: #{_lambda_.9} parent=1 // pred_fallthru
      _
    // Predicated region
    $region14: #{_lambda_.9} parent=1 // pred_check
      _
    $region15: #{_lambda_.9} parent=1 // pred_check_branch
      %38 = sbr.rel (0) target = $region17
    $region16: #{_lambda_.9} parent=1 // pred_region
      %40 = vsyncadd [#allocation5], 0
      %s41 = sshll.u32 %s3, 4
      %s42 = int_to_ptr.hbm [resolvable:$true] %s41
      %s43 = sshll.u32 [#allocation6], 4
      %s44 = int_to_ptr.vmem [resolvable:$true] %s43
      %49 = dma.hbm_to_vmem [thread:$0]  %s42, 256, %s44, [#allocation5], 64, 64, 4
    $region17: #{_lambda_.9} parent=1 // pred_fallthru
      _
    // Predicated region
    $region18: #{_lambda_.9} parent=1 // pred_check
      _
    $region19: #{_lambda_.9} parent=1 // pred_check_branch
      %51 = sbr.rel (0) target = $region21
    $region20: #{_lambda_.9} parent=1 // pred_region
      %53 = vsyncadd [#allocation8], 0
      %s55 = sshll.u32 %s4, 4
      %s56 = int_to_ptr.hbm [resolvable:$true] %s55
      %s57 = sshll.u32 [#allocation7], 4
      %s58 = int_to_ptr.vmem [resolvable:$true] %s57
      %60 = dma.hbm_to_vmem [thread:$0]  %s56, 16, %s58, [#allocation8]
    $region21: #{_lambda_.9} parent=1 // pred_fallthru
      _
    // Predicated region
    $region22: #{_lambda_.9} parent=1 // pred_check
      _
    $region23: #{_lambda_.9} parent=1 // pred_check_branch
      %62 = sbr.rel (0) target = $region25
    $region24: #{_lambda_.9} parent=1 // pred_region
      %64 = dma.done [#allocation3], 16
    $region25: #{_lambda_.9} parent=1 // pred_fallthru
      _
    // Predicated region
    $region26: #{_lambda_.9} parent=1 // pred_check
      _
    $region27: #{_lambda_.9} parent=1 // pred_check_branch
      %66 = sbr.rel (0) target = $region29
    $region28: #{_lambda_.9} parent=1 // pred_region
      %68 = dma.done [#allocation5], 16
    $region29: #{_lambda_.9} parent=1 // pred_fallthru
      _
    // Predicated region
    $region30: #{_lambda_.9} parent=1 // pred_check
      _
    $region31: #{_lambda_.9} parent=1 // pred_check_branch
      %70 = sbr.rel (0) target = $region33
    $region32: #{_lambda_.9} parent=1 // pred_region
      %72 = dma.done [#allocation5], 256
    $region33: #{_lambda_.9} parent=1 // pred_fallthru
      _
    // Predicated region
    $region34: #{_lambda_.9} parent=1 // pred_check
      _
    $region35: #{_lambda_.9} parent=1 // pred_check_branch
      %74 = sbr.rel (0) target = $region37
    $region36: #{_lambda_.9} parent=1 // pred_region
      %76 = dma.done [#allocation8], 16
    $region37: #{_lambda_.9} parent=1 // pred_fallthru
      _
    %v78 = vld [vmem:[%s0] sm:$0xff]
    %v79 = vld [vmem:[%s0 + $0x8] sm:$0xff]
    %vm80 = vcmask 261120
    %v81 = vsel %vm80, %v78, 0.0
    %82 = vadd.xlane.f32.xlu0 %v81
    %v83 = vpop.xlane.xlu0 %82
    %v84 = vsel %vm80, %v79, 0.0
    %85 = vadd.xlane.f32.xlu0 %v84
    %v86 = vpop.xlane.xlu0 %85
    %v87 = vrcp.pop 32.0
    %v88 = vmul.f32 32.0, %v87
    %v89 = vsub.f32 1.0, %v88
    %v90 = vmul.f32 %v87, %v89
    %v91 = vadd.f32 %v87, %v90
    %vm92 = vweird.f32 %v87
    %v93 = vsel %vm92, %v87, %v91
    %v94 = vmul.f32 %v83, %v93
    %v95 = vmul.f32 %v86, %v93
    %v96 = vsub.f32 %v78, %v94
    %v97 = vsub.f32 %v79, %v95
    %v98 = vmul.f32 %v96, %v96
    %v99 = vmul.f32 %v97, %v97
    %v100 = vsel %vm80, %v98, 0.0
    %101 = vadd.xlane.f32.xlu0 %v100
    %v102 = vpop.xlane.xlu0 %101
    %v103 = vsel %vm80, %v99, 0.0
    %104 = vadd.xlane.f32.xlu0 %v103
    %v105 = vpop.xlane.xlu0 %104
    %v106 = vmul.f32 %v102, %v93
    %v107 = vmul.f32 %v105, %v93
    %v108 = vadd.f32 %v106, 1e-05
    %v109 = vadd.f32 %v107, 1e-05
    %v110 = vrsqrt.pop %v108
    %v111 = vmul.f32 %v110, %v108
    %v112 = vmul.f32 %v111, %v110
    %v113 = vmul.f32 0.5, %v112
    %v114 = vsub.f32 1.5, %v113
    %v115 = vmul.f32 %v110, %v114
    %vm116 = vweird.f32 %v108
    %vm117 = vweird.f32 %v110
    %vm118 = vmor %vm116, %vm117
    %v119 = vsel %vm118, %v110, %v115
    %v120 = vrsqrt.pop %v109
    %v121 = vmul.f32 %v120, %v109
    %v122 = vmul.f32 %v121, %v120
    %v123 = vmul.f32 0.5, %v122
    %v124 = vsub.f32 1.5, %v123
    %v125 = vmul.f32 %v120, %v124
    %vm126 = vweird.f32 %v109
    %vm127 = vweird.f32 %v120
    %vm128 = vmor %vm126, %vm127
    %v129 = vsel %vm128, %v120, %v125
    %v130 = vmul.f32 %v96, %v119
    %v131 = vmul.f32 %v97, %v129
    %v132 = vld [vmem:[#allocation2] sm:$0x1]
    %v134 = vperm.slane %v132, 0
    %v136 = vmul.f32 %v130, %v134
    %v137 = vmul.f32 %v131, %v134
    %v138 = vld [vmem:[#allocation4] sm:$0x1]
    %v140 = vperm.slane %v138, 0
    %v142 = vadd.f32 %v136, %v140
    %v143 = vadd.f32 %v137, %v140
    %v144 = vpack.c.bf16 %v143, %v142
    %v145 = vld [vmem:[#allocation6] sm:$0xf]
    %v146 = vld [vmem:[#allocation6 + $0x4] sm:$0xf]
    %v147 = vld [vmem:[#allocation6 + $0x8] sm:$0xf]
    %v148 = vld [vmem:[#allocation6 + $0xc] sm:$0xf]
    %v149 = vld [vmem:[#allocation7] sm:$0x1]
    %v151 = vperm.slane %v149, 0
    %v157 = vunpack.c.l.b16 %v145
    %v158 = vunpack.c.l.b16 %v146
    %v159 = vunpack.c.l.b16 %v147
    %v160 = vunpack.c.l.b16 %v148
    %v161 = vpack.c.b16 %v158, %v157
    %v162 = vpack.c.b16 %v160, %v159
    %v166 = vsel %vm80, %v144, 0
    %168 = vmatpush.bf16.msra.mxu0 0
    %169 = vmatpush.bf16.msra.mxu0 0
    %170 = vmatpush.bf16.msra.mxu0 0
    %171 = vmatpush.bf16.msra.mxu0 0
    %172 = vmatpush.bf16.msra.mxu0 0
    %173 = vmatpush.bf16.msra.mxu0 0
    %174 = vmatpush.bf16.msra.mxu0 %v162
    %175 = vmatpush.bf16.msra.mxu0 %v161
    %176 = vmatmul.bf16.gmra.mxu0 %v166
    %v177 = vpop.f32.mrf.mxu0
    %v178 = vadd.f32 %v151, %v177
    %v179 = vpop.f32.mrf.mxu0
    %v180 = vadd.f32 %v151, %v179
    %181 = vdwg.mxu0
    %v182 = vpack.c.bf16 %v178, %v178
    %v183 = vpack.c.bf16 %v180, %v180
    %vm184 = vcmask 257024
    %185 = vst.msk [vmem:[%s5] sm:$0xf] %vm184, %v182
    %186 = vst.msk [vmem:[%s5 + $0x4] sm:$0xf] %vm184, %v183
    // Predicated region
    $region38: #{_lambda_.9} parent=1 // pred_check
      _
    $region39: #{_lambda_.9} parent=1 // pred_check_branch
      %188 = sbr.rel (0) target = $region41
    $region40: #{_lambda_.9} parent=1 // pred_region
      _
    $region41: #{_lambda_.9} parent=1 // pred_fallthru
      _
    // Predicated region
    $region42: #{_lambda_.9} parent=1 // pred_check
      _
    $region43: #{_lambda_.9} parent=1 // pred_check_branch
      %190 = sbr.rel (0) target = $region45
    $region44: #{_lambda_.9} parent=1 // pred_region
      _
    $region45: #{_lambda_.9} parent=1 // pred_fallthru
      _
    %191 = vsyncpa [#allocation3], 1
    %192 = vsyncpa [#allocation5], 1
    %193 = vsyncpa [#allocation8], 1

// kernel: _lambda_.7
$region0: #{_lambda_.7}
  #allocation0 [shape = 'u32[]', space=smem, size = 0x4, offset = 0x4, fixed_abs, tag = 'smem constant byte address 0x4 - core index']
  #allocation1 [shape = 'u32[72,128]{1,0:T(1,128)}', space=vmem, size = 0x9000, scoped, tag = 'internal scratch']
  %s0 = inlined_call_operand.hbm [shape: f32[16,32], index: 0, kind: input, shape index: {}]
  %s1 = inlined_call_operand.vmem [shape: f32[1,32], index: 1, kind: input, shape index: {}]
  %s2 = inlined_call_operand.vmem [shape: f32[1,32], index: 2, kind: input, shape index: {}]
  %s3 = inlined_call_operand.vmem [shape: bf16[32,96], index: 3, kind: input, shape index: {}]
  %s4 = inlined_call_operand.hbm [shape: f32[1,96], index: 4, kind: input, shape index: {}]
  %s5 = inlined_call_operand.vmem [shape: bf16[16,32], index: 5, kind: output, shape index: {0}]
  %s6 = inlined_call_operand.vmem [shape: bf16[16,64], index: 6, kind: output, shape index: {1}]
  %7 = xla_tuple %s5, %s6
  %s8 = sld [smem:[#allocation0]]
  $region46: #{_lambda_.7} parent=0
    _
  %s10 = ssub.s32 1, %s8
  %s11 = scalar_select 0, %s10, %s8
  $region1: #{_lambda_.7} parent=0
    #allocation2 [shape = 'u8[8192]{0}', space=vmem, size = 0x2000, scoped, tag = 'input window, operand 0, single buffered']
    #allocation3 [shape = 's32[1]{0}', space=sflag, size = 0x4, scoped, tag = 'scoped memory for _lambda_.7']
    #allocation4 [shape = 'u8[512]{0}', space=vmem, size = 0x400, scoped, tag = 'input window, operand 4, single buffered']
    #allocation5 [shape = 's32[1]{0}', space=sflag, size = 0x4, scoped, tag = 'scoped memory for _lambda_.7']
    %12 = vsyncpa [#allocation3], 0
    %13 = vsyncpa [#allocation5], 0
    // Predicated region
    $region2: #{_lambda_.7} parent=1 // pred_check
      _
    $region3: #{_lambda_.7} parent=1 // pred_check_branch
      %15 = sbr.rel (0) target = $region5
    $region4: #{_lambda_.7} parent=1 // pred_region
      %17 = vsyncadd [#allocation3], 0
      %s18 = sshll.u32 %s0, 4
      %s19 = int_to_ptr.hbm [resolvable:$true] %s18
      %s20 = sshll.u32 [#allocation2], 4
      %s21 = int_to_ptr.vmem [resolvable:$true] %s20
      %26 = dma.hbm_to_vmem [thread:$0]  %s19, 256, %s21, [#allocation3], 128, 128, 8
    $region5: #{_lambda_.7} parent=1 // pred_fallthru
      _
    // Predicated region
    $region6: #{_lambda_.7} parent=1 // pred_check
      _
    $region7: #{_lambda_.7} parent=1 // pred_check_branch
      %28 = sbr.rel (0) target = $region9
    $region8: #{_lambda_.7} parent=1 // pred_region
      _
    $region9: #{_lambda_.7} parent=1 // pred_fallthru
      _
    // Predicated region
    $region10: #{_lambda_.7} parent=1 // pred_check
      _
    $region11: #{_lambda_.7} parent=1 // pred_check_branch
      %30 = sbr.rel (0) target = $region13
    $region12: #{_lambda_.7} parent=1 // pred_region
      _
    $region13: #{_lambda_.7} parent=1 // pred_fallthru
      _
    // Predicated region
    $region14: #{_lambda_.7} parent=1 // pred_check
      _
    $region15: #{_lambda_.7} parent=1 // pred_check_branch
      %32 = sbr.rel (0) target = $region17
    $region16: #{_lambda_.7} parent=1 // pred_region
      _
    $region17: #{_lambda_.7} parent=1 // pred_fallthru
      _
    // Predicated region
    $region18: #{_lambda_.7} parent=1 // pred_check
      _
    $region19: #{_lambda_.7} parent=1 // pred_check_branch
      %34 = sbr.rel (0) target = $region21
    $region20: #{_lambda_.7} parent=1 // pred_region
      %36 = vsyncadd [#allocation5], 0
      %s38 = sshll.u32 %s4, 4
      %s39 = int_to_ptr.hbm [resolvable:$true] %s38
      %s40 = sshll.u32 [#allocation4], 4
      %s41 = int_to_ptr.vmem [resolvable:$true] %s40
      %43 = dma.hbm_to_vmem [thread:$0]  %s39, 16, %s41, [#allocation5]
    $region21: #{_lambda_.7} parent=1 // pred_fallthru
      _
    // Predicated region
    $region22: #{_lambda_.7} parent=1 // pred_check
      _
    $region23: #{_lambda_.7} parent=1 // pred_check_branch
      %45 = sbr.rel (0) target = $region25
    $region24: #{_lambda_.7} parent=1 // pred_region
      %47 = dma.done [#allocation3], 256
    $region25: #{_lambda_.7} parent=1 // pred_fallthru
      _
    // Predicated region
    $region26: #{_lambda_.7} parent=1 // pred_check
      _
    $region27: #{_lambda_.7} parent=1 // pred_check_branch
      %49 = sbr.rel (0) target = $region29
    $region28: #{_lambda_.7} parent=1 // pred_region
      %51 = dma.done [#allocation5], 16
    $region29: #{_lambda_.7} parent=1 // pred_fallthru
      _
    %v53 = vld [vmem:[#allocation2] sm:$0xff]
    %v54 = vld [vmem:[#allocation2 + $0x8] sm:$0xff]
    %vm55 = vcmask 261120
    %v56 = vsel %vm55, %v53, 0.0
    %57 = vadd.xlane.f32.xlu0 %v56
    %v58 = vpop.xlane.xlu0 %57
    %v59 = vsel %vm55, %v54, 0.0
    %60 = vadd.xlane.f32.xlu0 %v59
    %v61 = vpop.xlane.xlu0 %60
    %v62 = vrcp.pop 32.0
    %v63 = vmul.f32 32.0, %v62
    %v64 = vsub.f32 1.0, %v63
    %v65 = vmul.f32 %v62, %v64
    %v66 = vadd.f32 %v62, %v65
    %vm67 = vweird.f32 %v62
    %v68 = vsel %vm67, %v62, %v66
    %v69 = vmul.f32 %v58, %v68
    %v70 = vmul.f32 %v61, %v68
    %v71 = vsub.f32 %v53, %v69
    %v72 = vsub.f32 %v54, %v70
    %v73 = vmul.f32 %v71, %v71
    %v74 = vmul.f32 %v72, %v72
    %v75 = vsel %vm55, %v73, 0.0
    %76 = vadd.xlane.f32.xlu0 %v75
    %v77 = vpop.xlane.xlu0 %76
    %v78 = vsel %vm55, %v74, 0.0
    %79 = vadd.xlane.f32.xlu0 %v78
    %v80 = vpop.xlane.xlu0 %79
    %v81 = vmul.f32 %v77, %v68
    %v82 = vmul.f32 %v80, %v68
    %v83 = vadd.f32 %v81, 1e-05
    %v84 = vadd.f32 %v82, 1e-05
    %v85 = vrsqrt.pop %v83
    %v86 = vmul.f32 %v85, %v83
    %v87 = vmul.f32 %v86, %v85
    %v88 = vmul.f32 0.5, %v87
    %v89 = vsub.f32 1.5, %v88
    %v90 = vmul.f32 %v85, %v89
    %vm91 = vweird.f32 %v83
    %vm92 = vweird.f32 %v85
    %vm93 = vmor %vm91, %vm92
    %v94 = vsel %vm93, %v85, %v90
    %v95 = vrsqrt.pop %v84
    %v96 = vmul.f32 %v95, %v84
    %v97 = vmul.f32 %v96, %v95
    %v98 = vmul.f32 0.5, %v97
    %v99 = vsub.f32 1.5, %v98
    %v100 = vmul.f32 %v95, %v99
    %vm101 = vweird.f32 %v84
    %vm102 = vweird.f32 %v95
    %vm103 = vmor %vm101, %vm102
    %v104 = vsel %vm103, %v95, %v100
    %v105 = vmul.f32 %v71, %v94
    %v106 = vmul.f32 %v72, %v104
    %v107 = vld [vmem:[%s1] sm:$0x1]
    %v109 = vperm.slane %v107, 0
    %v111 = vmul.f32 %v105, %v109
    %v112 = vmul.f32 %v106, %v109
    %v113 = vld [vmem:[%s2] sm:$0x1]
    %v115 = vperm.slane %v113, 0
    %v117 = vadd.f32 %v111, %v115
    %v118 = vadd.f32 %v112, %v115
    %v119 = vpack.c.bf16 %v118, %v117
    %v120 = vld [vmem:[%s3] sm:$0xf]
    %v121 = vld [vmem:[%s3 + $0x4] sm:$0xf]
    %v122 = vld [vmem:[%s3 + $0x8] sm:$0xf]
    %v123 = vld [vmem:[%s3 + $0xc] sm:$0xf]
    %v124 = vld [vmem:[#allocation4] sm:$0x1]
    %v126 = vperm.slane %v124, 0
    %v132 = vunpack.c.l.b16 %v120
    %v133 = vunpack.c.l.b16 %v121
    %v134 = vunpack.c.l.b16 %v122
    %v135 = vunpack.c.l.b16 %v123
    %v136 = vpack.c.b16 %v133, %v132
    %v137 = vpack.c.b16 %v135, %v134
    %v141 = vsel %vm55, %v119, 0
    %143 = vmatpush.bf16.msra.mxu0 0
    %144 = vmatpush.bf16.msra.mxu0 0
    %145 = vmatpush.bf16.msra.mxu0 0
    %146 = vmatpush.bf16.msra.mxu0 0
    %147 = vmatpush.bf16.msra.mxu0 0
    %148 = vmatpush.bf16.msra.mxu0 0
    %149 = vmatpush.bf16.msra.mxu0 %v137
    %150 = vmatpush.bf16.msra.mxu0 %v136
    %151 = vmatmul.bf16.gmra.mxu0 %v141
    %v152 = vpop.f32.mrf.mxu0
    %v153 = vadd.f32 %v126, %v152
    %v154 = vpop.f32.mrf.mxu0
    %v155 = vadd.f32 %v126, %v154
    %156 = vdwg.mxu0
    %v157 = vpack.c.bf16 %v153, %v153
    %v158 = vpack.c.bf16 %v155, %v155
    %vm159 = vcmask 257024
    %160 = vst.msk [vmem:[%s5] sm:$0xf] %vm159, %v157
    %161 = vst.msk [vmem:[%s5 + $0x4] sm:$0xf] %vm159, %v158
    %164 = vrot.lane.b32.xlu0 %v157, 96
    %v165 = vpop.permute.xlu0 %164
    %166 = vrot.lane.b32.xlu0 %v158, 96
    %v167 = vpop.permute.xlu0 %166
    %vm170 = vcmask 519168
    %171 = vst.msk [vmem:[%s6] sm:$0xf] %vm170, %v165
    %172 = vst.msk [vmem:[%s6 + $0x4] sm:$0xf] %vm170, %v167
    // Predicated region
    $region30: #{_lambda_.7} parent=1 // pred_check
      _
    $region31: #{_lambda_.7} parent=1 // pred_check_branch
      %174 = sbr.rel (0) target = $region33
    $region32: #{_lambda_.7} parent=1 // pred_region
      _
    $region33: #{_lambda_.7} parent=1 // pred_fallthru
      _
    // Predicated region
    $region34: #{_lambda_.7} parent=1 // pred_check
      _
    $region35: #{_lambda_.7} parent=1 // pred_check_branch
      %176 = sbr.rel (0) target = $region37
    $region36: #{_lambda_.7} parent=1 // pred_region
      _
    $region37: #{_lambda_.7} parent=1 // pred_fallthru
      _
    // Predicated region
    $region38: #{_lambda_.7} parent=1 // pred_check
      _
    $region39: #{_lambda_.7} parent=1 // pred_check_branch
      %178 = sbr.rel (0) target = $region41
    $region40: #{_lambda_.7} parent=1 // pred_region
      _
    $region41: #{_lambda_.7} parent=1 // pred_fallthru
      _
    // Predicated region
    $region42: #{_lambda_.7} parent=1 // pred_check
      _
    $region43: #{_lambda_.7} parent=1 // pred_check_branch
      %180 = sbr.rel (0) target = $region45
    $region44: #{_lambda_.7} parent=1 // pred_region
      _
    $region45: #{_lambda_.7} parent=1 // pred_fallthru
      _
    %181 = vsyncpa [#allocation3], 1
    %182 = vsyncpa [#allocation5], 1

// kernel: _lambda_.8
$region0: #{_lambda_.8}
  #allocation0 [shape = 'u32[]', space=smem, size = 0x4, offset = 0x4, fixed_abs, tag = 'smem constant byte address 0x4 - core index']
  #allocation1 [shape = 'u32[72,128]{1,0:T(1,128)}', space=vmem, size = 0x9000, scoped, tag = 'internal scratch']
  #allocation2 [shape = 'f32[8,32]{1,0:T(8,128)}', space=vmem, size = 0x1000, scoped, tag = 'scratch operand']
  %s0 = inlined_call_operand.vmem [shape: bf16[2,8,32], index: 0, kind: input, shape index: {}]
  %s1 = inlined_call_operand.vmem [shape: bf16[2,8,64], index: 1, kind: input, shape index: {}]
  %s2 = inlined_call_operand.hbm [shape: bf16[32,32], index: 2, kind: input, shape index: {}]
  %s3 = inlined_call_operand.hbm [shape: f32[1,32], index: 3, kind: input, shape index: {}]
  %s4 = inlined_call_operand.hbm [shape: f32[2,8,32], index: 4, kind: input, shape index: {}]
  %s5 = inlined_call_operand.vmem [shape: f32[2,8,32], index: 5, kind: output, shape index: {}]
  %s6 = sld [smem:[#allocation0]]
  $region65: #{_lambda_.8} parent=0
    _
  %s8 = ssub.s32 1, %s6
  %s9 = scalar_select 0, %s8, %s6
  $region1: #{_lambda_.8} parent=0
    #allocation3 [shape = 'u8[8192]{0}', space=vmem, size = 0x2000, scoped, tag = 'input window, operand 2, single buffered']
    #allocation4 [shape = 's32[2]{0}', space=sflag, size = 0x8, scoped, tag = 'scoped memory for _lambda_.8']
    #allocation5 [shape = 'u8[512]{0}', space=vmem, size = 0x400, scoped, tag = 'input window, operand 3, single buffered']
    #allocation6 [shape = 's32[1]{0}', space=sflag, size = 0x4, scoped, tag = 'scoped memory for _lambda_.8']
    #allocation7 [shape = 'u8[8192]{0}', space=vmem, size = 0x2000, scoped, tag = 'input window, operand 4']
    %10 = vsyncpa [#allocation4], 0
    %11 = vsyncpa [#allocation6], 0
    loop: start=0, step=1, limit=4
    $region2: #{_lambda_.8} parent=1 // loop_pre_header
      _
    $region3: #{_lambda_.8} parent=1 // loop_header
      %s13 = sphi 0, %s17
      %p14 = scmp.ge.s32.totalorder %s13, 4
      %s20 = sphi 0, %s32
      %s21 = sphi 0, %s28
      %s22 = sphi 0, %s20
      %s23 = sphi 0, %s21
      %s24 = sphi 0, %s22
      %s25 = sphi 0, %s23
      %s37 = sphi 0, %s39
      %s40 = sphi 0, %s37
      %s41 = sphi 0, %s40
      %s57 = sphi 0, %s41
      %s63 = sphi 0, %s65
      %s66 = sphi 0, %s63
      %s67 = sphi 0, %s66
      %s83 = sphi 0, %s67
      %s87 = sphi 0, %s87
      %s89 = sphi 0, %s87
      %s90 = sphi 0, %s89
      %s104 = sphi 0, %s90
      %s108 = sphi 0, %s108
      %s110 = sphi 0, %s108
      %s111 = sphi 0, %s110
      %s125 = sphi 0, %s111
      %s133 = sphi 0, %s135
      %s136 = sphi 0, %s133
      %s137 = sphi 0, %s136
      %s153 = sphi 0, %s137
      %s161 = sphi 0, %s163
      %s164 = sphi 0, %s161
      %s165 = sphi 0, %s164
      %s181 = sphi 0, %s165
    $region4: #{_lambda_.8} parent=1 // loop_header_branch
      %16 = sbr.rel (%p14) target = $region8
    $region5: #{_lambda_.8} parent=1 // loop_body
      %s18 = ssub.s32 %s13, 1
      %s19 = ssub.s32 %s13, 2
      %s26 = sadd.s32 1, %s21
      %p27 = scmp.ge.s32.totalorder %s26, 1
      %s28 = scalar_select %p27, 0, %s26
      %s29 = sadd.s32 1, %s20
      %s30 = scalar_select %p27, %s29, %s20
      %p31 = scmp.ge.s32.totalorder %s30, 2
      %s32 = scalar_select %p31, 0, %s30
      %s33 = ssub.s32 %s20, %s32
      %s34 = ssub.s32 %s21, %s28
      %s35 = sor.u32 %s33, %s34
      %p36 = scmp.eq.s32.totalorder %s35, 0
      %s38 = sadd.s32 %s37, 1
      %s39 = scalar_select %p36, %s37, %s38
      %p42 = pneg %p36
      %p43 = scmp.eq.s32.totalorder %s13, 1
      %p44 = por %p42, %p43
      %p45 = scmp.ne.s32.totalorder %s37, %s40
      %p46 = scmp.eq.s32.totalorder %s13, 0
      %p47 = por %p45, %p46
      %p48 = scmp.ne.s32.totalorder %s37, %s40
      %p49 = scmp.eq.s32.totalorder %s18, 1
      %p50 = por %p48, %p49
      %p51 = scmp.ne.s32.totalorder %s40, %s41
      %p52 = scmp.eq.s32.totalorder %s18, 0
      %p53 = por %p51, %p52
      %p54 = scmp.ne.s32.totalorder %s40, %s41
      %p55 = scmp.eq.s32.totalorder %s19, 1
      %p56 = por %p54, %p55
      %p58 = scmp.ne.s32.totalorder %s41, %s57
      %p59 = scmp.eq.s32.totalorder %s19, 0
      %p60 = por %p58, %p59
      %s61 = ssub.s32 %s20, %s32
      %p62 = scmp.eq.s32.totalorder %s61, 0
      %s64 = sadd.s32 %s63, 1
      %s65 = scalar_select %p62, %s63, %s64
      %p68 = pneg %p62
      %p69 = scmp.eq.s32.totalorder %s13, 1
      %p70 = por %p68, %p69
      %p71 = scmp.ne.s32.totalorder %s63, %s66
      %p72 = scmp.eq.s32.totalorder %s13, 0
      %p73 = por %p71, %p72
      %p74 = scmp.ne.s32.totalorder %s63, %s66
      %p75 = scmp.eq.s32.totalorder %s18, 1
      %p76 = por %p74, %p75
      %p77 = scmp.ne.s32.totalorder %s66, %s67
      %p78 = scmp.eq.s32.totalorder %s18, 0
      %p79 = por %p77, %p78
      %p80 = scmp.ne.s32.totalorder %s66, %s67
      %p81 = scmp.eq.s32.totalorder %s19, 1
      %p82 = por %p80, %p81
      %p84 = scmp.ne.s32.totalorder %s67, %s83
      %p85 = scmp.eq.s32.totalorder %s19, 0
      %p86 = por %p84, %p85
      %s88 = sadd.s32 %s87, 1
      %p91 = scmp.eq.s32.totalorder %s13, 1
      %p92 = scmp.ne.s32.totalorder %s87, %s89
      %p93 = scmp.eq.s32.totalorder %s13, 0
      %p94 = por %p92, %p93
      %p95 = scmp.ne.s32.totalorder %s87, %s89
      %p96 = scmp.eq.s32.totalorder %s18, 1
      %p97 = por %p95, %p96
      %p98 = scmp.ne.s32.totalorder %s89, %s90
      %p99 = scmp.eq.s32.totalorder %s18, 0
      %p100 = por %p98, %p99
      %p101 = scmp.ne.s32.totalorder %s89, %s90
      %p102 = scmp.eq.s32.totalorder %s19, 1
      %p103 = por %p101, %p102
      %p105 = scmp.ne.s32.totalorder %s90, %s104
      %p106 = scmp.eq.s32.totalorder %s19, 0
      %p107 = por %p105, %p106
      %s109 = sadd.s32 %s108, 1
      %p112 = scmp.eq.s32.totalorder %s13, 1
      %p113 = scmp.ne.s32.totalorder %s108, %s110
      %p114 = scmp.eq.s32.totalorder %s13, 0
      %p115 = por %p113, %p114
      %p116 = scmp.ne.s32.totalorder %s108, %s110
      %p117 = scmp.eq.s32.totalorder %s18, 1
      %p118 = por %p116, %p117
      %p119 = scmp.ne.s32.totalorder %s110, %s111
      %p120 = scmp.eq.s32.totalorder %s18, 0
      %p121 = por %p119, %p120
      %p122 = scmp.ne.s32.totalorder %s110, %s111
      %p123 = scmp.eq.s32.totalorder %s19, 1
      %p124 = por %p122, %p123
      %p126 = scmp.ne.s32.totalorder %s111, %s125
      %p127 = scmp.eq.s32.totalorder %s19, 0
      %p128 = por %p126, %p127
      %s129 = ssub.s32 %s20, %s32
      %s130 = ssub.s32 %s21, %s28
      %s131 = sor.u32 %s129, %s130
      %p132 = scmp.eq.s32.totalorder %s131, 0
      %s134 = sadd.s32 %s133, 1
      %s135 = scalar_select %p132, %s133, %s134
      %p138 = pneg %p132
      %p139 = scmp.eq.s32.totalorder %s13, 1
      %p140 = por %p138, %p139
      %p141 = scmp.ne.s32.totalorder %s133, %s136
      %p142 = scmp.eq.s32.totalorder %s13, 0
      %p143 = por %p141, %p142
      %p144 = scmp.ne.s32.totalorder %s133, %s136
      %p145 = scmp.eq.s32.totalorder %s18, 1
      %p146 = por %p144, %p145
      %p147 = scmp.ne.s32.totalorder %s136, %s137
      %p148 = scmp.eq.s32.totalorder %s18, 0
      %p149 = por %p147, %p148
      %p150 = scmp.ne.s32.totalorder %s136, %s137
      %p151 = scmp.eq.s32.totalorder %s19, 1
      %p152 = por %p150, %p151
      %p154 = scmp.ne.s32.totalorder %s137, %s153
      %p155 = scmp.eq.s32.totalorder %s19, 0
      %p156 = por %p154, %p155
      %s157 = ssub.s32 %s20, %s32
      %s158 = ssub.s32 %s21, %s28
      %s159 = sor.u32 %s157, %s158
      %p160 = scmp.eq.s32.totalorder %s159, 0
      %s162 = sadd.s32 %s161, 1
      %s163 = scalar_select %p160, %s161, %s162
      %p166 = pneg %p160
      %p167 = scmp.eq.s32.totalorder %s13, 1
      %p168 = por %p166, %p167
      %p169 = scmp.ne.s32.totalorder %s161, %s164
      %p170 = scmp.eq.s32.totalorder %s13, 0
      %p171 = por %p169, %p170
      %p172 = scmp.ne.s32.totalorder %s161, %s164
      %p173 = scmp.eq.s32.totalorder %s18, 1
      %p174 = por %p172, %p173
      %p175 = scmp.ne.s32.totalorder %s164, %s165
      %p176 = scmp.eq.s32.totalorder %s18, 0
      %p177 = por %p175, %p176
      %p178 = scmp.ne.s32.totalorder %s164, %s165
      %p179 = scmp.eq.s32.totalorder %s19, 1
      %p180 = por %p178, %p179
      %p182 = scmp.ne.s32.totalorder %s165, %s181
      %p183 = scmp.eq.s32.totalorder %s19, 0
      %p184 = por %p182, %p183
      %p185 = scmp.le.s32.totalorder 1, %s13
      %p186 = scmp.lt.s32.totalorder %s13, 3
      %p187 = pnand %p185, %p186
      %p188 = pneg %p187
      // Predicated region
      $region9: #{_lambda_.8} parent=5 // pred_check
        _
      $region10: #{_lambda_.8} parent=5 // pred_check_branch
        %190 = sbr.rel (%p187) target = $region12
      $region11: #{_lambda_.8} parent=5 // pred_region
        %s191 = ssub.s32 %s13, 1
        // Predicated region
        $region13: #{_lambda_.8} parent=11 // pred_check
          %p192 = pneg %p100
        $region14: #{_lambda_.8} parent=11 // pred_check_branch
          %194 = sbr.rel (%p192) target = $region16
        $region15: #{_lambda_.8} parent=11 // pred_region
          %196 = vsyncadd [#allocation4], 0
          %s197 = sshll.u32 %s2, 4
          %s198 = int_to_ptr.hbm [resolvable:$true] %s197
          %s199 = sshll.u32 [#allocation3], 4
          %s200 = int_to_ptr.vmem [resolvable:$true] %s199
          %205 = dma.hbm_to_vmem [thread:$0]  %s198, 256, %s200, [#allocation4], 64, 64, 4
        $region16: #{_lambda_.8} parent=11 // pred_fallthru
          _
        // Predicated region
        $region17: #{_lambda_.8} parent=11 // pred_check
          %p206 = pneg %p121
        $region18: #{_lambda_.8} parent=11 // pred_check_branch
          %208 = sbr.rel (%p206) target = $region20
        $region19: #{_lambda_.8} parent=11 // pred_region
          %210 = vsyncadd [#allocation6], 0
          %s212 = sshll.u32 %s3, 4
          %s213 = int_to_ptr.hbm [resolvable:$true] %s212
          %s214 = sshll.u32 [#allocation5], 4
          %s215 = int_to_ptr.vmem [resolvable:$true] %s214
          %217 = dma.hbm_to_vmem [thread:$0]  %s213, 16, %s215, [#allocation6]
        $region20: #{_lambda_.8} parent=11 // pred_fallthru
          _
      $region12: #{_lambda_.8} parent=5 // pred_fallthru
        _
      %p218 = scmp.lt.s32.totalorder %s13, 2
      // Predicated region
      $region21: #{_lambda_.8} parent=5 // pred_check
        %p219 = pneg %p218
      $region22: #{_lambda_.8} parent=5 // pred_check_branch
        %221 = sbr.rel (%p219) target = $region24
      $region23: #{_lambda_.8} parent=5 // pred_region
        // Predicated region
        $region25: #{_lambda_.8} parent=23 // pred_check
          %p222 = pneg %p47
        $region26: #{_lambda_.8} parent=23 // pred_check_branch
          %224 = sbr.rel (%p222) target = $region28
        $region27: #{_lambda_.8} parent=23 // pred_region
          %p225 = scmp.lt.s32.totalorder %s20, 1
          %s226 = scalar_select %p225, %s20, 1
          %p227 = scmp.lt.s32.totalorder %s21, 0
          %s228 = scalar_select %p227, %s21, 0
          %s229 = sadd.s32 %s228, %s226
          %s230 = smul.addr %s229, 4
          %s231 = scalar_lea.vmem %s0, %s230
        $region28: #{_lambda_.8} parent=23 // pred_fallthru
          _
        // Predicated region
        $region29: #{_lambda_.8} parent=23 // pred_check
          %p232 = pneg %p73
        $region30: #{_lambda_.8} parent=23 // pred_check_branch
          %234 = sbr.rel (%p232) target = $region32
        $region31: #{_lambda_.8} parent=23 // pred_region
          %p235 = scmp.lt.s32.totalorder %s20, 1
          %s236 = scalar_select %p235, %s20, 1
          %s237 = smul.addr %s236, 4
          %s238 = scalar_lea.vmem %s1, %s237
        $region32: #{_lambda_.8} parent=23 // pred_fallthru
          _
        // Predicated region
        $region33: #{_lambda_.8} parent=23 // pred_check
          %p239 = pneg %p143
        $region34: #{_lambda_.8} parent=23 // pred_check_branch
          %241 = sbr.rel (%p239) target = $region36
        $region35: #{_lambda_.8} parent=23 // pred_region
          %s242 = sand.u32 %s13, 1
          %s243 = scalar_lea.sflag [#allocation4], %s242
          %s244 = sand.u32 %s133, 1
          %s245 = smul.addr %s244, 8
          %s246 = scalar_lea.vmem [#allocation7], %s245
          %248 = vsyncadd %s243, 0
          %s249 = sadd.s32 %s21, %s20
          %s250 = smul.addr %s249, 8
          %s251 = scalar_lea.hbm %s4, %s250
          %s253 = sshll.u32 %s251, 4
          %s254 = int_to_ptr.hbm [resolvable:$true] %s253
          %s255 = sshll.u32 %s246, 4
          %s256 = int_to_ptr.vmem [resolvable:$true] %s255
          %258 = dma.hbm_to_vmem [thread:$0]  %s254, 128, %s256, %s243
        $region36: #{_lambda_.8} parent=23 // pred_fallthru
          _
      $region24: #{_lambda_.8} parent=5 // pred_fallthru
        _
      %p259 = scmp.le.s32.totalorder 1, %s13
      %p260 = scmp.lt.s32.totalorder %s13, 3
      %p261 = pnand %p259, %p260
      %p262 = pneg %p261
      // Predicated region
      $region37: #{_lambda_.8} parent=5 // pred_check
        _
      $region38: #{_lambda_.8} parent=5 // pred_check_branch
        %264 = sbr.rel (%p261) target = $region40
      $region39: #{_lambda_.8} parent=5 // pred_region
        %s265 = ssub.s32 %s13, 1
        // Predicated region
        $region41: #{_lambda_.8} parent=39 // pred_check
          %p266 = pneg %p100
        $region42: #{_lambda_.8} parent=39 // pred_check_branch
          %268 = sbr.rel (%p266) target = $region44
        $region43: #{_lambda_.8} parent=39 // pred_region
          %270 = dma.done [#allocation4], 256
        $region44: #{_lambda_.8} parent=39 // pred_fallthru
          _
        // Predicated region
        $region45: #{_lambda_.8} parent=39 // pred_check
          %p271 = pneg %p121
        $region46: #{_lambda_.8} parent=39 // pred_check_branch
          %273 = sbr.rel (%p271) target = $region48
        $region47: #{_lambda_.8} parent=39 // pred_region
          %275 = dma.done [#allocation6], 16
        $region48: #{_lambda_.8} parent=39 // pred_fallthru
          _
        %s276 = sand.u32 %s18, 1
        %s277 = scalar_lea.sflag [#allocation4], %s276
        %s278 = sand.u32 %s136, 1
        %s279 = smul.addr %s278, 8
        %s280 = scalar_lea.vmem [#allocation7], %s279
        // Predicated region
        $region49: #{_lambda_.8} parent=39 // pred_check
          %p281 = pneg %p149
        $region50: #{_lambda_.8} parent=39 // pred_check_branch
          %283 = sbr.rel (%p281) target = $region52
        $region51: #{_lambda_.8} parent=39 // pred_region
          %285 = dma.done %s277, 128
        $region52: #{_lambda_.8} parent=39 // pred_fallthru
          _
        %p286 = scmp.lt.s32.totalorder %s22, 1
        %s287 = scalar_select %p286, %s22, 1
        %p288 = scmp.lt.s32.totalorder %s23, 0
        %s289 = scalar_select %p288, %s23, 0
        %s290 = sadd.s32 %s289, %s287
        %s291 = smul.addr %s290, 4
        %s292 = scalar_lea.vmem %s0, %s291
        %p293 = pneg %p53
        %p294 = pneg %p50
        %p295 = scmp.lt.s32.totalorder %s22, 1
        %s296 = scalar_select %p295, %s22, 1
        %s297 = smul.addr %s296, 4
        %s298 = scalar_lea.vmem %s1, %s297
        %p299 = pneg %p79
        %p300 = pneg %p76
        %p301 = pneg %p100
        %p302 = pneg %p97
        %p303 = pneg %p121
        %p304 = pneg %p118
        %s305 = sand.u32 %s18, 1
        %s306 = scalar_lea.sflag [#allocation4], %s305
        %s307 = sand.u32 %s136, 1
        %s308 = smul.addr %s307, 8
        %s309 = scalar_lea.vmem [#allocation7], %s308
        %p310 = pneg %p149
        %p311 = pneg %p146
        %p312 = pneg %p177
        %p313 = pneg %p174
        %p314 = scmp.lt.s32.totalorder %s22, 1
        %s315 = scalar_select %p314, %s22, 1
        %p316 = scmp.lt.s32.totalorder %s23, 0
        %s317 = scalar_select %p316, %s23, 0
        %s318 = sadd.s32 %s317, %s315
        %s319 = smul.addr %s318, 8
        %s320 = scalar_lea.vmem %s5, %s319
        %p321 = scmp.lt.s32.totalorder %s22, 1
        %s322 = scalar_select %p321, %s22, 1
        %p323 = scmp.lt.s32.totalorder %s23, 0
        %s324 = scalar_select %p323, %s23, 0
        %s325 = sadd.s32 %s324, %s322
        %s326 = smul.addr %s325, 4
        %s327 = scalar_lea.vmem %s0, %s326
        %p328 = scmp.lt.s32.totalorder %s22, 1
        %s329 = scalar_select %p328, %s22, 1
        %s330 = smul.addr %s329, 4
        %s331 = scalar_lea.vmem %s1, %s330
        %p332 = scmp.lt.s32.totalorder %s22, 1
        %s333 = scalar_select %p332, %s22, 1
        %p334 = scmp.lt.s32.totalorder %s23, 0
        %s335 = scalar_select %p334, %s23, 0
        %s336 = sadd.s32 %s335, %s333
        %s337 = smul.addr %s336, 8
        %s338 = scalar_lea.vmem %s5, %s337
        %v340 = vld [vmem:[%s327] sm:$0xf]
        %v341 = vld [vmem:[%s331] sm:$0xf]
        %vm342 = vcmask 64512
        %v344 = vsel %vm342, %v340, 0
        %v347 = vsel %vm342, %v341, 0
        %349 = vmatpush.bf16.xpose.msra.mxu0 0
        %350 = vmatpush.bf16.xpose.msra.mxu0 0
        %351 = vmatpush.bf16.xpose.msra.mxu0 0
        %352 = vmatpush.bf16.xpose.msra.mxu0 0
        %353 = vmatpush.bf16.xpose.msra.mxu0 0
        %354 = vmatpush.bf16.xpose.msra.mxu0 0
        %355 = vmatpush.bf16.xpose.msra.mxu0 0
        %356 = vmatpush.bf16.xpose.msra.mxu0 %v347
        %357 = vmatmul.bf16.gmra.mxu0 %v344
        %v358 = vpop.f32.mrf.mxu0
        %v359 = vadd.f32 0.0, %v358
        %v360 = vpop.f32.mrf.mxu0
        %361 = vdwg.mxu0
        %v362 = vsel %vm342, %v359, -inf
        %363 = vmax.xlane.f32.xlu0 %v362
        %v364 = vpop.xlane.xlu0 %363
        %v365 = vsub.f32 %v359, %v364
        %v366 = vmul.f32 %v365, 1.442695
        %v367 = vpow.pop %v366
        %v368 = vsel %vm342, %v367, 0.0
        %369 = vadd.xlane.f32.xlu0 %v368
        %v370 = vpop.xlane.xlu0 %369
        %v371 = vrcp.pop %v370
        %v372 = vmul.f32 %v370, %v371
        %v373 = vsub.f32 1.0, %v372
        %v374 = vmul.f32 %v371, %v373
        %v375 = vadd.f32 %v371, %v374
        %vm376 = vweird.f32 %v370
        %vm377 = vweird.f32 %v371
        %vm378 = vmor %vm376, %vm377
        %v379 = vsel %vm378, %v371, %v375
        %v380 = vand.u32 2147483647, %v370
        %vm381 = vcmp.eq.f32.partialorder %v380, 8.507059e+37
        %v382 = vand.u32 %v370, 2147483648
        %v383 = vor.u32 1.1754944e-38, %v382
        %v384 = vsel %vm381, %v383, %v379
        %v385 = vmul.f32 1.0, %v384
        %v386 = vmul.f32 %v367, %v385
        %v387 = vpack.c.bf16 %v386, %v386
        %v389 = vunpack.c.l.b16 %v341
        %v390 = vpack.c.b16 %v389, %v389
        %391 = vrot.lane.b32.xlu0 %v390, 96
        %v392 = vpop.permute.xlu0 %391
        %v394 = vsel %vm342, %v387, 0
        %vm396 = vcmask 1043456
        %v398 = vsel %vm396, %v392, 0
        %400 = vmatpush.bf16.msra.mxu0 0
        %401 = vmatpush.bf16.msra.mxu0 0
        %402 = vmatpush.bf16.msra.mxu0 0
        %403 = vmatpush.bf16.msra.mxu0 0
        %404 = vmatpush.bf16.msra.mxu0 0
        %405 = vmatpush.bf16.msra.mxu0 0
        %406 = vmatpush.bf16.msra.mxu0 0
        %407 = vmatpush.bf16.msra.mxu0 %v398
        %408 = vmatmul.bf16.gmra.mxu0 %v394
        %v409 = vpop.f32.mrf.mxu0
        %v410 = vadd.f32 0.0, %v409
        %v411 = vpop.f32.mrf.mxu0
        %412 = vdwg.mxu0
        %413 = vst.msk [vmem:[#allocation2] sm:$0xff] %vm342, %v410
        %v415 = vunpack.c.l.b16 %v340
        %v416 = vpack.c.b16 %v415, %v415
        %417 = vrot.lane.b32.xlu0 %v416, 120
        %v418 = vpop.permute.xlu0 %417
        %419 = vrot.lane.b32.xlu0 %v390, 120
        %v420 = vpop.permute.xlu0 %419
        %v422 = vsel %vm342, %v418, 0
        %v425 = vsel %vm342, %v420, 0
        %427 = vmatpush.bf16.xpose.msra.mxu0 0
        %428 = vmatpush.bf16.xpose.msra.mxu0 0
        %429 = vmatpush.bf16.xpose.msra.mxu0 0
        %430 = vmatpush.bf16.xpose.msra.mxu0 0
        %431 = vmatpush.bf16.xpose.msra.mxu0 0
        %432 = vmatpush.bf16.xpose.msra.mxu0 0
        %433 = vmatpush.bf16.xpose.msra.mxu0 0
        %434 = vmatpush.bf16.xpose.msra.mxu0 %v425
        %435 = vmatmul.bf16.gmra.mxu0 %v422
        %v436 = vpop.f32.mrf.mxu0
        %v437 = vadd.f32 0.0, %v436
        %v438 = vpop.f32.mrf.mxu0
        %439 = vdwg.mxu0
        %v440 = vsel %vm342, %v437, -inf
        %441 = vmax.xlane.f32.xlu0 %v440
        %v442 = vpop.xlane.xlu0 %441
        %v443 = vsub.f32 %v437, %v442
        %v444 = vmul.f32 %v443, 1.442695
        %v445 = vpow.pop %v444
        %v446 = vsel %vm342, %v445, 0.0
        %447 = vadd.xlane.f32.xlu0 %v446
        %v448 = vpop.xlane.xlu0 %447
        %v449 = vrcp.pop %v448
        %v450 = vmul.f32 %v448, %v449
        %v451 = vsub.f32 1.0, %v450
        %v452 = vmul.f32 %v449, %v451
        %v453 = vadd.f32 %v449, %v452
        %vm454 = vweird.f32 %v448
        %vm455 = vweird.f32 %v449
        %vm456 = vmor %vm454, %vm455
        %v457 = vsel %vm456, %v449, %v453
        %v458 = vand.u32 2147483647, %v448
        %vm459 = vcmp.eq.f32.partialorder %v458, 8.507059e+37
        %v460 = vand.u32 %v448, 2147483648
        %v461 = vor.u32 1.1754944e-38, %v460
        %v462 = vsel %vm459, %v461, %v457
        %v463 = vmul.f32 1.0, %v462
        %v464 = vmul.f32 %v445, %v463
        %v465 = vpack.c.bf16 %v464, %v464
        %466 = vrot.lane.b32.xlu0 %v390, 88
        %v467 = vpop.permute.xlu0 %466
        %v469 = vsel %vm342, %v465, 0
        %v472 = vsel %vm396, %v467, 0
        %474 = vmatpush.bf16.msra.mxu0 0
        %475 = vmatpush.bf16.msra.mxu0 0
        %476 = vmatpush.bf16.msra.mxu0 0
        %477 = vmatpush.bf16.msra.mxu0 0
        %478 = vmatpush.bf16.msra.mxu0 0
        %479 = vmatpush.bf16.msra.mxu0 0
        %480 = vmatpush.bf16.msra.mxu0 0
        %481 = vmatpush.bf16.msra.mxu0 %v472
        %482 = vmatmul.bf16.gmra.mxu0 %v469
        %v483 = vpop.f32.mrf.mxu0
        %v484 = vadd.f32 0.0, %v483
        %v485 = vpop.f32.mrf.mxu0
        %486 = vdwg.mxu0
        %488 = vrot.lane.b32.xlu0 %v484, 8
        %v489 = vpop.permute.xlu0 %488
        %vm491 = vcmask 130112
        %492 = vst.msk [vmem:[#allocation2] sm:$0xff] %vm491, %v489
        %493 = vrot.lane.b32.xlu0 %v416, 112
        %v494 = vpop.permute.xlu0 %493
        %495 = vrot.lane.b32.xlu0 %v390, 112
        %v496 = vpop.permute.xlu0 %495
        %v498 = vsel %vm342, %v494, 0
        %v501 = vsel %vm342, %v496, 0
        %503 = vmatpush.bf16.xpose.msra.mxu0 0
        %504 = vmatpush.bf16.xpose.msra.mxu0 0
        %505 = vmatpush.bf16.xpose.msra.mxu0 0
        %506 = vmatpush.bf16.xpose.msra.mxu0 0
        %507 = vmatpush.bf16.xpose.msra.mxu0 0
        %508 = vmatpush.bf16.xpose.msra.mxu0 0
        %509 = vmatpush.bf16.xpose.msra.mxu0 0
        %510 = vmatpush.bf16.xpose.msra.mxu0 %v501
        %511 = vmatmul.bf16.gmra.mxu0 %v498
        %v512 = vpop.f32.mrf.mxu0
        %v513 = vadd.f32 0.0, %v512
        %v514 = vpop.f32.mrf.mxu0
        %515 = vdwg.mxu0
        %v516 = vsel %vm342, %v513, -inf
        %517 = vmax.xlane.f32.xlu0 %v516
        %v518 = vpop.xlane.xlu0 %517
        %v519 = vsub.f32 %v513, %v518
        %v520 = vmul.f32 %v519, 1.442695
        %v521 = vpow.pop %v520
        %v522 = vsel %vm342, %v521, 0.0
        %523 = vadd.xlane.f32.xlu0 %v522
        %v524 = vpop.xlane.xlu0 %523
        %v525 = vrcp.pop %v524
        %v526 = vmul.f32 %v524, %v525
        %v527 = vsub.f32 1.0, %v526
        %v528 = vmul.f32 %v525, %v527
        %v529 = vadd.f32 %v525, %v528
        %vm530 = vweird.f32 %v524
        %vm531 = vweird.f32 %v525
        %vm532 = vmor %vm530, %vm531
        %v533 = vsel %vm532, %v525, %v529
        %v534 = vand.u32 2147483647, %v524
        %vm535 = vcmp.eq.f32.partialorder %v534, 8.507059e+37
        %v536 = vand.u32 %v524, 2147483648
        %v537 = vor.u32 1.1754944e-38, %v536
        %v538 = vsel %vm535, %v537, %v533
        %v539 = vmul.f32 1.0, %v538
        %v540 = vmul.f32 %v521, %v539
        %v541 = vpack.c.bf16 %v540, %v540
        %542 = vrot.lane.b32.xlu0 %v390, 80
        %v543 = vpop.permute.xlu0 %542
        %v545 = vsel %vm342, %v541, 0
        %v548 = vsel %vm396, %v543, 0
        %550 = vmatpush.bf16.msra.mxu0 0
        %551 = vmatpush.bf16.msra.mxu0 0
        %552 = vmatpush.bf16.msra.mxu0 0
        %553 = vmatpush.bf16.msra.mxu0 0
        %554 = vmatpush.bf16.msra.mxu0 0
        %555 = vmatpush.bf16.msra.mxu0 0
        %556 = vmatpush.bf16.msra.mxu0 0
        %557 = vmatpush.bf16.msra.mxu0 %v548
        %558 = vmatmul.bf16.gmra.mxu0 %v545
        %v559 = vpop.f32.mrf.mxu0
        %v560 = vadd.f32 0.0, %v559
        %v561 = vpop.f32.mrf.mxu0
        %562 = vdwg.mxu0
        %564 = vrot.lane.b32.xlu0 %v560, 16
        %v565 = vpop.permute.xlu0 %564
        %vm567 = vcmask 195712
        %568 = vst.msk [vmem:[#allocation2] sm:$0xff] %vm567, %v565
        %569 = vrot.lane.b32.xlu0 %v416, 104
        %v570 = vpop.permute.xlu0 %569
        %571 = vrot.lane.b32.xlu0 %v390, 104
        %v572 = vpop.permute.xlu0 %571
        %v574 = vsel %vm342, %v570, 0
        %v577 = vsel %vm342, %v572, 0
        %579 = vmatpush.bf16.xpose.msra.mxu0 0
        %580 = vmatpush.bf16.xpose.msra.mxu0 0
        %581 = vmatpush.bf16.xpose.msra.mxu0 0
        %582 = vmatpush.bf16.xpose.msra.mxu0 0
        %583 = vmatpush.bf16.xpose.msra.mxu0 0
        %584 = vmatpush.bf16.xpose.msra.mxu0 0
        %585 = vmatpush.bf16.xpose.msra.mxu0 0
        %586 = vmatpush.bf16.xpose.msra.mxu0 %v577
        %587 = vmatmul.bf16.gmra.mxu0 %v574
        %v588 = vpop.f32.mrf.mxu0
        %v589 = vadd.f32 0.0, %v588
        %v590 = vpop.f32.mrf.mxu0
        %591 = vdwg.mxu0
        %v592 = vsel %vm342, %v589, -inf
        %593 = vmax.xlane.f32.xlu0 %v592
        %v594 = vpop.xlane.xlu0 %593
        %v595 = vsub.f32 %v589, %v594
        %v596 = vmul.f32 %v595, 1.442695
        %v597 = vpow.pop %v596
        %v598 = vsel %vm342, %v597, 0.0
        %599 = vadd.xlane.f32.xlu0 %v598
        %v600 = vpop.xlane.xlu0 %599
        %v601 = vrcp.pop %v600
        %v602 = vmul.f32 %v600, %v601
        %v603 = vsub.f32 1.0, %v602
        %v604 = vmul.f32 %v601, %v603
        %v605 = vadd.f32 %v601, %v604
        %vm606 = vweird.f32 %v600
        %vm607 = vweird.f32 %v601
        %vm608 = vmor %vm606, %vm607
        %v609 = vsel %vm608, %v601, %v605
        %v610 = vand.u32 2147483647, %v600
        %vm611 = vcmp.eq.f32.partialorder %v610, 8.507059e+37
        %v612 = vand.u32 %v600, 2147483648
        %v613 = vor.u32 1.1754944e-38, %v612
        %v614 = vsel %vm611, %v613, %v609
        %v615 = vmul.f32 1.0, %v614
        %v616 = vmul.f32 %v597, %v615
        %v617 = vpack.c.bf16 %v616, %v616
        %618 = vrot.lane.b32.xlu0 %v390, 72
        %v619 = vpop.permute.xlu0 %618
        %v621 = vsel %vm342, %v617, 0
        %v624 = vsel %vm396, %v619, 0
        %626 = vmatpush.bf16.msra.mxu0 0
        %627 = vmatpush.bf16.msra.mxu0 0
        %628 = vmatpush.bf16.msra.mxu0 0
        %629 = vmatpush.bf16.msra.mxu0 0
        %630 = vmatpush.bf16.msra.mxu0 0
        %631 = vmatpush.bf16.msra.mxu0 0
        %632 = vmatpush.bf16.msra.mxu0 0
        %633 = vmatpush.bf16.msra.mxu0 %v624
        %634 = vmatmul.bf16.gmra.mxu0 %v621
        %v635 = vpop.f32.mrf.mxu0
        %v636 = vadd.f32 0.0, %v635
        %v637 = vpop.f32.mrf.mxu0
        %638 = vdwg.mxu0
        %640 = vrot.lane.b32.xlu0 %v636, 24
        %v641 = vpop.permute.xlu0 %640
        %vm643 = vcmask 261312
        %644 = vst.msk [vmem:[#allocation2] sm:$0xff] %vm643, %v641
        %v645 = vld [vmem:[#allocation2] sm:$0xff]
        %v646 = vpack.c.bf16 %v645, %v645
        %v647 = vld [vmem:[#allocation3] sm:$0xf]
        %v648 = vld [vmem:[#allocation3 + $0x4] sm:$0xf]
        %v649 = vld [vmem:[#allocation3 + $0x8] sm:$0xf]
        %v650 = vld [vmem:[#allocation3 + $0xc] sm:$0xf]
        %v651 = vld [vmem:[#allocation5] sm:$0x1]
        %v653 = vperm.slane %v651, 0
        %v659 = vunpack.c.l.b16 %v647
        %v660 = vunpack.c.l.b16 %v648
        %v661 = vunpack.c.l.b16 %v649
        %v662 = vunpack.c.l.b16 %v650
        %v663 = vpack.c.b16 %v660, %v659
        %v664 = vpack.c.b16 %v662, %v661
        %vm667 = vcmask 261120
        %v669 = vsel %vm667, %v646, 0
        %671 = vmatpush.bf16.msra.mxu0 0
        %672 = vmatpush.bf16.msra.mxu0 0
        %673 = vmatpush.bf16.msra.mxu0 0
        %674 = vmatpush.bf16.msra.mxu0 0
        %675 = vmatpush.bf16.msra.mxu0 0
        %676 = vmatpush.bf16.msra.mxu0 0
        %677 = vmatpush.bf16.msra.mxu0 %v664
        %678 = vmatpush.bf16.msra.mxu0 %v663
        %679 = vmatmul.bf16.gmra.mxu0 %v669
        %v680 = vpop.f32.mrf.mxu0
        %v681 = vadd.f32 %v653, %v680
        %v682 = vpop.f32.mrf.mxu0
        %683 = vdwg.mxu0
        %v684 = vld [vmem:[%s280] sm:$0xff]
        %v685 = vadd.f32 %v684, %v681
        %686 = vst.msk [vmem:[%s338] sm:$0xff] %vm667, %v685
        %p687 = scmp.lt.s32.totalorder %s22, 1
        %s688 = scalar_select %p687, %s22, 1
        %p689 = scmp.lt.s32.totalorder %s23, 0
        %s690 = scalar_select %p689, %s23, 0
        %s691 = sadd.s32 %s690, %s688
        %s692 = smul.addr %s691, 8
        %s693 = scalar_lea.vmem %s5, %s692
        // Predicated region
        $region53: #{_lambda_.8} parent=39 // pred_check
          %p694 = pneg %p174
        $region54: #{_lambda_.8} parent=39 // pred_check_branch
          %696 = sbr.rel (%p694) target = $region56
        $region55: #{_lambda_.8} parent=39 // pred_region
          _
        $region56: #{_lambda_.8} parent=39 // pred_fallthru
          _
      $region40: #{_lambda_.8} parent=5 // pred_fallthru
        _
      %p697 = scmp.le.s32.totalorder 2, %s13
      // Predicated region
      $region57: #{_lambda_.8} parent=5 // pred_check
        %p698 = pneg %p697
      $region58: #{_lambda_.8} parent=5 // pred_check_branch
        %700 = sbr.rel (%p698) target = $region60
      $region59: #{_lambda_.8} parent=5 // pred_region
        %s701 = ssub.s32 %s13, 2
        // Predicated region
        $region61: #{_lambda_.8} parent=59 // pred_check
          %p702 = pneg %p180
        $region62: #{_lambda_.8} parent=59 // pred_check_branch
          %704 = sbr.rel (%p702) target = $region64
        $region63: #{_lambda_.8} parent=59 // pred_region
          %p705 = scmp.lt.s32.totalorder %s24, 1
          %s706 = scalar_select %p705, %s24, 1
          %p707 = scmp.lt.s32.totalorder %s25, 0
          %s708 = scalar_select %p707, %s25, 0
          %s709 = sadd.s32 %s708, %s706
          %s710 = smul.addr %s709, 8
          %s711 = scalar_lea.vmem %s5, %s710
        $region64: #{_lambda_.8} parent=59 // pred_fallthru
          _
      $region60: #{_lambda_.8} parent=5 // pred_fallthru
        _
    $region6: #{_lambda_.8} parent=1 // loop_footer
      %s17 = sadd.s32 1, %s13
    $region7: #{_lambda_.8} parent=1 // loop_footer_branch
      %12 = sbr.rel target = $region3
    $region8: #{_lambda_.8} parent=1 // loop_exit
      _
    %712 = vsyncpa [#allocation4], 1
    %s713 = scalar_lea.sflag [#allocation4], 1
    %714 = vsyncpa %s713, 1
    %715 = vsyncpa [#allocation6], 1

// kernel: _lambda_.13
$region0: #{_lambda_.13}
  #allocation0 [shape = 'u32[]', space=smem, size = 0x4, offset = 0x4, fixed_abs, tag = 'smem constant byte address 0x4 - core index']
  #allocation1 [shape = 'u32[72,128]{1,0:T(1,128)}', space=vmem, size = 0x9000, scoped, tag = 'internal scratch']
  %s0 = inlined_call_operand.vmem [shape: f32[16,32], index: 0, kind: input, shape index: {}, may-alias: {0,4}]
  %s1 = inlined_call_operand.vmem [shape: bf16[16,64], index: 1, kind: input, shape index: {}]
  %s2 = inlined_call_operand.vmem [shape: bf16[64,32], index: 2, kind: input, shape index: {}]
  %s3 = inlined_call_operand.vmem [shape: f32[1,32], index: 3, kind: input, shape index: {}]
  %s4 = inlined_call_operand.vmem [shape: f32[16,32], index: 4, kind: output, shape index: {}, may-alias: {0,4}]
  %s5 = sld [smem:[#allocation0]]
  $region26: #{_lambda_.13} parent=0
    _
  %s7 = ssub.s32 1, %s5
  %s8 = scalar_select 0, %s7, %s5
  // Predicated region
  $region2: #{_lambda_.13} parent=0 // pred_check
    _
  $region3: #{_lambda_.13} parent=0 // pred_check_branch
    %10 = sbr.rel (0) target = $region5
  $region4: #{_lambda_.13} parent=0 // pred_region
    _
  $region5: #{_lambda_.13} parent=0 // pred_fallthru
    _
  // Predicated region
  $region6: #{_lambda_.13} parent=0 // pred_check
    _
  $region7: #{_lambda_.13} parent=0 // pred_check_branch
    %12 = sbr.rel (0) target = $region9
  $region8: #{_lambda_.13} parent=0 // pred_region
    _
  $region9: #{_lambda_.13} parent=0 // pred_fallthru
    _
  // Predicated region
  $region10: #{_lambda_.13} parent=0 // pred_check
    _
  $region11: #{_lambda_.13} parent=0 // pred_check_branch
    %14 = sbr.rel (0) target = $region13
  $region12: #{_lambda_.13} parent=0 // pred_region
    _
  $region13: #{_lambda_.13} parent=0 // pred_fallthru
    _
  // Predicated region
  $region14: #{_lambda_.13} parent=0 // pred_check
    _
  $region15: #{_lambda_.13} parent=0 // pred_check_branch
    %16 = sbr.rel (0) target = $region17
  $region16: #{_lambda_.13} parent=0 // pred_region
    _
  $region17: #{_lambda_.13} parent=0 // pred_fallthru
    _
  %v18 = vld [vmem:[%s1] sm:$0xf]
  %v19 = vld [vmem:[%s1 + $0x4] sm:$0xf]
  %v20 = vld [vmem:[%s2] sm:$0xf]
  %v21 = vld [vmem:[%s2 + $0x4] sm:$0xf]
  %v22 = vld [vmem:[%s2 + $0x8] sm:$0xf]
  %v23 = vld [vmem:[%s2 + $0xc] sm:$0xf]
  %v24 = vld [vmem:[%s2 + $0x10] sm:$0xf]
  %v25 = vld [vmem:[%s2 + $0x14] sm:$0xf]
  %v26 = vld [vmem:[%s2 + $0x18] sm:$0xf]
  %v27 = vld [vmem:[%s2 + $0x1c] sm:$0xf]
  %v28 = vld [vmem:[%s3] sm:$0x1]
  %v30 = vperm.slane %v28, 0
  %v34 = vunpack.c.l.b16 %v18
  %v35 = vunpack.c.l.b16 %v19
  %v36 = vpack.c.b16 %v35, %v34
  %v45 = vunpack.c.l.b16 %v20
  %v46 = vunpack.c.l.b16 %v21
  %v47 = vunpack.c.l.b16 %v22
  %v48 = vunpack.c.l.b16 %v23
  %v49 = vunpack.c.l.b16 %v24
  %v50 = vunpack.c.l.b16 %v25
  %v51 = vunpack.c.l.b16 %v26
  %v52 = vunpack.c.l.b16 %v27
  %v53 = vpack.c.b16 %v46, %v45
  %v54 = vpack.c.b16 %v48, %v47
  %v55 = vpack.c.b16 %v50, %v49
  %v56 = vpack.c.b16 %v52, %v51
  %vm61 = vcmask 523264
  %v63 = vsel %vm61, %v36, 0
  %65 = vmatpush.bf16.msra.mxu0 0
  %66 = vmatpush.bf16.msra.mxu0 0
  %67 = vmatpush.bf16.msra.mxu0 0
  %68 = vmatpush.bf16.msra.mxu0 0
  %69 = vmatpush.bf16.msra.mxu0 %v56
  %70 = vmatpush.bf16.msra.mxu0 %v55
  %71 = vmatpush.bf16.msra.mxu0 %v54
  %72 = vmatpush.bf16.msra.mxu0 %v53
  %73 = vmatmul.bf16.gmra.mxu0 %v63
  %v74 = vpop.f32.mrf.mxu0
  %v75 = vadd.f32 %v30, %v74
  %v76 = vpop.f32.mrf.mxu0
  %v77 = vadd.f32 %v30, %v76
  %78 = vdwg.mxu0
  %v79 = vld [vmem:[%s0] sm:$0xff]
  %v80 = vld [vmem:[%s0 + $0x8] sm:$0xff]
  %v81 = vadd.f32 %v79, %v75
  %v82 = vadd.f32 %v80, %v77
  %vm83 = vcmask 261120
  %84 = vst.msk [vmem:[%s4] sm:$0xff] %vm83, %v81
  %85 = vst.msk [vmem:[%s4 + $0x8] sm:$0xff] %vm83, %v82
  // Predicated region
  $region18: #{_lambda_.13} parent=0 // pred_check
    _
  $region19: #{_lambda_.13} parent=0 // pred_check_branch
    %87 = sbr.rel (0) target = $region21
  $region20: #{_lambda_.13} parent=0 // pred_region
    _
  $region21: #{_lambda_.13} parent=0 // pred_fallthru
    _
  // Predicated region
  $region22: #{_lambda_.13} parent=0 // pred_check
    _
  $region23: #{_lambda_.13} parent=0 // pred_check_branch
    %89 = sbr.rel (0) target = $region25
  $region24: #{_lambda_.13} parent=0 // pred_region
    _
  $region25: #{_lambda_.13} parent=0 // pred_fallthru
    _

// kernel: _lambda_.12
$region0: #{_lambda_.12}
  #allocation0 [shape = 'u32[]', space=smem, size = 0x4, offset = 0x4, fixed_abs, tag = 'smem constant byte address 0x4 - core index']
  #allocation1 [shape = 'u32[72,128]{1,0:T(1,128)}', space=vmem, size = 0x9000, scoped, tag = 'internal scratch']
  %s0 = inlined_call_operand.vmem [shape: f32[16,32], index: 0, kind: input, shape index: {}]
  %s1 = inlined_call_operand.hbm [shape: f32[1,32], index: 1, kind: input, shape index: {}]
  %s2 = inlined_call_operand.hbm [shape: f32[1,32], index: 2, kind: input, shape index: {}]
  %s3 = inlined_call_operand.hbm [shape: bf16[32,64], index: 3, kind: input, shape index: {}]
  %s4 = inlined_call_operand.hbm [shape: f32[1,64], index: 4, kind: input, shape index: {}]
  %s5 = inlined_call_operand.vmem [shape: bf16[16,64], index: 5, kind: output, shape index: {}]
  %s6 = sld [smem:[#allocation0]]
  $region46: #{_lambda_.12} parent=0
    _
  %s8 = ssub.s32 1, %s6
  %s9 = scalar_select 0, %s8, %s6
  $region1: #{_lambda_.12} parent=0
    #allocation2 [shape = 'u8[512]{0}', space=vmem, size = 0x400, scoped, tag = 'input window, operand 1, single buffered']
    #allocation3 [shape = 's32[1]{0}', space=sflag, size = 0x4, scoped, tag = 'scoped memory for _lambda_.12']
    #allocation4 [shape = 'u8[512]{0}', space=vmem, size = 0x400, scoped, tag = 'input window, operand 2, single buffered']
    #allocation5 [shape = 's32[1]{0}', space=sflag, size = 0x4, scoped, tag = 'scoped memory for _lambda_.12']
    #allocation6 [shape = 'u8[8192]{0}', space=vmem, size = 0x2000, scoped, tag = 'input window, operand 3, single buffered']
    #allocation7 [shape = 'u8[512]{0}', space=vmem, size = 0x400, scoped, tag = 'input window, operand 4, single buffered']
    #allocation8 [shape = 's32[1]{0}', space=sflag, size = 0x4, scoped, tag = 'scoped memory for _lambda_.12']
    %10 = vsyncpa [#allocation3], 0
    %11 = vsyncpa [#allocation5], 0
    %12 = vsyncpa [#allocation8], 0
    // Predicated region
    $region2: #{_lambda_.12} parent=1 // pred_check
      _
    $region3: #{_lambda_.12} parent=1 // pred_check_branch
      %14 = sbr.rel (0) target = $region5
    $region4: #{_lambda_.12} parent=1 // pred_region
      _
    $region5: #{_lambda_.12} parent=1 // pred_fallthru
      _
    // Predicated region
    $region6: #{_lambda_.12} parent=1 // pred_check
      _
    $region7: #{_lambda_.12} parent=1 // pred_check_branch
      %16 = sbr.rel (0) target = $region9
    $region8: #{_lambda_.12} parent=1 // pred_region
      %18 = vsyncadd [#allocation3], 0
      %s20 = sshll.u32 %s1, 4
      %s21 = int_to_ptr.hbm [resolvable:$true] %s20
      %s22 = sshll.u32 [#allocation2], 4
      %s23 = int_to_ptr.vmem [resolvable:$true] %s22
      %25 = dma.hbm_to_vmem [thread:$0]  %s21, 16, %s23, [#allocation3]
    $region9: #{_lambda_.12} parent=1 // pred_fallthru
      _
    // Predicated region
    $region10: #{_lambda_.12} parent=1 // pred_check
      _
    $region11: #{_lambda_.12} parent=1 // pred_check_branch
      %27 = sbr.rel (0) target = $region13
    $region12: #{_lambda_.12} parent=1 // pred_region
      %29 = vsyncadd [#allocation5], 0
      %s31 = sshll.u32 %s2, 4
      %s32 = int_to_ptr.hbm [resolvable:$true] %s31
      %s33 = sshll.u32 [#allocation4], 4
      %s34 = int_to_ptr.vmem [resolvable:$true] %s33
      %36 = dma.hbm_to_vmem [thread:$0]  %s32, 16, %s34, [#allocation5]
    $region13: #{_lambda_.12} parent=1 // pred_fallthru
      _
    // Predicated region
    $region14: #{_lambda_.12} parent=1 // pred_check
      _
    $region15: #{_lambda_.12} parent=1 // pred_check_branch
      %38 = sbr.rel (0) target = $region17
    $region16: #{_lambda_.12} parent=1 // pred_region
      %40 = vsyncadd [#allocation5], 0
      %s41 = sshll.u32 %s3, 4
      %s42 = int_to_ptr.hbm [resolvable:$true] %s41
      %s43 = sshll.u32 [#allocation6], 4
      %s44 = int_to_ptr.vmem [resolvable:$true] %s43
      %49 = dma.hbm_to_vmem [thread:$0]  %s42, 256, %s44, [#allocation5], 64, 64, 4
    $region17: #{_lambda_.12} parent=1 // pred_fallthru
      _
    // Predicated region
    $region18: #{_lambda_.12} parent=1 // pred_check
      _
    $region19: #{_lambda_.12} parent=1 // pred_check_branch
      %51 = sbr.rel (0) target = $region21
    $region20: #{_lambda_.12} parent=1 // pred_region
      %53 = vsyncadd [#allocation8], 0
      %s55 = sshll.u32 %s4, 4
      %s56 = int_to_ptr.hbm [resolvable:$true] %s55
      %s57 = sshll.u32 [#allocation7], 4
      %s58 = int_to_ptr.vmem [resolvable:$true] %s57
      %60 = dma.hbm_to_vmem [thread:$0]  %s56, 16, %s58, [#allocation8]
    $region21: #{_lambda_.12} parent=1 // pred_fallthru
      _
    // Predicated region
    $region22: #{_lambda_.12} parent=1 // pred_check
      _
    $region23: #{_lambda_.12} parent=1 // pred_check_branch
      %62 = sbr.rel (0) target = $region25
    $region24: #{_lambda_.12} parent=1 // pred_region
      %64 = dma.done [#allocation3], 16
    $region25: #{_lambda_.12} parent=1 // pred_fallthru
      _
    // Predicated region
    $region26: #{_lambda_.12} parent=1 // pred_check
      _
    $region27: #{_lambda_.12} parent=1 // pred_check_branch
      %66 = sbr.rel (0) target = $region29
    $region28: #{_lambda_.12} parent=1 // pred_region
      %68 = dma.done [#allocation5], 16
    $region29: #{_lambda_.12} parent=1 // pred_fallthru
      _
    // Predicated region
    $region30: #{_lambda_.12} parent=1 // pred_check
      _
    $region31: #{_lambda_.12} parent=1 // pred_check_branch
      %70 = sbr.rel (0) target = $region33
    $region32: #{_lambda_.12} parent=1 // pred_region
      %72 = dma.done [#allocation5], 256
    $region33: #{_lambda_.12} parent=1 // pred_fallthru
      _
    // Predicated region
    $region34: #{_lambda_.12} parent=1 // pred_check
      _
    $region35: #{_lambda_.12} parent=1 // pred_check_branch
      %74 = sbr.rel (0) target = $region37
    $region36: #{_lambda_.12} parent=1 // pred_region
      %76 = dma.done [#allocation8], 16
    $region37: #{_lambda_.12} parent=1 // pred_fallthru
      _
    %v78 = vld [vmem:[%s0] sm:$0xff]
    %v79 = vld [vmem:[%s0 + $0x8] sm:$0xff]
    %vm80 = vcmask 261120
    %v81 = vsel %vm80, %v78, 0.0
    %82 = vadd.xlane.f32.xlu0 %v81
    %v83 = vpop.xlane.xlu0 %82
    %v84 = vsel %vm80, %v79, 0.0
    %85 = vadd.xlane.f32.xlu0 %v84
    %v86 = vpop.xlane.xlu0 %85
    %v87 = vrcp.pop 32.0
    %v88 = vmul.f32 32.0, %v87
    %v89 = vsub.f32 1.0, %v88
    %v90 = vmul.f32 %v87, %v89
    %v91 = vadd.f32 %v87, %v90
    %vm92 = vweird.f32 %v87
    %v93 = vsel %vm92, %v87, %v91
    %v94 = vmul.f32 %v83, %v93
    %v95 = vmul.f32 %v86, %v93
    %v96 = vsub.f32 %v78, %v94
    %v97 = vsub.f32 %v79, %v95
    %v98 = vmul.f32 %v96, %v96
    %v99 = vmul.f32 %v97, %v97
    %v100 = vsel %vm80, %v98, 0.0
    %101 = vadd.xlane.f32.xlu0 %v100
    %v102 = vpop.xlane.xlu0 %101
    %v103 = vsel %vm80, %v99, 0.0
    %104 = vadd.xlane.f32.xlu0 %v103
    %v105 = vpop.xlane.xlu0 %104
    %v106 = vmul.f32 %v102, %v93
    %v107 = vmul.f32 %v105, %v93
    %v108 = vadd.f32 %v106, 1e-05
    %v109 = vadd.f32 %v107, 1e-05
    %v110 = vrsqrt.pop %v108
    %v111 = vmul.f32 %v110, %v108
    %v112 = vmul.f32 %v111, %v110
    %v113 = vmul.f32 0.5, %v112
    %v114 = vsub.f32 1.5, %v113
    %v115 = vmul.f32 %v110, %v114
    %vm116 = vweird.f32 %v108
    %vm117 = vweird.f32 %v110
    %vm118 = vmor %vm116, %vm117
    %v119 = vsel %vm118, %v110, %v115
    %v120 = vrsqrt.pop %v109
    %v121 = vmul.f32 %v120, %v109
    %v122 = vmul.f32 %v121, %v120
    %v123 = vmul.f32 0.5, %v122
    %v124 = vsub.f32 1.5, %v123
    %v125 = vmul.f32 %v120, %v124
    %vm126 = vweird.f32 %v109
    %vm127 = vweird.f32 %v120
    %vm128 = vmor %vm126, %vm127
    %v129 = vsel %vm128, %v120, %v125
    %v130 = vmul.f32 %v96, %v119
    %v131 = vmul.f32 %v97, %v129
    %v132 = vld [vmem:[#allocation2] sm:$0x1]
    %v134 = vperm.slane %v132, 0
    %v136 = vmul.f32 %v130, %v134
    %v137 = vmul.f32 %v131, %v134
    %v138 = vld [vmem:[#allocation4] sm:$0x1]
    %v140 = vperm.slane %v138, 0
    %v142 = vadd.f32 %v136, %v140
    %v143 = vadd.f32 %v137, %v140
    %v144 = vpack.c.bf16 %v143, %v142
    %v145 = vld [vmem:[#allocation6] sm:$0xf]
    %v146 = vld [vmem:[#allocation6 + $0x4] sm:$0xf]
    %v147 = vld [vmem:[#allocation6 + $0x8] sm:$0xf]
    %v148 = vld [vmem:[#allocation6 + $0xc] sm:$0xf]
    %v149 = vld [vmem:[#allocation7] sm:$0x1]
    %v151 = vperm.slane %v149, 0
    %v157 = vunpack.c.l.b16 %v145
    %v158 = vunpack.c.l.b16 %v146
    %v159 = vunpack.c.l.b16 %v147
    %v160 = vunpack.c.l.b16 %v148
    %v161 = vpack.c.b16 %v158, %v157
    %v162 = vpack.c.b16 %v160, %v159
    %v166 = vsel %vm80, %v144, 0
    %168 = vmatpush.bf16.msra.mxu0 0
    %169 = vmatpush.bf16.msra.mxu0 0
    %170 = vmatpush.bf16.msra.mxu0 0
    %171 = vmatpush.bf16.msra.mxu0 0
    %172 = vmatpush.bf16.msra.mxu0 0
    %173 = vmatpush.bf16.msra.mxu0 0
    %174 = vmatpush.bf16.msra.mxu0 %v162
    %175 = vmatpush.bf16.msra.mxu0 %v161
    %176 = vmatmul.bf16.gmra.mxu0 %v166
    %v177 = vpop.f32.mrf.mxu0
    %v178 = vadd.f32 %v151, %v177
    %v179 = vpop.f32.mrf.mxu0
    %v180 = vadd.f32 %v151, %v179
    %181 = vdwg.mxu0
    %v182 = vmul.f32 %v178, 0.5
    %v183 = vmul.f32 %v180, 0.5
    %v184 = vmul.f32 %v178, 0.70710677
    %v185 = vmul.f32 %v180, 0.70710677
    %v186 = vmul.f32 %v184, %v184
    %v187 = vmin.f32 16.0, %v186
    %v188 = vmul.f32 %v187, 2.1237322e-06
    %v189 = vadd.f32 %v188, 0.00028619796
    %v190 = vmul.f32 %v187, %v189
    %v191 = vadd.f32 %v190, 0.0036580483
    %v192 = vmul.f32 %v187, %v191
    %v193 = vadd.f32 %v192, 0.05243302
    %v194 = vmul.f32 %v187, %v193
    %v195 = vadd.f32 %v194, 0.18741608
    %v196 = vmul.f32 %v187, %v195
    %v197 = vadd.f32 %v196, 1.1283791
    %v198 = vmul.f32 %v184, %v197
    %v199 = vmul.f32 %v187, 3.8918573e-05
    %v200 = vadd.f32 %v199, 0.001143296
    %v201 = vmul.f32 %v187, %v200
    %v202 = vadd.f32 %v201, 0.014752088
    %v203 = vmul.f32 %v187, %v202
    %v204 = vadd.f32 %v203, 0.112945676
    %v205 = vmul.f32 %v187, %v204
    %v206 = vadd.f32 %v205, 0.4994258
    %v207 = vmul.f32 %v187, %v206
    %v208 = vadd.f32 %v207, 1.0
    %v209 = vrcp.pop %v208
    %v210 = vmul.f32 %v208, %v209
    %v211 = vsub.f32 1.0, %v210
    %v212 = vmul.f32 %v209, %v211
    %v213 = vadd.f32 %v209, %v212
    %vm214 = vweird.f32 %v208
    %vm215 = vweird.f32 %v209
    %vm216 = vmor %vm214, %vm215
    %v217 = vsel %vm216, %v209, %v213
    %v218 = vand.u32 2147483647, %v208
    %vm219 = vcmp.eq.f32.partialorder %v218, 8.507059e+37
    %v220 = vand.u32 %v208, 2147483648
    %v221 = vor.u32 1.1754944e-38, %v220
    %v222 = vsel %vm219, %v221, %v217
    %v223 = vmul.f32 %v198, %v222
    %v224 = vmin.f32 %v223, 1.0
    %v225 = vmax.f32 %v224, -1.0
    %v226 = vmul.f32 %v185, %v185
    %v227 = vmin.f32 16.0, %v226
    %v228 = vmul.f32 %v227, 2.1237322e-06
    %v229 = vadd.f32 %v228, 0.00028619796
    %v230 = vmul.f32 %v227, %v229
    %v231 = vadd.f32 %v230, 0.0036580483
    %v232 = vmul.f32 %v227, %v231
    %v233 = vadd.f32 %v232, 0.05243302
    %v234 = vmul.f32 %v227, %v233
    %v235 = vadd.f32 %v234, 0.18741608
    %v236 = vmul.f32 %v227, %v235
    %v237 = vadd.f32 %v236, 1.1283791
    %v238 = vmul.f32 %v185, %v237
    %v239 = vmul.f32 %v227, 3.8918573e-05
    %v240 = vadd.f32 %v239, 0.001143296
    %v241 = vmul.f32 %v227, %v240
    %v242 = vadd.f32 %v241, 0.014752088
    %v243 = vmul.f32 %v227, %v242
    %v244 = vadd.f32 %v243, 0.112945676
    %v245 = vmul.f32 %v227, %v244
    %v246 = vadd.f32 %v245, 0.4994258
    %v247 = vmul.f32 %v227, %v246
    %v248 = vadd.f32 %v247, 1.0
    %v249 = vrcp.pop %v248
    %v250 = vmul.f32 %v248, %v249
    %v251 = vsub.f32 1.0, %v250
    %v252 = vmul.f32 %v249, %v251
    %v253 = vadd.f32 %v249, %v252
    %vm254 = vweird.f32 %v248
    %vm255 = vweird.f32 %v249
    %vm256 = vmor %vm254, %vm255
    %v257 = vsel %vm256, %v249, %v253
    %v258 = vand.u32 2147483647, %v248
    %vm259 = vcmp.eq.f32.partialorder %v258, 8.507059e+37
    %v260 = vand.u32 %v248, 2147483648
    %v261 = vor.u32 1.1754944e-38, %v260
    %v262 = vsel %vm259, %v261, %v257
    %v263 = vmul.f32 %v238, %v262
    %v264 = vmin.f32 %v263, 1.0
    %v265 = vmax.f32 %v264, -1.0
    %v266 = vadd.f32 %v225, 1.0
    %v267 = vadd.f32 %v265, 1.0
    %v268 = vmul.f32 %v182, %v266
    %v269 = vmul.f32 %v183, %v267
    %v270 = vpack.c.bf16 %v268, %v268
    %v271 = vpack.c.bf16 %v269, %v269
    %vm272 = vcmask 519168
    %273 = vst.msk [vmem:[%s5] sm:$0xf] %vm272, %v270
    %274 = vst.msk [vmem:[%s5 + $0x4] sm:$0xf] %vm272, %v271
    // Predicated region
    $region38: #{_lambda_.12} parent=1 // pred_check
      _
    $region39: #{_lambda_.12} parent=1 // pred_check_branch
      %276 = sbr.rel (0) target = $region41
    $region40: #{_lambda_.12} parent=1 // pred_region
      _
    $region41: #{_lambda_.12} parent=1 // pred_fallthru
      _
    // Predicated region
    $region42: #{_lambda_.12} parent=1 // pred_check
      _
    $region43: #{_lambda_.12} parent=1 // pred_check_branch
      %278 = sbr.rel (0) target = $region45
    $region44: #{_lambda_.12} parent=1 // pred_region
      _
    $region45: #{_lambda_.12} parent=1 // pred_fallthru
      _
    %279 = vsyncpa [#allocation3], 1
    %280 = vsyncpa [#allocation5], 1
    %281 = vsyncpa [#allocation8], 1

// kernel: _lambda_.11
$region0: #{_lambda_.11}
  #allocation0 [shape = 'u32[]', space=smem, size = 0x4, offset = 0x4, fixed_abs, tag = 'smem constant byte address 0x4 - core index']
  #allocation1 [shape = 'u32[72,128]{1,0:T(1,128)}', space=vmem, size = 0x9000, scoped, tag = 'internal scratch']
  #allocation2 [shape = 'f32[8,32]{1,0:T(8,128)}', space=vmem, size = 0x1000, scoped, tag = 'scratch operand']
  %s0 = inlined_call_operand.vmem [shape: bf16[2,8,32], index: 0, kind: input, shape index: {}]
  %s1 = inlined_call_operand.vmem [shape: bf16[2,8,64], index: 1, kind: input, shape index: {}]
  %s2 = inlined_call_operand.hbm [shape: bf16[32,32], index: 2, kind: input, shape index: {}]
  %s3 = inlined_call_operand.hbm [shape: f32[1,32], index: 3, kind: input, shape index: {}]
  %s4 = inlined_call_operand.vmem [shape: f32[2,8,32], index: 4, kind: input, shape index: {}, may-alias: {4,5}]
  %s5 = inlined_call_operand.vmem [shape: f32[2,8,32], index: 5, kind: output, shape index: {}, may-alias: {4,5}]
  %s6 = sld [smem:[#allocation0]]
  $region61: #{_lambda_.11} parent=0
    _
  %s8 = ssub.s32 1, %s6
  %s9 = scalar_select 0, %s8, %s6
  $region1: #{_lambda_.11} parent=0
    #allocation3 [shape = 'u8[8192]{0}', space=vmem, size = 0x2000, scoped, tag = 'input window, operand 2, single buffered']
    #allocation4 [shape = 's32[2]{0}', space=sflag, size = 0x8, scoped, tag = 'scoped memory for _lambda_.11']
    #allocation5 [shape = 'u8[512]{0}', space=vmem, size = 0x400, scoped, tag = 'input window, operand 3, single buffered']
    #allocation6 [shape = 's32[1]{0}', space=sflag, size = 0x4, scoped, tag = 'scoped memory for _lambda_.11']
    %10 = vsyncpa [#allocation4], 0
    %11 = vsyncpa [#allocation6], 0
    loop: start=0, step=1, limit=4
    $region2: #{_lambda_.11} parent=1 // loop_pre_header
      _
    $region3: #{_lambda_.11} parent=1 // loop_header
      %s13 = sphi 0, %s17
      %p14 = scmp.ge.s32.totalorder %s13, 4
      %s20 = sphi 0, %s32
      %s21 = sphi 0, %s28
      %s22 = sphi 0, %s20
      %s23 = sphi 0, %s21
      %s24 = sphi 0, %s22
      %s25 = sphi 0, %s23
      %s37 = sphi 0, %s39
      %s40 = sphi 0, %s37
      %s41 = sphi 0, %s40
      %s57 = sphi 0, %s41
      %s63 = sphi 0, %s65
      %s66 = sphi 0, %s63
      %s67 = sphi 0, %s66
      %s83 = sphi 0, %s67
      %s87 = sphi 0, %s87
      %s89 = sphi 0, %s87
      %s90 = sphi 0, %s89
      %s104 = sphi 0, %s90
      %s108 = sphi 0, %s108
      %s110 = sphi 0, %s108
      %s111 = sphi 0, %s110
      %s125 = sphi 0, %s111
      %s133 = sphi 0, %s135
      %s136 = sphi 0, %s133
      %s137 = sphi 0, %s136
      %s153 = sphi 0, %s137
      %s161 = sphi 0, %s163
      %s164 = sphi 0, %s161
      %s165 = sphi 0, %s164
      %s181 = sphi 0, %s165
    $region4: #{_lambda_.11} parent=1 // loop_header_branch
      %16 = sbr.rel (%p14) target = $region8
    $region5: #{_lambda_.11} parent=1 // loop_body
      %s18 = ssub.s32 %s13, 1
      %s19 = ssub.s32 %s13, 2
      %s26 = sadd.s32 1, %s21
      %p27 = scmp.ge.s32.totalorder %s26, 1
      %s28 = scalar_select %p27, 0, %s26
      %s29 = sadd.s32 1, %s20
      %s30 = scalar_select %p27, %s29, %s20
      %p31 = scmp.ge.s32.totalorder %s30, 2
      %s32 = scalar_select %p31, 0, %s30
      %s33 = ssub.s32 %s20, %s32
      %s34 = ssub.s32 %s21, %s28
      %s35 = sor.u32 %s33, %s34
      %p36 = scmp.eq.s32.totalorder %s35, 0
      %s38 = sadd.s32 %s37, 1
      %s39 = scalar_select %p36, %s37, %s38
      %p42 = pneg %p36
      %p43 = scmp.eq.s32.totalorder %s13, 1
      %p44 = por %p42, %p43
      %p45 = scmp.ne.s32.totalorder %s37, %s40
      %p46 = scmp.eq.s32.totalorder %s13, 0
      %p47 = por %p45, %p46
      %p48 = scmp.ne.s32.totalorder %s37, %s40
      %p49 = scmp.eq.s32.totalorder %s18, 1
      %p50 = por %p48, %p49
      %p51 = scmp.ne.s32.totalorder %s40, %s41
      %p52 = scmp.eq.s32.totalorder %s18, 0
      %p53 = por %p51, %p52
      %p54 = scmp.ne.s32.totalorder %s40, %s41
      %p55 = scmp.eq.s32.totalorder %s19, 1
      %p56 = por %p54, %p55
      %p58 = scmp.ne.s32.totalorder %s41, %s57
      %p59 = scmp.eq.s32.totalorder %s19, 0
      %p60 = por %p58, %p59
      %s61 = ssub.s32 %s20, %s32
      %p62 = scmp.eq.s32.totalorder %s61, 0
      %s64 = sadd.s32 %s63, 1
      %s65 = scalar_select %p62, %s63, %s64
      %p68 = pneg %p62
      %p69 = scmp.eq.s32.totalorder %s13, 1
      %p70 = por %p68, %p69
      %p71 = scmp.ne.s32.totalorder %s63, %s66
      %p72 = scmp.eq.s32.totalorder %s13, 0
      %p73 = por %p71, %p72
      %p74 = scmp.ne.s32.totalorder %s63, %s66
      %p75 = scmp.eq.s32.totalorder %s18, 1
      %p76 = por %p74, %p75
      %p77 = scmp.ne.s32.totalorder %s66, %s67
      %p78 = scmp.eq.s32.totalorder %s18, 0
      %p79 = por %p77, %p78
      %p80 = scmp.ne.s32.totalorder %s66, %s67
      %p81 = scmp.eq.s32.totalorder %s19, 1
      %p82 = por %p80, %p81
      %p84 = scmp.ne.s32.totalorder %s67, %s83
      %p85 = scmp.eq.s32.totalorder %s19, 0
      %p86 = por %p84, %p85
      %s88 = sadd.s32 %s87, 1
      %p91 = scmp.eq.s32.totalorder %s13, 1
      %p92 = scmp.ne.s32.totalorder %s87, %s89
      %p93 = scmp.eq.s32.totalorder %s13, 0
      %p94 = por %p92, %p93
      %p95 = scmp.ne.s32.totalorder %s87, %s89
      %p96 = scmp.eq.s32.totalorder %s18, 1
      %p97 = por %p95, %p96
      %p98 = scmp.ne.s32.totalorder %s89, %s90
      %p99 = scmp.eq.s32.totalorder %s18, 0
      %p100 = por %p98, %p99
      %p101 = scmp.ne.s32.totalorder %s89, %s90
      %p102 = scmp.eq.s32.totalorder %s19, 1
      %p103 = por %p101, %p102
      %p105 = scmp.ne.s32.totalorder %s90, %s104
      %p106 = scmp.eq.s32.totalorder %s19, 0
      %p107 = por %p105, %p106
      %s109 = sadd.s32 %s108, 1
      %p112 = scmp.eq.s32.totalorder %s13, 1
      %p113 = scmp.ne.s32.totalorder %s108, %s110
      %p114 = scmp.eq.s32.totalorder %s13, 0
      %p115 = por %p113, %p114
      %p116 = scmp.ne.s32.totalorder %s108, %s110
      %p117 = scmp.eq.s32.totalorder %s18, 1
      %p118 = por %p116, %p117
      %p119 = scmp.ne.s32.totalorder %s110, %s111
      %p120 = scmp.eq.s32.totalorder %s18, 0
      %p121 = por %p119, %p120
      %p122 = scmp.ne.s32.totalorder %s110, %s111
      %p123 = scmp.eq.s32.totalorder %s19, 1
      %p124 = por %p122, %p123
      %p126 = scmp.ne.s32.totalorder %s111, %s125
      %p127 = scmp.eq.s32.totalorder %s19, 0
      %p128 = por %p126, %p127
      %s129 = ssub.s32 %s20, %s32
      %s130 = ssub.s32 %s21, %s28
      %s131 = sor.u32 %s129, %s130
      %p132 = scmp.eq.s32.totalorder %s131, 0
      %s134 = sadd.s32 %s133, 1
      %s135 = scalar_select %p132, %s133, %s134
      %p138 = pneg %p132
      %p139 = scmp.eq.s32.totalorder %s13, 1
      %p140 = por %p138, %p139
      %p141 = scmp.ne.s32.totalorder %s133, %s136
      %p142 = scmp.eq.s32.totalorder %s13, 0
      %p143 = por %p141, %p142
      %p144 = scmp.ne.s32.totalorder %s133, %s136
      %p145 = scmp.eq.s32.totalorder %s18, 1
      %p146 = por %p144, %p145
      %p147 = scmp.ne.s32.totalorder %s136, %s137
      %p148 = scmp.eq.s32.totalorder %s18, 0
      %p149 = por %p147, %p148
      %p150 = scmp.ne.s32.totalorder %s136, %s137
      %p151 = scmp.eq.s32.totalorder %s19, 1
      %p152 = por %p150, %p151
      %p154 = scmp.ne.s32.totalorder %s137, %s153
      %p155 = scmp.eq.s32.totalorder %s19, 0
      %p156 = por %p154, %p155
      %s157 = ssub.s32 %s20, %s32
      %s158 = ssub.s32 %s21, %s28
      %s159 = sor.u32 %s157, %s158
      %p160 = scmp.eq.s32.totalorder %s159, 0
      %s162 = sadd.s32 %s161, 1
      %s163 = scalar_select %p160, %s161, %s162
      %p166 = pneg %p160
      %p167 = scmp.eq.s32.totalorder %s13, 1
      %p168 = por %p166, %p167
      %p169 = scmp.ne.s32.totalorder %s161, %s164
      %p170 = scmp.eq.s32.totalorder %s13, 0
      %p171 = por %p169, %p170
      %p172 = scmp.ne.s32.totalorder %s161, %s164
      %p173 = scmp.eq.s32.totalorder %s18, 1
      %p174 = por %p172, %p173
      %p175 = scmp.ne.s32.totalorder %s164, %s165
      %p176 = scmp.eq.s32.totalorder %s18, 0
      %p177 = por %p175, %p176
      %p178 = scmp.ne.s32.totalorder %s164, %s165
      %p179 = scmp.eq.s32.totalorder %s19, 1
      %p180 = por %p178, %p179
      %p182 = scmp.ne.s32.totalorder %s165, %s181
      %p183 = scmp.eq.s32.totalorder %s19, 0
      %p184 = por %p182, %p183
      %p185 = scmp.le.s32.totalorder 1, %s13
      %p186 = scmp.lt.s32.totalorder %s13, 3
      %p187 = pnand %p185, %p186
      %p188 = pneg %p187
      // Predicated region
      $region9: #{_lambda_.11} parent=5 // pred_check
        _
      $region10: #{_lambda_.11} parent=5 // pred_check_branch
        %190 = sbr.rel (%p187) target = $region12
      $region11: #{_lambda_.11} parent=5 // pred_region
        %s191 = ssub.s32 %s13, 1
        // Predicated region
        $region13: #{_lambda_.11} parent=11 // pred_check
          %p192 = pneg %p100
        $region14: #{_lambda_.11} parent=11 // pred_check_branch
          %194 = sbr.rel (%p192) target = $region16
        $region15: #{_lambda_.11} parent=11 // pred_region
          %196 = vsyncadd [#allocation4], 0
          %s197 = sshll.u32 %s2, 4
          %s198 = int_to_ptr.hbm [resolvable:$true] %s197
          %s199 = sshll.u32 [#allocation3], 4
          %s200 = int_to_ptr.vmem [resolvable:$true] %s199
          %205 = dma.hbm_to_vmem [thread:$0]  %s198, 256, %s200, [#allocation4], 64, 64, 4
        $region16: #{_lambda_.11} parent=11 // pred_fallthru
          _
        // Predicated region
        $region17: #{_lambda_.11} parent=11 // pred_check
          %p206 = pneg %p121
        $region18: #{_lambda_.11} parent=11 // pred_check_branch
          %208 = sbr.rel (%p206) target = $region20
        $region19: #{_lambda_.11} parent=11 // pred_region
          %210 = vsyncadd [#allocation6], 0
          %s212 = sshll.u32 %s3, 4
          %s213 = int_to_ptr.hbm [resolvable:$true] %s212
          %s214 = sshll.u32 [#allocation5], 4
          %s215 = int_to_ptr.vmem [resolvable:$true] %s214
          %217 = dma.hbm_to_vmem [thread:$0]  %s213, 16, %s215, [#allocation6]
        $region20: #{_lambda_.11} parent=11 // pred_fallthru
          _
      $region12: #{_lambda_.11} parent=5 // pred_fallthru
        _
      %p218 = scmp.lt.s32.totalorder %s13, 2
      // Predicated region
      $region21: #{_lambda_.11} parent=5 // pred_check
        %p219 = pneg %p218
      $region22: #{_lambda_.11} parent=5 // pred_check_branch
        %221 = sbr.rel (%p219) target = $region24
      $region23: #{_lambda_.11} parent=5 // pred_region
        // Predicated region
        $region25: #{_lambda_.11} parent=23 // pred_check
          %p222 = pneg %p47
        $region26: #{_lambda_.11} parent=23 // pred_check_branch
          %224 = sbr.rel (%p222) target = $region28
        $region27: #{_lambda_.11} parent=23 // pred_region
          %p225 = scmp.lt.s32.totalorder %s20, 1
          %s226 = scalar_select %p225, %s20, 1
          %p227 = scmp.lt.s32.totalorder %s21, 0
          %s228 = scalar_select %p227, %s21, 0
          %s229 = sadd.s32 %s228, %s226
          %s230 = smul.addr %s229, 4
          %s231 = scalar_lea.vmem %s0, %s230
        $region28: #{_lambda_.11} parent=23 // pred_fallthru
          _
        // Predicated region
        $region29: #{_lambda_.11} parent=23 // pred_check
          %p232 = pneg %p73
        $region30: #{_lambda_.11} parent=23 // pred_check_branch
          %234 = sbr.rel (%p232) target = $region32
        $region31: #{_lambda_.11} parent=23 // pred_region
          %p235 = scmp.lt.s32.totalorder %s20, 1
          %s236 = scalar_select %p235, %s20, 1
          %s237 = smul.addr %s236, 4
          %s238 = scalar_lea.vmem %s1, %s237
        $region32: #{_lambda_.11} parent=23 // pred_fallthru
          _
        // Predicated region
        $region33: #{_lambda_.11} parent=23 // pred_check
          %p239 = pneg %p143
        $region34: #{_lambda_.11} parent=23 // pred_check_branch
          %241 = sbr.rel (%p239) target = $region36
        $region35: #{_lambda_.11} parent=23 // pred_region
          %p242 = scmp.lt.s32.totalorder %s20, 1
          %s243 = scalar_select %p242, %s20, 1
          %p244 = scmp.lt.s32.totalorder %s21, 0
          %s245 = scalar_select %p244, %s21, 0
          %s246 = sadd.s32 %s245, %s243
          %s247 = smul.addr %s246, 8
          %s248 = scalar_lea.vmem %s4, %s247
        $region36: #{_lambda_.11} parent=23 // pred_fallthru
          _
      $region24: #{_lambda_.11} parent=5 // pred_fallthru
        _
      %p249 = scmp.le.s32.totalorder 1, %s13
      %p250 = scmp.lt.s32.totalorder %s13, 3
      %p251 = pnand %p249, %p250
      %p252 = pneg %p251
      // Predicated region
      $region37: #{_lambda_.11} parent=5 // pred_check
        _
      $region38: #{_lambda_.11} parent=5 // pred_check_branch
        %254 = sbr.rel (%p251) target = $region40
      $region39: #{_lambda_.11} parent=5 // pred_region
        %s255 = ssub.s32 %s13, 1
        // Predicated region
        $region41: #{_lambda_.11} parent=39 // pred_check
          %p256 = pneg %p100
        $region42: #{_lambda_.11} parent=39 // pred_check_branch
          %258 = sbr.rel (%p256) target = $region44
        $region43: #{_lambda_.11} parent=39 // pred_region
          %260 = dma.done [#allocation4], 256
        $region44: #{_lambda_.11} parent=39 // pred_fallthru
          _
        // Predicated region
        $region45: #{_lambda_.11} parent=39 // pred_check
          %p261 = pneg %p121
        $region46: #{_lambda_.11} parent=39 // pred_check_branch
          %263 = sbr.rel (%p261) target = $region48
        $region47: #{_lambda_.11} parent=39 // pred_region
          %265 = dma.done [#allocation6], 16
        $region48: #{_lambda_.11} parent=39 // pred_fallthru
          _
        %p266 = scmp.lt.s32.totalorder %s22, 1
        %s267 = scalar_select %p266, %s22, 1
        %p268 = scmp.lt.s32.totalorder %s23, 0
        %s269 = scalar_select %p268, %s23, 0
        %s270 = sadd.s32 %s269, %s267
        %s271 = smul.addr %s270, 4
        %s272 = scalar_lea.vmem %s0, %s271
        %p273 = pneg %p53
        %p274 = pneg %p50
        %p275 = scmp.lt.s32.totalorder %s22, 1
        %s276 = scalar_select %p275, %s22, 1
        %s277 = smul.addr %s276, 4
        %s278 = scalar_lea.vmem %s1, %s277
        %p279 = pneg %p79
        %p280 = pneg %p76
        %p281 = pneg %p100
        %p282 = pneg %p97
        %p283 = pneg %p121
        %p284 = pneg %p118
        %p285 = scmp.lt.s32.totalorder %s22, 1
        %s286 = scalar_select %p285, %s22, 1
        %p287 = scmp.lt.s32.totalorder %s23, 0
        %s288 = scalar_select %p287, %s23, 0
        %s289 = sadd.s32 %s288, %s286
        %s290 = smul.addr %s289, 8
        %s291 = scalar_lea.vmem %s4, %s290
        %p292 = pneg %p149
        %p293 = pneg %p146
        %p294 = pneg %p177
        %p295 = pneg %p174
        %p296 = scmp.lt.s32.totalorder %s22, 1
        %s297 = scalar_select %p296, %s22, 1
        %p298 = scmp.lt.s32.totalorder %s23, 0
        %s299 = scalar_select %p298, %s23, 0
        %s300 = sadd.s32 %s299, %s297
        %s301 = smul.addr %s300, 8
        %s302 = scalar_lea.vmem %s5, %s301
        %p303 = scmp.lt.s32.totalorder %s22, 1
        %s304 = scalar_select %p303, %s22, 1
        %p305 = scmp.lt.s32.totalorder %s23, 0
        %s306 = scalar_select %p305, %s23, 0
        %s307 = sadd.s32 %s306, %s304
        %s308 = smul.addr %s307, 4
        %s309 = scalar_lea.vmem %s0, %s308
        %p310 = scmp.lt.s32.totalorder %s22, 1
        %s311 = scalar_select %p310, %s22, 1
        %s312 = smul.addr %s311, 4
        %s313 = scalar_lea.vmem %s1, %s312
        %p314 = scmp.lt.s32.totalorder %s22, 1
        %s315 = scalar_select %p314, %s22, 1
        %p316 = scmp.lt.s32.totalorder %s23, 0
        %s317 = scalar_select %p316, %s23, 0
        %s318 = sadd.s32 %s317, %s315
        %s319 = smul.addr %s318, 8
        %s320 = scalar_lea.vmem %s4, %s319
        %p321 = scmp.lt.s32.totalorder %s22, 1
        %s322 = scalar_select %p321, %s22, 1
        %p323 = scmp.lt.s32.totalorder %s23, 0
        %s324 = scalar_select %p323, %s23, 0
        %s325 = sadd.s32 %s324, %s322
        %s326 = smul.addr %s325, 8
        %s327 = scalar_lea.vmem %s5, %s326
        %v329 = vld [vmem:[%s309] sm:$0xf]
        %v330 = vld [vmem:[%s313] sm:$0xf]
        %vm331 = vcmask 64512
        %v333 = vsel %vm331, %v329, 0
        %v336 = vsel %vm331, %v330, 0
        %338 = vmatpush.bf16.xpose.msra.mxu0 0
        %339 = vmatpush.bf16.xpose.msra.mxu0 0
        %340 = vmatpush.bf16.xpose.msra.mxu0 0
        %341 = vmatpush.bf16.xpose.msra.mxu0 0
        %342 = vmatpush.bf16.xpose.msra.mxu0 0
        %343 = vmatpush.bf16.xpose.msra.mxu0 0
        %344 = vmatpush.bf16.xpose.msra.mxu0 0
        %345 = vmatpush.bf16.xpose.msra.mxu0 %v336
        %346 = vmatmul.bf16.gmra.mxu0 %v333
        %v347 = vpop.f32.mrf.mxu0
        %v348 = vadd.f32 0.0, %v347
        %v349 = vpop.f32.mrf.mxu0
        %350 = vdwg.mxu0
        %v351 = vsel %vm331, %v348, -inf
        %352 = vmax.xlane.f32.xlu0 %v351
        %v353 = vpop.xlane.xlu0 %352
        %v354 = vsub.f32 %v348, %v353
        %v355 = vmul.f32 %v354, 1.442695
        %v356 = vpow.pop %v355
        %v357 = vsel %vm331, %v356, 0.0
        %358 = vadd.xlane.f32.xlu0 %v357
        %v359 = vpop.xlane.xlu0 %358
        %v360 = vrcp.pop %v359
        %v361 = vmul.f32 %v359, %v360
        %v362 = vsub.f32 1.0, %v361
        %v363 = vmul.f32 %v360, %v362
        %v364 = vadd.f32 %v360, %v363
        %vm365 = vweird.f32 %v359
        %vm366 = vweird.f32 %v360
        %vm367 = vmor %vm365, %vm366
        %v368 = vsel %vm367, %v360, %v364
        %v369 = vand.u32 2147483647, %v359
        %vm370 = vcmp.eq.f32.partialorder %v369, 8.507059e+37
        %v371 = vand.u32 %v359, 2147483648
        %v372 = vor.u32 1.1754944e-38, %v371
        %v373 = vsel %vm370, %v372, %v368
        %v374 = vmul.f32 1.0, %v373
        %v375 = vmul.f32 %v356, %v374
        %v376 = vpack.c.bf16 %v375, %v375
        %v378 = vunpack.c.l.b16 %v330
        %v379 = vpack.c.b16 %v378, %v378
        %380 = vrot.lane.b32.xlu0 %v379, 96
        %v381 = vpop.permute.xlu0 %380
        %v383 = vsel %vm331, %v376, 0
        %vm385 = vcmask 1043456
        %v387 = vsel %vm385, %v381, 0
        %389 = vmatpush.bf16.msra.mxu0 0
        %390 = vmatpush.bf16.msra.mxu0 0
        %391 = vmatpush.bf16.msra.mxu0 0
        %392 = vmatpush.bf16.msra.mxu0 0
        %393 = vmatpush.bf16.msra.mxu0 0
        %394 = vmatpush.bf16.msra.mxu0 0
        %395 = vmatpush.bf16.msra.mxu0 0
        %396 = vmatpush.bf16.msra.mxu0 %v387
        %397 = vmatmul.bf16.gmra.mxu0 %v383
        %v398 = vpop.f32.mrf.mxu0
        %v399 = vadd.f32 0.0, %v398
        %v400 = vpop.f32.mrf.mxu0
        %401 = vdwg.mxu0
        %402 = vst.msk [vmem:[#allocation2] sm:$0xff] %vm331, %v399
        %v404 = vunpack.c.l.b16 %v329
        %v405 = vpack.c.b16 %v404, %v404
        %406 = vrot.lane.b32.xlu0 %v405, 120
        %v407 = vpop.permute.xlu0 %406
        %408 = vrot.lane.b32.xlu0 %v379, 120
        %v409 = vpop.permute.xlu0 %408
        %v411 = vsel %vm331, %v407, 0
        %v414 = vsel %vm331, %v409, 0
        %416 = vmatpush.bf16.xpose.msra.mxu0 0
        %417 = vmatpush.bf16.xpose.msra.mxu0 0
        %418 = vmatpush.bf16.xpose.msra.mxu0 0
        %419 = vmatpush.bf16.xpose.msra.mxu0 0
        %420 = vmatpush.bf16.xpose.msra.mxu0 0
        %421 = vmatpush.bf16.xpose.msra.mxu0 0
        %422 = vmatpush.bf16.xpose.msra.mxu0 0
        %423 = vmatpush.bf16.xpose.msra.mxu0 %v414
        %424 = vmatmul.bf16.gmra.mxu0 %v411
        %v425 = vpop.f32.mrf.mxu0
        %v426 = vadd.f32 0.0, %v425
        %v427 = vpop.f32.mrf.mxu0
        %428 = vdwg.mxu0
        %v429 = vsel %vm331, %v426, -inf
        %430 = vmax.xlane.f32.xlu0 %v429
        %v431 = vpop.xlane.xlu0 %430
        %v432 = vsub.f32 %v426, %v431
        %v433 = vmul.f32 %v432, 1.442695
        %v434 = vpow.pop %v433
        %v435 = vsel %vm331, %v434, 0.0
        %436 = vadd.xlane.f32.xlu0 %v435
        %v437 = vpop.xlane.xlu0 %436
        %v438 = vrcp.pop %v437
        %v439 = vmul.f32 %v437, %v438
        %v440 = vsub.f32 1.0, %v439
        %v441 = vmul.f32 %v438, %v440
        %v442 = vadd.f32 %v438, %v441
        %vm443 = vweird.f32 %v437
        %vm444 = vweird.f32 %v438
        %vm445 = vmor %vm443, %vm444
        %v446 = vsel %vm445, %v438, %v442
        %v447 = vand.u32 2147483647, %v437
        %vm448 = vcmp.eq.f32.partialorder %v447, 8.507059e+37
        %v449 = vand.u32 %v437, 2147483648
        %v450 = vor.u32 1.1754944e-38, %v449
        %v451 = vsel %vm448, %v450, %v446
        %v452 = vmul.f32 1.0, %v451
        %v453 = vmul.f32 %v434, %v452
        %v454 = vpack.c.bf16 %v453, %v453
        %455 = vrot.lane.b32.xlu0 %v379, 88
        %v456 = vpop.permute.xlu0 %455
        %v458 = vsel %vm331, %v454, 0
        %v461 = vsel %vm385, %v456, 0
        %463 = vmatpush.bf16.msra.mxu0 0
        %464 = vmatpush.bf16.msra.mxu0 0
        %465 = vmatpush.bf16.msra.mxu0 0
        %466 = vmatpush.bf16.msra.mxu0 0
        %467 = vmatpush.bf16.msra.mxu0 0
        %468 = vmatpush.bf16.msra.mxu0 0
        %469 = vmatpush.bf16.msra.mxu0 0
        %470 = vmatpush.bf16.msra.mxu0 %v461
        %471 = vmatmul.bf16.gmra.mxu0 %v458
        %v472 = vpop.f32.mrf.mxu0
        %v473 = vadd.f32 0.0, %v472
        %v474 = vpop.f32.mrf.mxu0
        %475 = vdwg.mxu0
        %477 = vrot.lane.b32.xlu0 %v473, 8
        %v478 = vpop.permute.xlu0 %477
        %vm480 = vcmask 130112
        %481 = vst.msk [vmem:[#allocation2] sm:$0xff] %vm480, %v478
        %482 = vrot.lane.b32.xlu0 %v405, 112
        %v483 = vpop.permute.xlu0 %482
        %484 = vrot.lane.b32.xlu0 %v379, 112
        %v485 = vpop.permute.xlu0 %484
        %v487 = vsel %vm331, %v483, 0
        %v490 = vsel %vm331, %v485, 0
        %492 = vmatpush.bf16.xpose.msra.mxu0 0
        %493 = vmatpush.bf16.xpose.msra.mxu0 0
        %494 = vmatpush.bf16.xpose.msra.mxu0 0
        %495 = vmatpush.bf16.xpose.msra.mxu0 0
        %496 = vmatpush.bf16.xpose.msra.mxu0 0
        %497 = vmatpush.bf16.xpose.msra.mxu0 0
        %498 = vmatpush.bf16.xpose.msra.mxu0 0
        %499 = vmatpush.bf16.xpose.msra.mxu0 %v490
        %500 = vmatmul.bf16.gmra.mxu0 %v487
        %v501 = vpop.f32.mrf.mxu0
        %v502 = vadd.f32 0.0, %v501
        %v503 = vpop.f32.mrf.mxu0
        %504 = vdwg.mxu0
        %v505 = vsel %vm331, %v502, -inf
        %506 = vmax.xlane.f32.xlu0 %v505
        %v507 = vpop.xlane.xlu0 %506
        %v508 = vsub.f32 %v502, %v507
        %v509 = vmul.f32 %v508, 1.442695
        %v510 = vpow.pop %v509
        %v511 = vsel %vm331, %v510, 0.0
        %512 = vadd.xlane.f32.xlu0 %v511
        %v513 = vpop.xlane.xlu0 %512
        %v514 = vrcp.pop %v513
        %v515 = vmul.f32 %v513, %v514
        %v516 = vsub.f32 1.0, %v515
        %v517 = vmul.f32 %v514, %v516
        %v518 = vadd.f32 %v514, %v517
        %vm519 = vweird.f32 %v513
        %vm520 = vweird.f32 %v514
        %vm521 = vmor %vm519, %vm520
        %v522 = vsel %vm521, %v514, %v518
        %v523 = vand.u32 2147483647, %v513
        %vm524 = vcmp.eq.f32.partialorder %v523, 8.507059e+37
        %v525 = vand.u32 %v513, 2147483648
        %v526 = vor.u32 1.1754944e-38, %v525
        %v527 = vsel %vm524, %v526, %v522
        %v528 = vmul.f32 1.0, %v527
        %v529 = vmul.f32 %v510, %v528
        %v530 = vpack.c.bf16 %v529, %v529
        %531 = vrot.lane.b32.xlu0 %v379, 80
        %v532 = vpop.permute.xlu0 %531
        %v534 = vsel %vm331, %v530, 0
        %v537 = vsel %vm385, %v532, 0
        %539 = vmatpush.bf16.msra.mxu0 0
        %540 = vmatpush.bf16.msra.mxu0 0
        %541 = vmatpush.bf16.msra.mxu0 0
        %542 = vmatpush.bf16.msra.mxu0 0
        %543 = vmatpush.bf16.msra.mxu0 0
        %544 = vmatpush.bf16.msra.mxu0 0
        %545 = vmatpush.bf16.msra.mxu0 0
        %546 = vmatpush.bf16.msra.mxu0 %v537
        %547 = vmatmul.bf16.gmra.mxu0 %v534
        %v548 = vpop.f32.mrf.mxu0
        %v549 = vadd.f32 0.0, %v548
        %v550 = vpop.f32.mrf.mxu0
        %551 = vdwg.mxu0
        %553 = vrot.lane.b32.xlu0 %v549, 16
        %v554 = vpop.permute.xlu0 %553
        %vm556 = vcmask 195712
        %557 = vst.msk [vmem:[#allocation2] sm:$0xff] %vm556, %v554
        %558 = vrot.lane.b32.xlu0 %v405, 104
        %v559 = vpop.permute.xlu0 %558
        %560 = vrot.lane.b32.xlu0 %v379, 104
        %v561 = vpop.permute.xlu0 %560
        %v563 = vsel %vm331, %v559, 0
        %v566 = vsel %vm331, %v561, 0
        %568 = vmatpush.bf16.xpose.msra.mxu0 0
        %569 = vmatpush.bf16.xpose.msra.mxu0 0
        %570 = vmatpush.bf16.xpose.msra.mxu0 0
        %571 = vmatpush.bf16.xpose.msra.mxu0 0
        %572 = vmatpush.bf16.xpose.msra.mxu0 0
        %573 = vmatpush.bf16.xpose.msra.mxu0 0
        %574 = vmatpush.bf16.xpose.msra.mxu0 0
        %575 = vmatpush.bf16.xpose.msra.mxu0 %v566
        %576 = vmatmul.bf16.gmra.mxu0 %v563
        %v577 = vpop.f32.mrf.mxu0
        %v578 = vadd.f32 0.0, %v577
        %v579 = vpop.f32.mrf.mxu0
        %580 = vdwg.mxu0
        %v581 = vsel %vm331, %v578, -inf
        %582 = vmax.xlane.f32.xlu0 %v581
        %v583 = vpop.xlane.xlu0 %582
        %v584 = vsub.f32 %v578, %v583
        %v585 = vmul.f32 %v584, 1.442695
        %v586 = vpow.pop %v585
        %v587 = vsel %vm331, %v586, 0.0
        %588 = vadd.xlane.f32.xlu0 %v587
        %v589 = vpop.xlane.xlu0 %588
        %v590 = vrcp.pop %v589
        %v591 = vmul.f32 %v589, %v590
        %v592 = vsub.f32 1.0, %v591
        %v593 = vmul.f32 %v590, %v592
        %v594 = vadd.f32 %v590, %v593
        %vm595 = vweird.f32 %v589
        %vm596 = vweird.f32 %v590
        %vm597 = vmor %vm595, %vm596
        %v598 = vsel %vm597, %v590, %v594
        %v599 = vand.u32 2147483647, %v589
        %vm600 = vcmp.eq.f32.partialorder %v599, 8.507059e+37
        %v601 = vand.u32 %v589, 2147483648
        %v602 = vor.u32 1.1754944e-38, %v601
        %v603 = vsel %vm600, %v602, %v598
        %v604 = vmul.f32 1.0, %v603
        %v605 = vmul.f32 %v586, %v604
        %v606 = vpack.c.bf16 %v605, %v605
        %607 = vrot.lane.b32.xlu0 %v379, 72
        %v608 = vpop.permute.xlu0 %607
        %v610 = vsel %vm331, %v606, 0
        %v613 = vsel %vm385, %v608, 0
        %615 = vmatpush.bf16.msra.mxu0 0
        %616 = vmatpush.bf16.msra.mxu0 0
        %617 = vmatpush.bf16.msra.mxu0 0
        %618 = vmatpush.bf16.msra.mxu0 0
        %619 = vmatpush.bf16.msra.mxu0 0
        %620 = vmatpush.bf16.msra.mxu0 0
        %621 = vmatpush.bf16.msra.mxu0 0
        %622 = vmatpush.bf16.msra.mxu0 %v613
        %623 = vmatmul.bf16.gmra.mxu0 %v610
        %v624 = vpop.f32.mrf.mxu0
        %v625 = vadd.f32 0.0, %v624
        %v626 = vpop.f32.mrf.mxu0
        %627 = vdwg.mxu0
        %629 = vrot.lane.b32.xlu0 %v625, 24
        %v630 = vpop.permute.xlu0 %629
        %vm632 = vcmask 261312
        %633 = vst.msk [vmem:[#allocation2] sm:$0xff] %vm632, %v630
        %v634 = vld [vmem:[#allocation2] sm:$0xff]
        %v635 = vpack.c.bf16 %v634, %v634
        %v636 = vld [vmem:[#allocation3] sm:$0xf]
        %v637 = vld [vmem:[#allocation3 + $0x4] sm:$0xf]
        %v638 = vld [vmem:[#allocation3 + $0x8] sm:$0xf]
        %v639 = vld [vmem:[#allocation3 + $0xc] sm:$0xf]
        %v640 = vld [vmem:[#allocation5] sm:$0x1]
        %v642 = vperm.slane %v640, 0
        %v648 = vunpack.c.l.b16 %v636
        %v649 = vunpack.c.l.b16 %v637
        %v650 = vunpack.c.l.b16 %v638
        %v651 = vunpack.c.l.b16 %v639
        %v652 = vpack.c.b16 %v649, %v648
        %v653 = vpack.c.b16 %v651, %v650
        %vm656 = vcmask 261120
        %v658 = vsel %vm656, %v635, 0
        %660 = vmatpush.bf16.msra.mxu0 0
        %661 = vmatpush.bf16.msra.mxu0 0
        %662 = vmatpush.bf16.msra.mxu0 0
        %663 = vmatpush.bf16.msra.mxu0 0
        %664 = vmatpush.bf16.msra.mxu0 0
        %665 = vmatpush.bf16.msra.mxu0 0
        %666 = vmatpush.bf16.msra.mxu0 %v653
        %667 = vmatpush.bf16.msra.mxu0 %v652
        %668 = vmatmul.bf16.gmra.mxu0 %v658
        %v669 = vpop.f32.mrf.mxu0
        %v670 = vadd.f32 %v642, %v669
        %v671 = vpop.f32.mrf.mxu0
        %672 = vdwg.mxu0
        %v673 = vld [vmem:[%s320] sm:$0xff]
        %v674 = vadd.f32 %v673, %v670
        %675 = vst.msk [vmem:[%s327] sm:$0xff] %vm656, %v674
        %p676 = scmp.lt.s32.totalorder %s22, 1
        %s677 = scalar_select %p676, %s22, 1
        %p678 = scmp.lt.s32.totalorder %s23, 0
        %s679 = scalar_select %p678, %s23, 0
        %s680 = sadd.s32 %s679, %s677
        %s681 = smul.addr %s680, 8
        %s682 = scalar_lea.vmem %s5, %s681
        // Predicated region
        $region49: #{_lambda_.11} parent=39 // pred_check
          %p683 = pneg %p174
        $region50: #{_lambda_.11} parent=39 // pred_check_branch
          %685 = sbr.rel (%p683) target = $region52
        $region51: #{_lambda_.11} parent=39 // pred_region
          _
        $region52: #{_lambda_.11} parent=39 // pred_fallthru
          _
      $region40: #{_lambda_.11} parent=5 // pred_fallthru
        _
      %p686 = scmp.le.s32.totalorder 2, %s13
      // Predicated region
      $region53: #{_lambda_.11} parent=5 // pred_check
        %p687 = pneg %p686
      $region54: #{_lambda_.11} parent=5 // pred_check_branch
        %689 = sbr.rel (%p687) target = $region56
      $region55: #{_lambda_.11} parent=5 // pred_region
        %s690 = ssub.s32 %s13, 2
        // Predicated region
        $region57: #{_lambda_.11} parent=55 // pred_check
          %p691 = pneg %p180
        $region58: #{_lambda_.11} parent=55 // pred_check_branch
          %693 = sbr.rel (%p691) target = $region60
        $region59: #{_lambda_.11} parent=55 // pred_region
          %p694 = scmp.lt.s32.totalorder %s24, 1
          %s695 = scalar_select %p694, %s24, 1
          %p696 = scmp.lt.s32.totalorder %s25, 0
          %s697 = scalar_select %p696, %s25, 0
          %s698 = sadd.s32 %s697, %s695
          %s699 = smul.addr %s698, 8
          %s700 = scalar_lea.vmem %s5, %s699
        $region60: #{_lambda_.11} parent=55 // pred_fallthru
          _
      $region56: #{_lambda_.11} parent=5 // pred_fallthru
        _
    $region6: #{_lambda_.11} parent=1 // loop_footer
      %s17 = sadd.s32 1, %s13
    $region7: #{_lambda_.11} parent=1 // loop_footer_branch
      %12 = sbr.rel target = $region3
    $region8: #{_lambda_.11} parent=1 // loop_exit
      _
    %701 = vsyncpa [#allocation4], 1
    %s702 = scalar_lea.sflag [#allocation4], 1
    %703 = vsyncpa %s702, 1
    %704 = vsyncpa [#allocation6], 1

</llo_original>
